<compile_context>
chip_gen: v7x
topology: tpu7x:2x2x1
jax: 0.10.0
libtpu: 0.0.40
codegen_flags: <defaults>
</compile_context>

<pallas_src>
import functools

import jax
import jax.numpy as jnp
from jax import lax
from jax.experimental import pallas as pl
from jax.experimental.pallas import tpu as pltpu

LANE = 128  # TPU lane width; channel padding target for lane-dense stores.


# ----------------------------------------------------------------------------
# BN folding (inference form): y = gamma*(x-mean)/sqrt(var+eps) + beta
# ----------------------------------------------------------------------------
def _fold_bn(gamma, beta, mean, var, eps=1e-5):
    scale = gamma / jnp.sqrt(var + eps)
    bias = beta - mean * scale
    return scale, bias


def _images_per_block(N, per_image_bytes, budget=6 * 1024 * 1024):
    """Pack several images into one grid step (amortizes the ~0.35us/step
    overhead) while (a) staying within a modest VMEM budget and (b) keeping at
    least two grid steps whenever the batch allows it, so megacore / v7x's
    second TensorCore gets work."""
    nb = 1
    for cand in range(2, N + 1):
        if N % cand:
            continue
        if cand * per_image_bytes > budget or N // cand < 2:
            break
        nb = cand
    return nb


# ----------------------------------------------------------------------------
# Pallas kernel: fused 3x3 conv (pad=1, stride s) + folded-BN bias
#                (+ optional fused 1x1 stride-2 downsample ConvBlock)
#                (+ optional residual add) (+ optional ReLU)
# ----------------------------------------------------------------------------
def _conv3x3_bn_kernel(*refs, stride, Hq, Ho, Wo, Cin, relu,
                       has_res, has_ds, fold_k):
    it = iter(refs)
    x_ref, w_ref, b_ref = next(it), next(it), next(it)
    wd_ref = bd_ref = r_ref = id_ref = None
    if has_ds:
        wd_ref, bd_ref = next(it), next(it)
    if has_res:
        r_ref = next(it)
    o_ref = next(it)
    if has_ds:
        id_ref = next(it)
    scratch_ref = next(it)          # bf16 im2col slab (fold_k) / f32 accumulator

    s = stride
    P = s * s
    Nb = x_ref.shape[0]
    rows = Nb * Ho * Wo

    def window(ph, a, b):
        # Contiguous (Nb, Ho, Wo, Cin) window of stride-phase `ph`, sliced
        # directly from the bf16 input block (no f32 staging copy).
        r0 = ph * Hq + a
        return x_ref[:, r0:r0 + Ho, b:b + Wo, :].reshape(rows, Cin)

    taps = []
    for kh in range(3):
        for kw in range(3):
            taps.append(((kh % s) * s + (kw % s), kh // s, kw // s))

    if fold_k:
        # Lane-aligned Cin: in-kernel im2col into a VMEM slab (128-aligned lane
        # writes), then a single MXU matmul with K = 9*Cin.
        for t, (ph, a, b) in enumerate(taps):
            scratch_ref[:, t * Cin:(t + 1) * Cin] = window(ph, a, b)
        acc = jnp.dot(scratch_ref[...], w_ref[...],
                      preferred_element_type=jnp.float32)
    else:
        # Lane-sparse Cin (16/32): 9 accumulated matmuls; accumulator lives in
        # an explicit f32 VMEM scratch so larger tiles never flip the kernel
        # into a vreg-spill regime.
        for t, (ph, a, b) in enumerate(taps):
            part = jnp.dot(window(ph, a, b),
                           w_ref[t * Cin:(t + 1) * Cin, :],
                           preferred_element_type=jnp.float32)
            if t == 0:
                scratch_ref[...] = part
            else:
                scratch_ref[...] += part
        acc = scratch_ref[...]

    # Epilogue: folded-BN bias (+ residual) (+ ReLU), all in f32, cast at store.
    y = acc + b_ref[...]
    if has_res:
        y = y + r_ref[...].astype(jnp.float32)
    if relu:
        y = jnp.maximum(y, 0.0)
    o_ref[...] = y.astype(o_ref.dtype)

    if has_ds:
        # Fused shortcut ConvBlock (1x1 conv, stride 2, + BN, no ReLU):
        # stride-phase (1,1) of the padded input is exactly x[2i, 2j].
        r0 = (P - 1) * Hq
        idw = x_ref[:, r0:r0 + Ho, :Wo, :].reshape(rows, Cin)
        idy = jnp.dot(idw, wd_ref[...], preferred_element_type=jnp.float32)
        idy = idy + bd_ref[...]
        id_ref[...] = idy.astype(id_ref.dtype)


def conv3x3_bn(x_nhwc, w, scale, bias, *, stride=1, residual=None, relu=True,
               ds_w=None, ds_scale=None, ds_bias=None, out_dtype=jnp.bfloat16):
    """Fused 3x3 conv (padding=1) + folded BN (+ fused 1x1 s2 downsample)
    (+ residual) (+ ReLU).

    x_nhwc: [N, H, W, Cin]; w: [3, 3, Cin, Cout]; scale/bias: [Cout];
    residual: optional bf16 [N*Ho*Wo, Cp]; ds_w: optional [Cin, Cout].
    Returns (out [N*Ho*Wo, Cp], identity-or-None [N*Ho*Wo, Cp], Ho, Wo).
    """
    N, H, W, Cin = x_nhwc.shape
    assert w.shape[:3] == (3, 3, Cin)
    Cout = w.shape[3]
    Cp = -(-Cout // LANE) * LANE                  # lane-dense output width
    s = stride
    assert s in (1, 2)
    has_ds = ds_w is not None
    has_res = residual is not None
    assert not has_ds or s == 2                   # shortcut ConvBlock is stride 2

    Ho = (H + 2 - 3) // s + 1
    Wo = (W + 2 - 3) // s + 1

    # ---- input staging (bf16) --------------------------------------------
    xb = x_nhwc.astype(jnp.bfloat16)
    if s == 1:
        P = 1
        Hq, Wq = H + 2, W + 2
        xb = jnp.pad(xb, ((0, 0), (1, 1), (1, 1), (0, 0)))        # pad only
    else:
        # Split into 4 stride phases so every 3x3 tap is a contiguous window:
        #   phase(a,b)[i,j] = x_pad[2i+a, 2j+b]
        P = 4
        Hq, Wq = Ho + 1, Wo + 1
        Hp, Wp = s * Hq, s * Wq
        xb = jnp.pad(xb, ((0, 0), (1, Hp - H - 1), (1, Wp - W - 1), (0, 0)))
        xb = xb.reshape(N, Hq, s, Wq, s, Cin).transpose(0, 2, 4, 1, 3, 5)
    xb = xb.reshape(N, P * Hq, Wq, Cin)           # phases stacked along rows

    # ---- weights / bias: fold BN scale, pad Cout -> Cp (lane-dense) -------
    wf = (w * scale.reshape(1, 1, 1, Cout)).reshape(9 * Cin, Cout)
    wf = jnp.pad(wf, ((0, 0), (0, Cp - Cout))).astype(jnp.bfloat16)
    bp = jnp.pad(bias.reshape(1, Cout), ((0, 0), (0, Cp - Cout)))
    bp = bp.astype(jnp.float32)

    fold_k = (Cin % LANE == 0)

    # ---- tile choice -------------------------------------------------------
    itemsize = jnp.dtype(out_dtype).itemsize
    per_img = 2 * (P * Hq * Wq * Cin * 2
                   + Ho * Wo * Cp * itemsize
                   + (Ho * Wo * Cp * 2 if has_res else 0)
                   + (Ho * Wo * Cp * 2 if has_ds else 0))
    if fold_k:
        per_img += Ho * Wo * 9 * Cin * 2
    Nb = _images_per_block(N, per_img)
    if (Nb * Ho * Wo) % 8 != 0 and Nb != N:
        Nb = N                                    # keep (8,128) rule trivially satisfied
    rows_blk = Nb * Ho * Wo

    # ---- specs -------------------------------------------------------------
    args = [xb, wf, bp]
    in_specs = [
        pl.BlockSpec((Nb, P * Hq, Wq, Cin), lambda n: (n, 0, 0, 0)),
        pl.BlockSpec((9 * Cin, Cp), lambda n: (0, 0)),
        pl.BlockSpec((1, Cp), lambda n: (0, 0)),
    ]
    if has_ds:
        wdf = jnp.pad(ds_w * ds_scale.reshape(1, Cout),
                      ((0, 0), (0, Cp - Cout))).astype(jnp.bfloat16)
        bdp = jnp.pad(ds_bias.reshape(1, Cout),
                      ((0, 0), (0, Cp - Cout))).astype(jnp.float32)
        args += [wdf, bdp]
        in_specs += [pl.BlockSpec((Cin, Cp), lambda n: (0, 0)),
                     pl.BlockSpec((1, Cp), lambda n: (0, 0))]
    if has_res:
        assert residual.shape == (N * Ho * Wo, Cp)
        assert residual.dtype == jnp.bfloat16
        args.append(residual)
        in_specs.append(pl.BlockSpec((rows_blk, Cp), lambda n: (n, 0)))

    out_shapes = [jax.ShapeDtypeStruct((N * Ho * Wo, Cp), out_dtype)]
    out_specs = [pl.BlockSpec((rows_blk, Cp), lambda n: (n, 0))]
    if has_ds:
        out_shapes.append(jax.ShapeDtypeStruct((N * Ho * Wo, Cp), jnp.bfloat16))
        out_specs.append(pl.BlockSpec((rows_blk, Cp), lambda n: (n, 0)))

    if fold_k:
        scratch = [pltpu.VMEM((rows_blk, 9 * Cin), jnp.bfloat16)]   # im2col slab
    else:
        scratch = [pltpu.VMEM((rows_blk, Cp), jnp.float32)]         # f32 accumulator

    kernel = functools.partial(
        _conv3x3_bn_kernel, stride=s, Hq=Hq, Ho=Ho, Wo=Wo, Cin=Cin, relu=relu,
        has_res=has_res, has_ds=has_ds, fold_k=fold_k)

    out = pl.pallas_call(
        kernel,
        out_shape=tuple(out_shapes) if has_ds else out_shapes[0],
        grid_spec=pltpu.PrefetchScalarGridSpec(
            num_scalar_prefetch=0,
            grid=(N // Nb,),
            in_specs=in_specs,
            out_specs=tuple(out_specs) if has_ds else out_specs[0],
            scratch_shapes=scratch,
        ),
        compiler_params=pltpu.CompilerParams(
            dimension_semantics=("parallel",),        # image blocks independent
            vmem_limit_bytes=32 * 1024 * 1024,
        ),
    )(*args)

    if has_ds:
        y, ident = out
        return y, ident, Ho, Wo
    return out, None, Ho, Wo


# ----------------------------------------------------------------------------
# BasicBlock (expansion = 1)
# ----------------------------------------------------------------------------
class BasicBlockPallas:
    """out = ReLU( BN2(conv3x3(ReLU(BN1(conv3x3(x, stride))))) + identity )
       identity = x                         if not downsample
                = BN_d(conv1x1(x, s=2))     if downsample (stride-2, as in spec)
    """
    expansion = 1

    def __init__(self, key, in_channels, out_channels, stride=1, downsample=False):
        assert stride in (1, 2)
        if not downsample:
            assert stride == 1 and in_channels == out_channels, \
                "identity shortcut requires matching shapes"
        self.in_channels = in_channels
        self.out_channels = out_channels
        self.stride = stride
        self.downsample = downsample
        C = out_channels

        keys = jax.random.split(key, 6)

        def bn_params(k, ch):
            k1, k2, k3 = jax.random.split(k, 3)
            gamma = 1.0 + 0.1 * jax.random.normal(k1, (ch,), jnp.float32)
            beta = 0.1 * jax.random.normal(k2, (ch,), jnp.float32)
            mean = 0.05 * jax.random.normal(k3, (ch,), jnp.float32)
            var = jnp.ones((ch,), jnp.float32)
            return _fold_bn(gamma, beta, mean, var)

        # conv1: 3x3, in -> C, stride=s, pad=1, bias=False  ([3,3,Cin,Cout] HWIO)
        self.w1 = 0.1 * jax.random.normal(keys[0], (3, 3, in_channels, C), jnp.float32)
        self.s1, self.b1 = bn_params(keys[1], C)
        # conv2: 3x3, C -> C, stride=1, pad=1, bias=False
        self.w2 = 0.1 * jax.random.normal(keys[2], (3, 3, C, C), jnp.float32)
        self.s2, self.b2 = bn_params(keys[3], C)
        # downsample: 1x1, in -> C, stride=2 (stride hard-coded in the reference)
        if downsample:
            self.wd = 0.1 * jax.random.normal(keys[4], (in_channels, C), jnp.float32)
            self.sd, self.bd = bn_params(keys[5], C)

        self._forward = jax.jit(self._forward_impl)

    def __call__(self, x_nchw):
        return self._forward(x_nchw)

    def _forward_impl(self, x_nchw):
        N, Cin, H, W = x_nchw.shape
        assert Cin == self.in_channels
        C = self.out_channels
        Cp = -(-C // LANE) * LANE

        x = jnp.transpose(x_nchw, (0, 2, 3, 1))              # NCHW -> NHWC (f32)

        # conv1 (+ fused downsample shortcut when present) -> bf16, Cp channels
        if self.downsample:
            y1, identity, Ho, Wo = conv3x3_bn(
                x, self.w1, self.s1, self.b1, stride=self.stride, relu=True,
                ds_w=self.wd, ds_scale=self.sd, ds_bias=self.bd,
                out_dtype=jnp.bfloat16)
        else:
            y1, _, Ho, Wo = conv3x3_bn(
                x, self.w1, self.s1, self.b1, stride=self.stride, relu=True,
                out_dtype=jnp.bfloat16)
            # identity shortcut, streamed as lane-dense bf16
            identity = jnp.pad(x.astype(jnp.bfloat16).reshape(N * H * W, Cin),
                               ((0, 0), (0, Cp - Cin)))

        # conv2 consumes the channel-padded (lane-dense, bf16) intermediate
        # directly: the padded channels are exact zeros, and w2's padded input
        # rows are zero too, so results are unchanged.
        y1 = y1.reshape(N, Ho, Wo, Cp)
        w2p = jnp.pad(self.w2, ((0, 0), (0, 0), (0, Cp - C), (0, 0)))
        y2, _, Ho2, Wo2 = conv3x3_bn(y1, w2p, self.s2, self.b2, stride=1,
                                     residual=identity, relu=True,
                                     out_dtype=jnp.float32)

        out = y2[:, :C].reshape(N, Ho2, Wo2, C)
        return jnp.transpose(out, (0, 3, 1, 2))              # NHWC -> NCHW


# ----------------------------------------------------------------------------
# Pure-JAX reference (f32) for numerical verification
# ----------------------------------------------------------------------------
def _reference_forward(block, x_nchw):
    dn = ('NHWC', 'HWIO', 'NHWC')
    hp = lax.Precision.HIGHEST
    x = jnp.transpose(x_nchw, (0, 2, 3, 1)).astype(jnp.float32)
    y = lax.conv_general_dilated(x, block.w1, (block.stride, block.stride),
                                 ((1, 1), (1, 1)), dimension_numbers=dn,
                                 precision=hp)
    y = jnp.maximum(y * block.s1 + block.b1, 0.0)
    y2 = lax.conv_general_dilated(y, block.w2, (1, 1), ((1, 1), (1, 1)),
                                  dimension_numbers=dn, precision=hp)
    y2 = y2 * block.s2 + block.b2
    if block.downsample:
        wd = block.wd.reshape(1, 1, block.in_channels, block.out_channels)
        ident = lax.conv_general_dilated(x, wd, (2, 2), 'VALID',
                                         dimension_numbers=dn, precision=hp)
        ident = ident * block.sd + block.bd
    else:
        ident = x
    out = jnp.maximum(y2 + ident, 0.0)
    return jnp.transpose(out, (0, 3, 1, 2))


if __name__ == "__main__":
    key = jax.random.PRNGKey(0)
    k_p1, k_p2, k_x1, k_x2 = jax.random.split(key, 4)

    # Case 1: stride-2 stage transition with 1x1 stride-2 downsample shortcut.
    x1 = jax.random.normal(k_x1, (2, 16, 16, 16), jnp.float32)   # NCHW
    block1 = BasicBlockPallas(k_p1, in_channels=16, out_channels=32,
                              stride=2, downsample=True)
    out1 = jax.block_until_ready(block1(x1))
    assert out1.shape == (2, 32, 8, 8), out1.shape
    ref1 = _reference_forward(block1, x1)
    tol1 = 0.05 * float(jnp.max(jnp.abs(ref1))) + 0.05
    assert float(jnp.max(jnp.abs(out1 - ref1))) < tol1

    # Case 2: identity shortcut (stride 1, in_channels == out_channels).
    x2 = jax.random.normal(k_x2, (2, 32, 16, 16), jnp.float32)   # NCHW
    block2 = BasicBlockPallas(k_p2, in_channels=32, out_channels=32,
                              stride=1, downsample=False)
    out2 = jax.block_until_ready(block2(x2))
    assert out2.shape == (2, 32, 16, 16), out2.shape
    ref2 = _reference_forward(block2, x2)
    tol2 = 0.05 * float(jnp.max(jnp.abs(ref2))) + 0.05
    assert float(jnp.max(jnp.abs(out2 - ref2))) < tol2

    print("KERNEL_OK")
</pallas_src>

<mosaic_0001>
module attributes {stable_mosaic.version = 11 : i64} {
  func.func @_conv3x3_bn_kernel(%arg0: i32, %arg1: memref<1x36x9x16xbf16, #tpu.memory_space<vmem>>, %arg2: memref<144x128xbf16, #tpu.memory_space<vmem>>, %arg3: memref<1x128xf32, #tpu.memory_space<vmem>>, %arg4: memref<16x128xbf16, #tpu.memory_space<vmem>>, %arg5: memref<1x128xf32, #tpu.memory_space<vmem>>, %arg6: memref<64x128xbf16, #tpu.memory_space<vmem>>, %arg7: memref<64x128xbf16, #tpu.memory_space<vmem>>, %arg8: memref<64x128xf32, #tpu.memory_space<vmem>>) attributes {dimension_semantics = [#tpu.dimension_semantics<parallel>], iteration_bounds = array<i64: 2>, scalar_prefetch = 0 : i64, scratch_operands = 1 : i64, tpu.core_type = #tpu.core_type<tc>, window_params = [{transform_indices = @transform_0, window_bounds = array<i64: 1, 36, 9, 16>}, {pipeline_mode = #tpu.pipeline_mode<synchronous>, transform_indices = @transform_1, window_bounds = array<i64: 144, 128>}, {pipeline_mode = #tpu.pipeline_mode<synchronous>, transform_indices = @transform_2, window_bounds = array<i64: 1, 128>}, {pipeline_mode = #tpu.pipeline_mode<synchronous>, transform_indices = @transform_3, window_bounds = array<i64: 16, 128>}, {pipeline_mode = #tpu.pipeline_mode<synchronous>, transform_indices = @transform_4, window_bounds = array<i64: 1, 128>}, {transform_indices = @transform_5, window_bounds = array<i64: 64, 128>}, {transform_indices = @transform_6, window_bounds = array<i64: 64, 128>}]} {
    %c0 = arith.constant 0 : index
    %c0_0 = arith.constant 0 : index
    %c0_1 = arith.constant 0 : index
    %c0_2 = arith.constant 0 : index
    %0 = vector.load %arg1[%c0, %c0_0, %c0_1, %c0_2] : memref<1x36x9x16xbf16, #tpu.memory_space<vmem>>, vector<1x8x8x16xbf16>
    %1 = vector.shape_cast %0 : vector<1x8x8x16xbf16> to vector<64x16xbf16>
    %c0_3 = arith.constant 0 : index
    %c0_4 = arith.constant 0 : index
    %2 = vector.load %arg2[%c0_3, %c0_4] : memref<144x128xbf16, #tpu.memory_space<vmem>>, vector<16x128xbf16>
    %cst = arith.constant dense<0.000000e+00> : vector<64x128xf32>
    %3 = tpu.matmul %1, %2, %cst {dimension_numbers = #tpu.dot_dimension_numbers<[1], [0], [0], [1], [0, 0, 1, 1], [], []>} : vector<64x16xbf16>, vector<16x128xbf16>, vector<64x128xf32> -> vector<64x128xf32>
    %c0_5 = arith.constant 0 : index
    %c0_6 = arith.constant 0 : index
    %4 = vector.load %arg8[%c0_5, %c0_6] : memref<64x128xf32, #tpu.memory_space<vmem>>, vector<64x128xf32>
    tpu.vector_store %arg8[%c0_5, %c0_6], %3 {strides = array<i32>} : memref<64x128xf32, #tpu.memory_space<vmem>>, vector<64x128xf32>,
    %c0_7 = arith.constant 0 : index
    %c9 = arith.constant 9 : index
    %c0_8 = arith.constant 0 : index
    %c0_9 = arith.constant 0 : index
    %5 = vector.load %arg1[%c0_7, %c9, %c0_8, %c0_9] : memref<1x36x9x16xbf16, #tpu.memory_space<vmem>>, vector<1x8x8x16xbf16>
    %6 = vector.shape_cast %5 : vector<1x8x8x16xbf16> to vector<64x16xbf16>
    %c16 = arith.constant 16 : index
    %c0_10 = arith.constant 0 : index
    %7 = vector.load %arg2[%c16, %c0_10] : memref<144x128xbf16, #tpu.memory_space<vmem>>, vector<16x128xbf16>
    %cst_11 = arith.constant dense<0.000000e+00> : vector<64x128xf32>
    %8 = tpu.matmul %6, %7, %cst_11 {dimension_numbers = #tpu.dot_dimension_numbers<[1], [0], [0], [1], [0, 0, 1, 1], [], []>} : vector<64x16xbf16>, vector<16x128xbf16>, vector<64x128xf32> -> vector<64x128xf32>
    %c0_12 = arith.constant 0 : index
    %c0_13 = arith.constant 0 : index
    %9 = vector.load %arg8[%c0_12, %c0_13] : memref<64x128xf32, #tpu.memory_space<vmem>>, vector<64x128xf32>
    %10 = arith.addf %9, %8 : vector<64x128xf32>
    %c0_14 = arith.constant 0 : index
    %c0_15 = arith.constant 0 : index
    %11 = vector.load %arg8[%c0_14, %c0_15] : memref<64x128xf32, #tpu.memory_space<vmem>>, vector<64x128xf32>
    tpu.vector_store %arg8[%c0_14, %c0_15], %10 {strides = array<i32>} : memref<64x128xf32, #tpu.memory_space<vmem>>, vector<64x128xf32>,
    %c0_16 = arith.constant 0 : index
    %c0_17 = arith.constant 0 : index
    %c1 = arith.constant 1 : index
    %c0_18 = arith.constant 0 : index
    %12 = vector.load %arg1[%c0_16, %c0_17, %c1, %c0_18] : memref<1x36x9x16xbf16, #tpu.memory_space<vmem>>, vector<1x8x8x16xbf16>
    %13 = vector.shape_cast %12 : vector<1x8x8x16xbf16> to vector<64x16xbf16>
    %c32 = arith.constant 32 : index
    %c0_19 = arith.constant 0 : index
    %14 = vector.load %arg2[%c32, %c0_19] : memref<144x128xbf16, #tpu.memory_space<vmem>>, vector<16x128xbf16>
    %cst_20 = arith.constant dense<0.000000e+00> : vector<64x128xf32>
    %15 = tpu.matmul %13, %14, %cst_20 {dimension_numbers = #tpu.dot_dimension_numbers<[1], [0], [0], [1], [0, 0, 1, 1], [], []>} : vector<64x16xbf16>, vector<16x128xbf16>, vector<64x128xf32> -> vector<64x128xf32>
    %c0_21 = arith.constant 0 : index
    %c0_22 = arith.constant 0 : index
    %16 = vector.load %arg8[%c0_21, %c0_22] : memref<64x128xf32, #tpu.memory_space<vmem>>, vector<64x128xf32>
    %17 = arith.addf %16, %15 : vector<64x128xf32>
    %c0_23 = arith.constant 0 : index
    %c0_24 = arith.constant 0 : index
    %18 = vector.load %arg8[%c0_23, %c0_24] : memref<64x128xf32, #tpu.memory_space<vmem>>, vector<64x128xf32>
    tpu.vector_store %arg8[%c0_23, %c0_24], %17 {strides = array<i32>} : memref<64x128xf32, #tpu.memory_space<vmem>>, vector<64x128xf32>,
    %c0_25 = arith.constant 0 : index
    %c18 = arith.constant 18 : index
    %c0_26 = arith.constant 0 : index
    %c0_27 = arith.constant 0 : index
    %19 = vector.load %arg1[%c0_25, %c18, %c0_26, %c0_27] : memref<1x36x9x16xbf16, #tpu.memory_space<vmem>>, vector<1x8x8x16xbf16>
    %20 = vector.shape_cast %19 : vector<1x8x8x16xbf16> to vector<64x16xbf16>
    %c48 = arith.constant 48 : index
    %c0_28 = arith.constant 0 : index
    %21 = vector.load %arg2[%c48, %c0_28] : memref<144x128xbf16, #tpu.memory_space<vmem>>, vector<16x128xbf16>
    %cst_29 = arith.constant dense<0.000000e+00> : vector<64x128xf32>
    %22 = tpu.matmul %20, %21, %cst_29 {dimension_numbers = #tpu.dot_dimension_numbers<[1], [0], [0], [1], [0, 0, 1, 1], [], []>} : vector<64x16xbf16>, vector<16x128xbf16>, vector<64x128xf32> -> vector<64x128xf32>
    %c0_30 = arith.constant 0 : index
    %c0_31 = arith.constant 0 : index
    %23 = vector.load %arg8[%c0_30, %c0_31] : memref<64x128xf32, #tpu.memory_space<vmem>>, vector<64x128xf32>
    %24 = arith.addf %23, %22 : vector<64x128xf32>
    %c0_32 = arith.constant 0 : index
    %c0_33 = arith.constant 0 : index
    %25 = vector.load %arg8[%c0_32, %c0_33] : memref<64x128xf32, #tpu.memory_space<vmem>>, vector<64x128xf32>
    tpu.vector_store %arg8[%c0_32, %c0_33], %24 {strides = array<i32>} : memref<64x128xf32, #tpu.memory_space<vmem>>, vector<64x128xf32>,
    %c0_34 = arith.constant 0 : index
    %c27 = arith.constant 27 : index
    %c0_35 = arith.constant 0 : index
    %c0_36 = arith.constant 0 : index
    %26 = vector.load %arg1[%c0_34, %c27, %c0_35, %c0_36] : memref<1x36x9x16xbf16, #tpu.memory_space<vmem>>, vector<1x8x8x16xbf16>
    %27 = vector.shape_cast %26 : vector<1x8x8x16xbf16> to vector<64x16xbf16>
    %c64 = arith.constant 64 : index
    %c0_37 = arith.constant 0 : index
    %28 = vector.load %arg2[%c64, %c0_37] : memref<144x128xbf16, #tpu.memory_space<vmem>>, vector<16x128xbf16>
    %cst_38 = arith.constant dense<0.000000e+00> : vector<64x128xf32>
    %29 = tpu.matmul %27, %28, %cst_38 {dimension_numbers = #tpu.dot_dimension_numbers<[1], [0], [0], [1], [0, 0, 1, 1], [], []>} : vector<64x16xbf16>, vector<16x128xbf16>, vector<64x128xf32> -> vector<64x128xf32>
    %c0_39 = arith.constant 0 : index
    %c0_40 = arith.constant 0 : index
    %30 = vector.load %arg8[%c0_39, %c0_40] : memref<64x128xf32, #tpu.memory_space<vmem>>, vector<64x128xf32>
    %31 = arith.addf %30, %29 : vector<64x128xf32>
    %c0_41 = arith.constant 0 : index
    %c0_42 = arith.constant 0 : index
    %32 = vector.load %arg8[%c0_41, %c0_42] : memref<64x128xf32, #tpu.memory_space<vmem>>, vector<64x128xf32>
    tpu.vector_store %arg8[%c0_41, %c0_42], %31 {strides = array<i32>} : memref<64x128xf32, #tpu.memory_space<vmem>>, vector<64x128xf32>,
    %c0_43 = arith.constant 0 : index
    %c18_44 = arith.constant 18 : index
    %c1_45 = arith.constant 1 : index
    %c0_46 = arith.constant 0 : index
    %33 = vector.load %arg1[%c0_43, %c18_44, %c1_45, %c0_46] : memref<1x36x9x16xbf16, #tpu.memory_space<vmem>>, vector<1x8x8x16xbf16>
    %34 = vector.shape_cast %33 : vector<1x8x8x16xbf16> to vector<64x16xbf16>
    %c80 = arith.constant 80 : index
    %c0_47 = arith.constant 0 : index
    %35 = vector.load %arg2[%c80, %c0_47] : memref<144x128xbf16, #tpu.memory_space<vmem>>, vector<16x128xbf16>
    %cst_48 = arith.constant dense<0.000000e+00> : vector<64x128xf32>
    %36 = tpu.matmul %34, %35, %cst_48 {dimension_numbers = #tpu.dot_dimension_numbers<[1], [0], [0], [1], [0, 0, 1, 1], [], []>} : vector<64x16xbf16>, vector<16x128xbf16>, vector<64x128xf32> -> vector<64x128xf32>
    %c0_49 = arith.constant 0 : index
    %c0_50 = arith.constant 0 : index
    %37 = vector.load %arg8[%c0_49, %c0_50] : memref<64x128xf32, #tpu.memory_space<vmem>>, vector<64x128xf32>
    %38 = arith.addf %37, %36 : vector<64x128xf32>
    %c0_51 = arith.constant 0 : index
    %c0_52 = arith.constant 0 : index
    %39 = vector.load %arg8[%c0_51, %c0_52] : memref<64x128xf32, #tpu.memory_space<vmem>>, vector<64x128xf32>
    tpu.vector_store %arg8[%c0_51, %c0_52], %38 {strides = array<i32>} : memref<64x128xf32, #tpu.memory_space<vmem>>, vector<64x128xf32>,
    %c0_53 = arith.constant 0 : index
    %c1_54 = arith.constant 1 : index
    %c0_55 = arith.constant 0 : index
    %c0_56 = arith.constant 0 : index
    %40 = vector.load %arg1[%c0_53, %c1_54, %c0_55, %c0_56] : memref<1x36x9x16xbf16, #tpu.memory_space<vmem>>, vector<1x8x8x16xbf16>
    %41 = vector.shape_cast %40 : vector<1x8x8x16xbf16> to vector<64x16xbf16>
    %c96 = arith.constant 96 : index
    %c0_57 = arith.constant 0 : index
    %42 = vector.load %arg2[%c96, %c0_57] : memref<144x128xbf16, #tpu.memory_space<vmem>>, vector<16x128xbf16>
    %cst_58 = arith.constant dense<0.000000e+00> : vector<64x128xf32>
    %43 = tpu.matmul %41, %42, %cst_58 {dimension_numbers = #tpu.dot_dimension_numbers<[1], [0], [0], [1], [0, 0, 1, 1], [], []>} : vector<64x16xbf16>, vector<16x128xbf16>, vector<64x128xf32> -> vector<64x128xf32>
    %c0_59 = arith.constant 0 : index
    %c0_60 = arith.constant 0 : index
    %44 = vector.load %arg8[%c0_59, %c0_60] : memref<64x128xf32, #tpu.memory_space<vmem>>, vector<64x128xf32>
    %45 = arith.addf %44, %43 : vector<64x128xf32>
    %c0_61 = arith.constant 0 : index
    %c0_62 = arith.constant 0 : index
    %46 = vector.load %arg8[%c0_61, %c0_62] : memref<64x128xf32, #tpu.memory_space<vmem>>, vector<64x128xf32>
    tpu.vector_store %arg8[%c0_61, %c0_62], %45 {strides = array<i32>} : memref<64x128xf32, #tpu.memory_space<vmem>>, vector<64x128xf32>,
    %c0_63 = arith.constant 0 : index
    %c10 = arith.constant 10 : index
    %c0_64 = arith.constant 0 : index
    %c0_65 = arith.constant 0 : index
    %47 = vector.load %arg1[%c0_63, %c10, %c0_64, %c0_65] : memref<1x36x9x16xbf16, #tpu.memory_space<vmem>>, vector<1x8x8x16xbf16>
    %48 = vector.shape_cast %47 : vector<1x8x8x16xbf16> to vector<64x16xbf16>
    %c112 = arith.constant 112 : index
    %c0_66 = arith.constant 0 : index
    %49 = vector.load %arg2[%c112, %c0_66] : memref<144x128xbf16, #tpu.memory_space<vmem>>, vector<16x128xbf16>
    %cst_67 = arith.constant dense<0.000000e+00> : vector<64x128xf32>
    %50 = tpu.matmul %48, %49, %cst_67 {dimension_numbers = #tpu.dot_dimension_numbers<[1], [0], [0], [1], [0, 0, 1, 1], [], []>} : vector<64x16xbf16>, vector<16x128xbf16>, vector<64x128xf32> -> vector<64x128xf32>
    %c0_68 = arith.constant 0 : index
    %c0_69 = arith.constant 0 : index
    %51 = vector.load %arg8[%c0_68, %c0_69] : memref<64x128xf32, #tpu.memory_space<vmem>>, vector<64x128xf32>
    %52 = arith.addf %51, %50 : vector<64x128xf32>
    %c0_70 = arith.constant 0 : index
    %c0_71 = arith.constant 0 : index
    %53 = vector.load %arg8[%c0_70, %c0_71] : memref<64x128xf32, #tpu.memory_space<vmem>>, vector<64x128xf32>
    tpu.vector_store %arg8[%c0_70, %c0_71], %52 {strides = array<i32>} : memref<64x128xf32, #tpu.memory_space<vmem>>, vector<64x128xf32>,
    %c0_72 = arith.constant 0 : index
    %c1_73 = arith.constant 1 : index
    %c1_74 = arith.constant 1 : index
    %c0_75 = arith.constant 0 : index
    %54 = vector.load %arg1[%c0_72, %c1_73, %c1_74, %c0_75] : memref<1x36x9x16xbf16, #tpu.memory_space<vmem>>, vector<1x8x8x16xbf16>
    %55 = vector.shape_cast %54 : vector<1x8x8x16xbf16> to vector<64x16xbf16>
    %c128 = arith.constant 128 : index
    %c0_76 = arith.constant 0 : index
    %56 = vector.load %arg2[%c128, %c0_76] : memref<144x128xbf16, #tpu.memory_space<vmem>>, vector<16x128xbf16>
    %cst_77 = arith.constant dense<0.000000e+00> : vector<64x128xf32>
    %57 = tpu.matmul %55, %56, %cst_77 {dimension_numbers = #tpu.dot_dimension_numbers<[1], [0], [0], [1], [0, 0, 1, 1], [], []>} : vector<64x16xbf16>, vector<16x128xbf16>, vector<64x128xf32> -> vector<64x128xf32>
    %c0_78 = arith.constant 0 : index
    %c0_79 = arith.constant 0 : index
    %58 = vector.load %arg8[%c0_78, %c0_79] : memref<64x128xf32, #tpu.memory_space<vmem>>, vector<64x128xf32>
    %59 = arith.addf %58, %57 : vector<64x128xf32>
    %c0_80 = arith.constant 0 : index
    %c0_81 = arith.constant 0 : index
    %60 = vector.load %arg8[%c0_80, %c0_81] : memref<64x128xf32, #tpu.memory_space<vmem>>, vector<64x128xf32>
    tpu.vector_store %arg8[%c0_80, %c0_81], %59 {strides = array<i32>} : memref<64x128xf32, #tpu.memory_space<vmem>>, vector<64x128xf32>,
    %c0_82 = arith.constant 0 : index
    %c0_83 = arith.constant 0 : index
    %61 = vector.load %arg8[%c0_82, %c0_83] : memref<64x128xf32, #tpu.memory_space<vmem>>, vector<64x128xf32>
    %c0_84 = arith.constant 0 : index
    %c0_85 = arith.constant 0 : index
    %62 = vector.load %arg3[%c0_84, %c0_85] : memref<1x128xf32, #tpu.memory_space<vmem>>, vector<1x128xf32>
    %63 = vector.broadcast %62 : vector<1x128xf32> to vector<64x128xf32>
    %64 = arith.addf %61, %63 : vector<64x128xf32>
    %cst_86 = arith.constant 0.000000e+00 : f32
    %65 = vector.broadcast %cst_86 : f32 to vector<64x128xf32>
    %66 = arith.maximumf %64, %65 : vector<64x128xf32>
    %67 = arith.truncf %66 : vector<64x128xf32> to vector<64x128xbf16>
    %c0_87 = arith.constant 0 : index
    %c0_88 = arith.constant 0 : index
    %68 = vector.load %arg6[%c0_87, %c0_88] : memref<64x128xbf16, #tpu.memory_space<vmem>>, vector<64x128xbf16>
    tpu.vector_store %arg6[%c0_87, %c0_88], %67 {strides = array<i32>} : memref<64x128xbf16, #tpu.memory_space<vmem>>, vector<64x128xbf16>,
    %c0_89 = arith.constant 0 : index
    %c27_90 = arith.constant 27 : index
    %c0_91 = arith.constant 0 : index
    %c0_92 = arith.constant 0 : index
    %69 = vector.load %arg1[%c0_89, %c27_90, %c0_91, %c0_92] : memref<1x36x9x16xbf16, #tpu.memory_space<vmem>>, vector<1x8x8x16xbf16>
    %70 = vector.shape_cast %69 : vector<1x8x8x16xbf16> to vector<64x16xbf16>
    %c0_93 = arith.constant 0 : index
    %c0_94 = arith.constant 0 : index
    %71 = vector.load %arg4[%c0_93, %c0_94] : memref<16x128xbf16, #tpu.memory_space<vmem>>, vector<16x128xbf16>
    %cst_95 = arith.constant dense<0.000000e+00> : vector<64x128xf32>
    %72 = tpu.matmul %70, %71, %cst_95 {dimension_numbers = #tpu.dot_dimension_numbers<[1], [0], [0], [1], [0, 0, 1, 1], [], []>} : vector<64x16xbf16>, vector<16x128xbf16>, vector<64x128xf32> -> vector<64x128xf32>
    %c0_96 = arith.constant 0 : index
    %c0_97 = arith.constant 0 : index
    %73 = vector.load %arg5[%c0_96, %c0_97] : memref<1x128xf32, #tpu.memory_space<vmem>>, vector<1x128xf32>
    %74 = vector.broadcast %73 : vector<1x128xf32> to vector<64x128xf32>
    %75 = arith.addf %72, %74 : vector<64x128xf32>
    %76 = arith.truncf %75 : vector<64x128xf32> to vector<64x128xbf16>
    %c0_98 = arith.constant 0 : index
    %c0_99 = arith.constant 0 : index
    %77 = vector.load %arg7[%c0_98, %c0_99] : memref<64x128xbf16, #tpu.memory_space<vmem>>, vector<64x128xbf16>
    tpu.vector_store %arg7[%c0_98, %c0_99], %76 {strides = array<i32>} : memref<64x128xbf16, #tpu.memory_space<vmem>>, vector<64x128xbf16>,
    return
  }
  func.func @transform_0(%arg0: i32) -> (i32, i32, i32, i32) {
    %c0_i32 = arith.constant 0 : i32
    %c0_i32_0 = arith.constant 0 : i32
    %c0_i32_1 = arith.constant 0 : i32
    %c0_i32_2 = arith.constant 0 : i32
    return %arg0, %c0_i32, %c0_i32_0, %c0_i32_1 : i32, i32, i32, i32
  }
  func.func @transform_1(%arg0: i32) -> (i32, i32) {
    %c0_i32 = arith.constant 0 : i32
    %c0_i32_0 = arith.constant 0 : i32
    %c0_i32_1 = arith.constant 0 : i32
    return %c0_i32, %c0_i32_0 : i32, i32
  }
  func.func @transform_2(%arg0: i32) -> (i32, i32) {
    %c0_i32 = arith.constant 0 : i32
    %c0_i32_0 = arith.constant 0 : i32
    %c0_i32_1 = arith.constant 0 : i32
    return %c0_i32, %c0_i32_0 : i32, i32
  }
  func.func @transform_3(%arg0: i32) -> (i32, i32) {
    %c0_i32 = arith.constant 0 : i32
    %c0_i32_0 = arith.constant 0 : i32
    %c0_i32_1 = arith.constant 0 : i32
    return %c0_i32, %c0_i32_0 : i32, i32
  }
  func.func @transform_4(%arg0: i32) -> (i32, i32) {
    %c0_i32 = arith.constant 0 : i32
    %c0_i32_0 = arith.constant 0 : i32
    %c0_i32_1 = arith.constant 0 : i32
    return %c0_i32, %c0_i32_0 : i32, i32
  }
  func.func @transform_5(%arg0: i32) -> (i32, i32) {
    %c0_i32 = arith.constant 0 : i32
    %c0_i32_0 = arith.constant 0 : i32
    return %arg0, %c0_i32 : i32, i32
  }
  func.func @transform_6(%arg0: i32) -> (i32, i32) {
    %c0_i32 = arith.constant 0 : i32
    %c0_i32_0 = arith.constant 0 : i32
    return %arg0, %c0_i32 : i32, i32
  }
}

module attributes {stable_mosaic.version = 11 : i64} {
  func.func @_conv3x3_bn_kernel(%arg0: i32, %arg1: memref<1x10x10x128xbf16, #tpu.memory_space<vmem>>, %arg2: memref<1152x128xbf16, #tpu.memory_space<vmem>>, %arg3: memref<1x128xf32, #tpu.memory_space<vmem>>, %arg4: memref<64x128xbf16, #tpu.memory_space<vmem>>, %arg5: memref<64x128xf32, #tpu.memory_space<vmem>>, %arg6: memref<64x1152xbf16, #tpu.memory_space<vmem>>) attributes {dimension_semantics = [#tpu.dimension_semantics<parallel>], iteration_bounds = array<i64: 2>, scalar_prefetch = 0 : i64, scratch_operands = 1 : i64, tpu.core_type = #tpu.core_type<tc>, window_params = [{transform_indices = @transform_0, window_bounds = array<i64: 1, 10, 10, 128>}, {pipeline_mode = #tpu.pipeline_mode<synchronous>, transform_indices = @transform_1, window_bounds = array<i64: 1152, 128>}, {pipeline_mode = #tpu.pipeline_mode<synchronous>, transform_indices = @transform_2, window_bounds = array<i64: 1, 128>}, {transform_indices = @transform_3, window_bounds = array<i64: 64, 128>}, {transform_indices = @transform_4, window_bounds = array<i64: 64, 128>}]} {
    %c0 = arith.constant 0 : index
    %c0_0 = arith.constant 0 : index
    %c0_1 = arith.constant 0 : index
    %c0_2 = arith.constant 0 : index
    %0 = vector.load %arg1[%c0, %c0_0, %c0_1, %c0_2] : memref<1x10x10x128xbf16, #tpu.memory_space<vmem>>, vector<1x8x8x128xbf16>
    %1 = vector.shape_cast %0 : vector<1x8x8x128xbf16> to vector<64x128xbf16>
    %c0_3 = arith.constant 0 : index
    %c0_4 = arith.constant 0 : index
    %2 = vector.load %arg6[%c0_3, %c0_4] : memref<64x1152xbf16, #tpu.memory_space<vmem>>, vector<64x128xbf16>
    tpu.vector_store %arg6[%c0_3, %c0_4], %1 {strides = array<i32>} : memref<64x1152xbf16, #tpu.memory_space<vmem>>, vector<64x128xbf16>,
    %c0_5 = arith.constant 0 : index
    %c0_6 = arith.constant 0 : index
    %c1 = arith.constant 1 : index
    %c0_7 = arith.constant 0 : index
    %3 = vector.load %arg1[%c0_5, %c0_6, %c1, %c0_7] : memref<1x10x10x128xbf16, #tpu.memory_space<vmem>>, vector<1x8x8x128xbf16>
    %4 = vector.shape_cast %3 : vector<1x8x8x128xbf16> to vector<64x128xbf16>
    %c0_8 = arith.constant 0 : index
    %c128 = arith.constant 128 : index
    %5 = vector.load %arg6[%c0_8, %c128] : memref<64x1152xbf16, #tpu.memory_space<vmem>>, vector<64x128xbf16>
    tpu.vector_store %arg6[%c0_8, %c128], %4 {strides = array<i32>} : memref<64x1152xbf16, #tpu.memory_space<vmem>>, vector<64x128xbf16>,
    %c0_9 = arith.constant 0 : index
    %c0_10 = arith.constant 0 : index
    %c2 = arith.constant 2 : index
    %c0_11 = arith.constant 0 : index
    %6 = vector.load %arg1[%c0_9, %c0_10, %c2, %c0_11] : memref<1x10x10x128xbf16, #tpu.memory_space<vmem>>, vector<1x8x8x128xbf16>
    %7 = vector.shape_cast %6 : vector<1x8x8x128xbf16> to vector<64x128xbf16>
    %c0_12 = arith.constant 0 : index
    %c256 = arith.constant 256 : index
    %8 = vector.load %arg6[%c0_12, %c256] : memref<64x1152xbf16, #tpu.memory_space<vmem>>, vector<64x128xbf16>
    tpu.vector_store %arg6[%c0_12, %c256], %7 {strides = array<i32>} : memref<64x1152xbf16, #tpu.memory_space<vmem>>, vector<64x128xbf16>,
    %c0_13 = arith.constant 0 : index
    %c1_14 = arith.constant 1 : index
    %c0_15 = arith.constant 0 : index
    %c0_16 = arith.constant 0 : index
    %9 = vector.load %arg1[%c0_13, %c1_14, %c0_15, %c0_16] : memref<1x10x10x128xbf16, #tpu.memory_space<vmem>>, vector<1x8x8x128xbf16>
    %10 = vector.shape_cast %9 : vector<1x8x8x128xbf16> to vector<64x128xbf16>
    %c0_17 = arith.constant 0 : index
    %c384 = arith.constant 384 : index
    %11 = vector.load %arg6[%c0_17, %c384] : memref<64x1152xbf16, #tpu.memory_space<vmem>>, vector<64x128xbf16>
    tpu.vector_store %arg6[%c0_17, %c384], %10 {strides = array<i32>} : memref<64x1152xbf16, #tpu.memory_space<vmem>>, vector<64x128xbf16>,
    %c0_18 = arith.constant 0 : index
    %c1_19 = arith.constant 1 : index
    %c1_20 = arith.constant 1 : index
    %c0_21 = arith.constant 0 : index
    %12 = vector.load %arg1[%c0_18, %c1_19, %c1_20, %c0_21] : memref<1x10x10x128xbf16, #tpu.memory_space<vmem>>, vector<1x8x8x128xbf16>
    %13 = vector.shape_cast %12 : vector<1x8x8x128xbf16> to vector<64x128xbf16>
    %c0_22 = arith.constant 0 : index
    %c512 = arith.constant 512 : index
    %14 = vector.load %arg6[%c0_22, %c512] : memref<64x1152xbf16, #tpu.memory_space<vmem>>, vector<64x128xbf16>
    tpu.vector_store %arg6[%c0_22, %c512], %13 {strides = array<i32>} : memref<64x1152xbf16, #tpu.memory_space<vmem>>, vector<64x128xbf16>,
    %c0_23 = arith.constant 0 : index
    %c1_24 = arith.constant 1 : index
    %c2_25 = arith.constant 2 : index
    %c0_26 = arith.constant 0 : index
    %15 = vector.load %arg1[%c0_23, %c1_24, %c2_25, %c0_26] : memref<1x10x10x128xbf16, #tpu.memory_space<vmem>>, vector<1x8x8x128xbf16>
    %16 = vector.shape_cast %15 : vector<1x8x8x128xbf16> to vector<64x128xbf16>
    %c0_27 = arith.constant 0 : index
    %c640 = arith.constant 640 : index
    %17 = vector.load %arg6[%c0_27, %c640] : memref<64x1152xbf16, #tpu.memory_space<vmem>>, vector<64x128xbf16>
    tpu.vector_store %arg6[%c0_27, %c640], %16 {strides = array<i32>} : memref<64x1152xbf16, #tpu.memory_space<vmem>>, vector<64x128xbf16>,
    %c0_28 = arith.constant 0 : index
    %c2_29 = arith.constant 2 : index
    %c0_30 = arith.constant 0 : index
    %c0_31 = arith.constant 0 : index
    %18 = vector.load %arg1[%c0_28, %c2_29, %c0_30, %c0_31] : memref<1x10x10x128xbf16, #tpu.memory_space<vmem>>, vector<1x8x8x128xbf16>
    %19 = vector.shape_cast %18 : vector<1x8x8x128xbf16> to vector<64x128xbf16>
    %c0_32 = arith.constant 0 : index
    %c768 = arith.constant 768 : index
    %20 = vector.load %arg6[%c0_32, %c768] : memref<64x1152xbf16, #tpu.memory_space<vmem>>, vector<64x128xbf16>
    tpu.vector_store %arg6[%c0_32, %c768], %19 {strides = array<i32>} : memref<64x1152xbf16, #tpu.memory_space<vmem>>, vector<64x128xbf16>,
    %c0_33 = arith.constant 0 : index
    %c2_34 = arith.constant 2 : index
    %c1_35 = arith.constant 1 : index
    %c0_36 = arith.constant 0 : index
    %21 = vector.load %arg1[%c0_33, %c2_34, %c1_35, %c0_36] : memref<1x10x10x128xbf16, #tpu.memory_space<vmem>>, vector<1x8x8x128xbf16>
    %22 = vector.shape_cast %21 : vector<1x8x8x128xbf16> to vector<64x128xbf16>
    %c0_37 = arith.constant 0 : index
    %c896 = arith.constant 896 : index
    %23 = vector.load %arg6[%c0_37, %c896] : memref<64x1152xbf16, #tpu.memory_space<vmem>>, vector<64x128xbf16>
    tpu.vector_store %arg6[%c0_37, %c896], %22 {strides = array<i32>} : memref<64x1152xbf16, #tpu.memory_space<vmem>>, vector<64x128xbf16>,
    %c0_38 = arith.constant 0 : index
    %c2_39 = arith.constant 2 : index
    %c2_40 = arith.constant 2 : index
    %c0_41 = arith.constant 0 : index
    %24 = vector.load %arg1[%c0_38, %c2_39, %c2_40, %c0_41] : memref<1x10x10x128xbf16, #tpu.memory_space<vmem>>, vector<1x8x8x128xbf16>
    %25 = vector.shape_cast %24 : vector<1x8x8x128xbf16> to vector<64x128xbf16>
    %c0_42 = arith.constant 0 : index
    %c1024 = arith.constant 1024 : index
    %26 = vector.load %arg6[%c0_42, %c1024] : memref<64x1152xbf16, #tpu.memory_space<vmem>>, vector<64x128xbf16>
    tpu.vector_store %arg6[%c0_42, %c1024], %25 {strides = array<i32>} : memref<64x1152xbf16, #tpu.memory_space<vmem>>, vector<64x128xbf16>,
    %c0_43 = arith.constant 0 : index
    %c0_44 = arith.constant 0 : index
    %27 = vector.load %arg6[%c0_43, %c0_44] : memref<64x1152xbf16, #tpu.memory_space<vmem>>, vector<64x1152xbf16>
    %c0_45 = arith.constant 0 : index
    %c0_46 = arith.constant 0 : index
    %28 = vector.load %arg2[%c0_45, %c0_46] : memref<1152x128xbf16, #tpu.memory_space<vmem>>, vector<1152x128xbf16>
    %cst = arith.constant dense<0.000000e+00> : vector<64x128xf32>
    %29 = tpu.matmul %27, %28, %cst {dimension_numbers = #tpu.dot_dimension_numbers<[1], [0], [0], [1], [0, 0, 1, 1], [], []>} : vector<64x1152xbf16>, vector<1152x128xbf16>, vector<64x128xf32> -> vector<64x128xf32>
    %c0_47 = arith.constant 0 : index
    %c0_48 = arith.constant 0 : index
    %30 = vector.load %arg3[%c0_47, %c0_48] : memref<1x128xf32, #tpu.memory_space<vmem>>, vector<1x128xf32>
    %31 = vector.broadcast %30 : vector<1x128xf32> to vector<64x128xf32>
    %32 = arith.addf %29, %31 : vector<64x128xf32>
    %c0_49 = arith.constant 0 : index
    %c0_50 = arith.constant 0 : index
    %33 = vector.load %arg4[%c0_49, %c0_50] : memref<64x128xbf16, #tpu.memory_space<vmem>>, vector<64x128xbf16>
    %34 = arith.extf %33 : vector<64x128xbf16> to vector<64x128xf32>
    %35 = arith.addf %32, %34 : vector<64x128xf32>
    %cst_51 = arith.constant 0.000000e+00 : f32
    %36 = vector.broadcast %cst_51 : f32 to vector<64x128xf32>
    %37 = arith.maximumf %35, %36 : vector<64x128xf32>
    %c0_52 = arith.constant 0 : index
    %c0_53 = arith.constant 0 : index
    %38 = vector.load %arg5[%c0_52, %c0_53] : memref<64x128xf32, #tpu.memory_space<vmem>>, vector<64x128xf32>
    tpu.vector_store %arg5[%c0_52, %c0_53], %37 {strides = array<i32>} : memref<64x128xf32, #tpu.memory_space<vmem>>, vector<64x128xf32>,
    return
  }
  func.func @transform_0(%arg0: i32) -> (i32, i32, i32, i32) {
    %c0_i32 = arith.constant 0 : i32
    %c0_i32_0 = arith.constant 0 : i32
    %c0_i32_1 = arith.constant 0 : i32
    %c0_i32_2 = arith.constant 0 : i32
    return %arg0, %c0_i32, %c0_i32_0, %c0_i32_1 : i32, i32, i32, i32
  }
  func.func @transform_1(%arg0: i32) -> (i32, i32) {
    %c0_i32 = arith.constant 0 : i32
    %c0_i32_0 = arith.constant 0 : i32
    %c0_i32_1 = arith.constant 0 : i32
    return %c0_i32, %c0_i32_0 : i32, i32
  }
  func.func @transform_2(%arg0: i32) -> (i32, i32) {
    %c0_i32 = arith.constant 0 : i32
    %c0_i32_0 = arith.constant 0 : i32
    %c0_i32_1 = arith.constant 0 : i32
    return %c0_i32, %c0_i32_0 : i32, i32
  }
  func.func @transform_3(%arg0: i32) -> (i32, i32) {
    %c0_i32 = arith.constant 0 : i32
    %c0_i32_0 = arith.constant 0 : i32
    return %arg0, %c0_i32 : i32, i32
  }
  func.func @transform_4(%arg0: i32) -> (i32, i32) {
    %c0_i32 = arith.constant 0 : i32
    %c0_i32_0 = arith.constant 0 : i32
    return %arg0, %c0_i32 : i32, i32
  }
}

</mosaic_0001>

<llo_original>
// kernel: _forward_impl.2
$region0: #{_forward_impl.2}
  #allocation0 [shape = 'u32[]', space=smem, size = 0x4, offset = 0x4, fixed_abs, tag = 'smem constant byte address 0x4 - core index']
  #allocation1 [shape = 'u32[144,128]{1,0:T(1,128)}', space=vmem, size = 0x12000, scoped, tag = 'internal scratch']
  #allocation2 [shape = 'f32[64,128]{1,0:T(8,128)}', space=vmem, size = 0x8000, scoped, tag = 'scratch operand']
  %s0 = inlined_call_operand.vmem [shape: bf16[2,36,9,16], index: 0, kind: input, shape index: {}]
  %s1 = inlined_call_operand.vmem [shape: bf16[144,128], index: 1, kind: input, shape index: {}]
  %s2 = inlined_call_operand.vmem [shape: f32[1,128], index: 2, kind: input, shape index: {}]
  %s3 = inlined_call_operand.vmem [shape: bf16[16,128], index: 3, kind: input, shape index: {}]
  %s4 = inlined_call_operand.vmem [shape: f32[1,128], index: 4, kind: input, shape index: {}]
  %s5 = inlined_call_operand.vmem [shape: bf16[128,128], index: 5, kind: output, shape index: {0}]
  %s6 = inlined_call_operand.vmem [shape: bf16[128,128], index: 6, kind: output, shape index: {1}]
  %7 = xla_tuple %s5, %s6
  %s8 = sld [smem:[#allocation0]]
  $region61: #{_forward_impl.2} parent=0
    _
  %s10 = ssub.s32 1, %s8
  %s11 = scalar_select 0, %s10, %s8
  loop: start=0, step=1, limit=4
  $region2: #{_forward_impl.2} parent=0 // loop_pre_header
    _
  $region3: #{_forward_impl.2} parent=0 // loop_header
    %s13 = sphi 0, %s17
    %p14 = scmp.ge.s32.totalorder %s13, 4
    %s23 = sphi 0, %s25
    %s26 = sphi 0, %s23
    %s27 = sphi 0, %s26
    %s43 = sphi 0, %s27
    %s47 = sphi 0, %s47
    %s49 = sphi 0, %s47
    %s50 = sphi 0, %s49
    %s64 = sphi 0, %s50
    %s68 = sphi 0, %s68
    %s70 = sphi 0, %s68
    %s71 = sphi 0, %s70
    %s85 = sphi 0, %s71
    %s89 = sphi 0, %s89
    %s91 = sphi 0, %s89
    %s92 = sphi 0, %s91
    %s106 = sphi 0, %s92
    %s110 = sphi 0, %s110
    %s112 = sphi 0, %s110
    %s113 = sphi 0, %s112
    %s127 = sphi 0, %s113
    %s133 = sphi 0, %s135
    %s136 = sphi 0, %s133
    %s137 = sphi 0, %s136
    %s153 = sphi 0, %s137
    %s159 = sphi 0, %s161
    %s162 = sphi 0, %s159
    %s163 = sphi 0, %s162
    %s179 = sphi 0, %s163
  $region4: #{_forward_impl.2} parent=0 // loop_header_branch
    %16 = sbr.rel (%p14) target = $region8
  $region5: #{_forward_impl.2} parent=0 // loop_body
    %s18 = ssub.s32 %s13, 1
    %s19 = ssub.s32 %s13, 2
    %s20 = sadd.s32 %s13, 1
    %s21 = ssub.s32 %s13, %s20
    %p22 = scmp.eq.s32.totalorder %s21, 0
    %s24 = sadd.s32 %s23, 1
    %s25 = scalar_select %p22, %s23, %s24
    %p28 = pneg %p22
    %p29 = scmp.eq.s32.totalorder %s13, 1
    %p30 = por %p28, %p29
    %p31 = scmp.ne.s32.totalorder %s23, %s26
    %p32 = scmp.eq.s32.totalorder %s13, 0
    %p33 = por %p31, %p32
    %p34 = scmp.ne.s32.totalorder %s23, %s26
    %p35 = scmp.eq.s32.totalorder %s18, 1
    %p36 = por %p34, %p35
    %p37 = scmp.ne.s32.totalorder %s26, %s27
    %p38 = scmp.eq.s32.totalorder %s18, 0
    %p39 = por %p37, %p38
    %p40 = scmp.ne.s32.totalorder %s26, %s27
    %p41 = scmp.eq.s32.totalorder %s19, 1
    %p42 = por %p40, %p41
    %p44 = scmp.ne.s32.totalorder %s27, %s43
    %p45 = scmp.eq.s32.totalorder %s19, 0
    %p46 = por %p44, %p45
    %s48 = sadd.s32 %s47, 1
    %p51 = scmp.eq.s32.totalorder %s13, 1
    %p52 = scmp.ne.s32.totalorder %s47, %s49
    %p53 = scmp.eq.s32.totalorder %s13, 0
    %p54 = por %p52, %p53
    %p55 = scmp.ne.s32.totalorder %s47, %s49
    %p56 = scmp.eq.s32.totalorder %s18, 1
    %p57 = por %p55, %p56
    %p58 = scmp.ne.s32.totalorder %s49, %s50
    %p59 = scmp.eq.s32.totalorder %s18, 0
    %p60 = por %p58, %p59
    %p61 = scmp.ne.s32.totalorder %s49, %s50
    %p62 = scmp.eq.s32.totalorder %s19, 1
    %p63 = por %p61, %p62
    %p65 = scmp.ne.s32.totalorder %s50, %s64
    %p66 = scmp.eq.s32.totalorder %s19, 0
    %p67 = por %p65, %p66
    %s69 = sadd.s32 %s68, 1
    %p72 = scmp.eq.s32.totalorder %s13, 1
    %p73 = scmp.ne.s32.totalorder %s68, %s70
    %p74 = scmp.eq.s32.totalorder %s13, 0
    %p75 = por %p73, %p74
    %p76 = scmp.ne.s32.totalorder %s68, %s70
    %p77 = scmp.eq.s32.totalorder %s18, 1
    %p78 = por %p76, %p77
    %p79 = scmp.ne.s32.totalorder %s70, %s71
    %p80 = scmp.eq.s32.totalorder %s18, 0
    %p81 = por %p79, %p80
    %p82 = scmp.ne.s32.totalorder %s70, %s71
    %p83 = scmp.eq.s32.totalorder %s19, 1
    %p84 = por %p82, %p83
    %p86 = scmp.ne.s32.totalorder %s71, %s85
    %p87 = scmp.eq.s32.totalorder %s19, 0
    %p88 = por %p86, %p87
    %s90 = sadd.s32 %s89, 1
    %p93 = scmp.eq.s32.totalorder %s13, 1
    %p94 = scmp.ne.s32.totalorder %s89, %s91
    %p95 = scmp.eq.s32.totalorder %s13, 0
    %p96 = por %p94, %p95
    %p97 = scmp.ne.s32.totalorder %s89, %s91
    %p98 = scmp.eq.s32.totalorder %s18, 1
    %p99 = por %p97, %p98
    %p100 = scmp.ne.s32.totalorder %s91, %s92
    %p101 = scmp.eq.s32.totalorder %s18, 0
    %p102 = por %p100, %p101
    %p103 = scmp.ne.s32.totalorder %s91, %s92
    %p104 = scmp.eq.s32.totalorder %s19, 1
    %p105 = por %p103, %p104
    %p107 = scmp.ne.s32.totalorder %s92, %s106
    %p108 = scmp.eq.s32.totalorder %s19, 0
    %p109 = por %p107, %p108
    %s111 = sadd.s32 %s110, 1
    %p114 = scmp.eq.s32.totalorder %s13, 1
    %p115 = scmp.ne.s32.totalorder %s110, %s112
    %p116 = scmp.eq.s32.totalorder %s13, 0
    %p117 = por %p115, %p116
    %p118 = scmp.ne.s32.totalorder %s110, %s112
    %p119 = scmp.eq.s32.totalorder %s18, 1
    %p120 = por %p118, %p119
    %p121 = scmp.ne.s32.totalorder %s112, %s113
    %p122 = scmp.eq.s32.totalorder %s18, 0
    %p123 = por %p121, %p122
    %p124 = scmp.ne.s32.totalorder %s112, %s113
    %p125 = scmp.eq.s32.totalorder %s19, 1
    %p126 = por %p124, %p125
    %p128 = scmp.ne.s32.totalorder %s113, %s127
    %p129 = scmp.eq.s32.totalorder %s19, 0
    %p130 = por %p128, %p129
    %s131 = ssub.s32 %s13, %s20
    %p132 = scmp.eq.s32.totalorder %s131, 0
    %s134 = sadd.s32 %s133, 1
    %s135 = scalar_select %p132, %s133, %s134
    %p138 = pneg %p132
    %p139 = scmp.eq.s32.totalorder %s13, 1
    %p140 = por %p138, %p139
    %p141 = scmp.ne.s32.totalorder %s133, %s136
    %p142 = scmp.eq.s32.totalorder %s13, 0
    %p143 = por %p141, %p142
    %p144 = scmp.ne.s32.totalorder %s133, %s136
    %p145 = scmp.eq.s32.totalorder %s18, 1
    %p146 = por %p144, %p145
    %p147 = scmp.ne.s32.totalorder %s136, %s137
    %p148 = scmp.eq.s32.totalorder %s18, 0
    %p149 = por %p147, %p148
    %p150 = scmp.ne.s32.totalorder %s136, %s137
    %p151 = scmp.eq.s32.totalorder %s19, 1
    %p152 = por %p150, %p151
    %p154 = scmp.ne.s32.totalorder %s137, %s153
    %p155 = scmp.eq.s32.totalorder %s19, 0
    %p156 = por %p154, %p155
    %s157 = ssub.s32 %s13, %s20
    %p158 = scmp.eq.s32.totalorder %s157, 0
    %s160 = sadd.s32 %s159, 1
    %s161 = scalar_select %p158, %s159, %s160
    %p164 = pneg %p158
    %p165 = scmp.eq.s32.totalorder %s13, 1
    %p166 = por %p164, %p165
    %p167 = scmp.ne.s32.totalorder %s159, %s162
    %p168 = scmp.eq.s32.totalorder %s13, 0
    %p169 = por %p167, %p168
    %p170 = scmp.ne.s32.totalorder %s159, %s162
    %p171 = scmp.eq.s32.totalorder %s18, 1
    %p172 = por %p170, %p171
    %p173 = scmp.ne.s32.totalorder %s162, %s163
    %p174 = scmp.eq.s32.totalorder %s18, 0
    %p175 = por %p173, %p174
    %p176 = scmp.ne.s32.totalorder %s162, %s163
    %p177 = scmp.eq.s32.totalorder %s19, 1
    %p178 = por %p176, %p177
    %p180 = scmp.ne.s32.totalorder %s163, %s179
    %p181 = scmp.eq.s32.totalorder %s19, 0
    %p182 = por %p180, %p181
    %p183 = scmp.le.s32.totalorder 1, %s13
    %p184 = scmp.lt.s32.totalorder %s13, 3
    %p185 = pnand %p183, %p184
    %p186 = pneg %p185
    // Predicated region
    $region9: #{_forward_impl.2} parent=5 // pred_check
      _
    $region10: #{_forward_impl.2} parent=5 // pred_check_branch
      %188 = sbr.rel (%p185) target = $region12
    $region11: #{_forward_impl.2} parent=5 // pred_region
      %s189 = ssub.s32 %s13, 1
      // Predicated region
      $region13: #{_forward_impl.2} parent=11 // pred_check
        %p190 = pneg %p60
      $region14: #{_forward_impl.2} parent=11 // pred_check_branch
        %192 = sbr.rel (%p190) target = $region16
      $region15: #{_forward_impl.2} parent=11 // pred_region
        _
      $region16: #{_forward_impl.2} parent=11 // pred_fallthru
        _
      // Predicated region
      $region17: #{_forward_impl.2} parent=11 // pred_check
        %p193 = pneg %p81
      $region18: #{_forward_impl.2} parent=11 // pred_check_branch
        %195 = sbr.rel (%p193) target = $region20
      $region19: #{_forward_impl.2} parent=11 // pred_region
        _
      $region20: #{_forward_impl.2} parent=11 // pred_fallthru
        _
      // Predicated region
      $region21: #{_forward_impl.2} parent=11 // pred_check
        %p196 = pneg %p102
      $region22: #{_forward_impl.2} parent=11 // pred_check_branch
        %198 = sbr.rel (%p196) target = $region24
      $region23: #{_forward_impl.2} parent=11 // pred_region
        _
      $region24: #{_forward_impl.2} parent=11 // pred_fallthru
        _
      // Predicated region
      $region25: #{_forward_impl.2} parent=11 // pred_check
        %p199 = pneg %p123
      $region26: #{_forward_impl.2} parent=11 // pred_check_branch
        %201 = sbr.rel (%p199) target = $region28
      $region27: #{_forward_impl.2} parent=11 // pred_region
        _
      $region28: #{_forward_impl.2} parent=11 // pred_fallthru
        _
    $region12: #{_forward_impl.2} parent=5 // pred_fallthru
      _
    %p202 = scmp.lt.s32.totalorder %s13, 2
    // Predicated region
    $region29: #{_forward_impl.2} parent=5 // pred_check
      %p203 = pneg %p202
    $region30: #{_forward_impl.2} parent=5 // pred_check_branch
      %205 = sbr.rel (%p203) target = $region32
    $region31: #{_forward_impl.2} parent=5 // pred_region
      // Predicated region
      $region33: #{_forward_impl.2} parent=31 // pred_check
        %p206 = pneg %p33
      $region34: #{_forward_impl.2} parent=31 // pred_check_branch
        %208 = sbr.rel (%p206) target = $region36
      $region35: #{_forward_impl.2} parent=31 // pred_region
        %p209 = scmp.lt.s32.totalorder %s13, 1
        %s210 = scalar_select %p209, %s13, 1
        %s211 = smul.addr %s210, 72
        %s212 = smul.addr %s211, 4
        %s213 = scalar_lea.vmem %s0, %s212
      $region36: #{_forward_impl.2} parent=31 // pred_fallthru
        _
    $region32: #{_forward_impl.2} parent=5 // pred_fallthru
      _
    %p214 = scmp.le.s32.totalorder 1, %s13
    %p215 = scmp.lt.s32.totalorder %s13, 3
    %p216 = pnand %p214, %p215
    %p217 = pneg %p216
    // Predicated region
    $region37: #{_forward_impl.2} parent=5 // pred_check
      _
    $region38: #{_forward_impl.2} parent=5 // pred_check_branch
      %219 = sbr.rel (%p216) target = $region40
    $region39: #{_forward_impl.2} parent=5 // pred_region
      %s220 = ssub.s32 %s13, 1
      %p221 = scmp.lt.s32.totalorder %s18, 1
      %s222 = scalar_select %p221, %s18, 1
      %s223 = smul.addr %s222, 72
      %s224 = smul.addr %s223, 4
      %s225 = scalar_lea.vmem %s0, %s224
      %p226 = pneg %p39
      %p227 = pneg %p36
      %p228 = pneg %p60
      %p229 = pneg %p57
      %p230 = pneg %p81
      %p231 = pneg %p78
      %p232 = pneg %p102
      %p233 = pneg %p99
      %p234 = pneg %p123
      %p235 = pneg %p120
      %p236 = pneg %p149
      %p237 = pneg %p146
      %s238 = smul.u32 8, %s18
      %p239 = scmp.lt.s32.totalorder %s238, 15
      %s240 = scalar_select %p239, %s238, 15
      %s241 = smul.addr %s240, 4
      %s242 = scalar_lea.vmem %s5, %s241
      %p243 = pneg %p175
      %p244 = pneg %p172
      %s245 = smul.u32 8, %s18
      %p246 = scmp.lt.s32.totalorder %s245, 15
      %s247 = scalar_select %p246, %s245, 15
      %s248 = smul.addr %s247, 4
      %s249 = scalar_lea.vmem %s6, %s248
      %p250 = scmp.lt.s32.totalorder %s18, 1
      %s251 = scalar_select %p250, %s18, 1
      %s252 = smul.addr %s251, 72
      %s253 = smul.addr %s252, 4
      %s254 = scalar_lea.vmem %s0, %s253
      %s255 = smul.u32 8, %s18
      %p256 = scmp.lt.s32.totalorder %s255, 15
      %s257 = scalar_select %p256, %s255, 15
      %s258 = smul.addr %s257, 4
      %s259 = scalar_lea.vmem %s5, %s258
      %s260 = smul.u32 8, %s18
      %s261 = smul.u32 8, %s18
      %p262 = scmp.lt.s32.totalorder %s261, 15
      %s263 = scalar_select %p262, %s261, 15
      %s264 = smul.addr %s263, 4
      %s265 = scalar_lea.vmem %s6, %s264
      %s266 = smul.u32 8, %s18
      %v268 = vld [vmem:[%s254] sm:$0xf]
      %v269 = vld [vmem:[%s254 + $0x8] sm:$0xf]
      %v270 = vld [vmem:[%s254 + $0x10] sm:$0xf]
      %v271 = vld [vmem:[%s254 + $0x18] sm:$0xf]
      %v272 = vld [vmem:[%s254 + $0x20] sm:$0xf]
      %v273 = vld [vmem:[%s254 + $0x28] sm:$0xf]
      %v274 = vld [vmem:[%s254 + $0x30] sm:$0xf]
      %v275 = vld [vmem:[%s254 + $0x38] sm:$0xf]
      %v276 = vld [vmem:[%s1] sm:$0xf]
      %v277 = vld [vmem:[%s1 + $0x4] sm:$0xf]
      %v286 = vunpack.c.l.b16 %v268
      %v287 = vunpack.c.l.b16 %v269
      %v288 = vunpack.c.l.b16 %v270
      %v289 = vunpack.c.l.b16 %v271
      %v290 = vunpack.c.l.b16 %v272
      %v291 = vunpack.c.l.b16 %v273
      %v292 = vunpack.c.l.b16 %v274
      %v293 = vunpack.c.l.b16 %v275
      %v294 = vpack.c.b16 %v287, %v286
      %v295 = vpack.c.b16 %v289, %v288
      %v296 = vpack.c.b16 %v291, %v290
      %v297 = vpack.c.b16 %v293, %v292
      %v300 = vunpack.c.l.b16 %v276
      %v301 = vunpack.c.l.b16 %v277
      %v302 = vpack.c.b16 %v301, %v300
      %vm304 = vcmask 130048
      %v306 = vsel %vm304, %v294, 0
      %v309 = vsel %vm304, %v295, 0
      %v312 = vsel %vm304, %v296, 0
      %v315 = vsel %vm304, %v297, 0
      %317 = vmatprep.subr.bf16.mxu0 0
      %318 = vmatpush1.bf16.msra.mxu0 %v302
      %319 = vmatprep.subr.bf16.mxu0 0
      %320 = vmatpush1.bf16.msra.mxu0 0
      %321 = vmatprep.subr.bf16.mxu0 0
      %322 = vmatpush1.bf16.msra.mxu0 0
      %323 = vmatprep.subr.bf16.mxu0 0
      %324 = vmatpush1.bf16.msra.mxu0 0
      %325 = vmatprep.subr.bf16.mxu0 0
      %326 = vmatpush1.bf16.msra.mxu0 0
      %327 = vmatprep.subr.bf16.mxu0 0
      %328 = vmatpush1.bf16.msra.mxu0 0
      %329 = vmatprep.subr.bf16.mxu0 0
      %330 = vmatpush1.bf16.msra.mxu0 0
      %331 = vmatprep.subr.bf16.mxu0 0
      %332 = vmatpush1.bf16.msra.mxu0 0
      %333 = vmatprep.subr.bf16.mxu0 0
      %334 = vmatpush1.bf16.msra.mxu0 0
      %335 = vmatprep.subr.bf16.mxu0 0
      %336 = vmatpush1.bf16.msra.mxu0 0
      %337 = vmatprep.subr.bf16.mxu0 0
      %338 = vmatpush1.bf16.msra.mxu0 0
      %339 = vmatprep.subr.bf16.mxu0 0
      %340 = vmatpush1.bf16.msra.mxu0 0
      %341 = vmatprep.subr.bf16.mxu0 0
      %342 = vmatpush1.bf16.msra.mxu0 0
      %343 = vmatprep.subr.bf16.mxu0 0
      %344 = vmatpush1.bf16.msra.mxu0 0
      %345 = vmatprep.subr.bf16.mxu0 0
      %346 = vmatpush1.bf16.msra.mxu0 0
      %347 = vmatprep.subr.bf16.mxu0 0
      %348 = vmatpush1.bf16.msra.mxu0 0
      %349 = vmatprep.mubr.bf16.mxu0 0
      %350 = vmatmul.mubr.bf16.gmra.mrb[0].mxu0 %v306
      %v351 = vpop.f32.mrb[0].mxu0
      %v352 = vadd.f32 0.0, %v351
      %v353 = vpop.f32.mrb[0].mxu0
      %v354 = vpop.f32.mrb[0].mxu0
      %v355 = vadd.f32 0.0, %v354
      %v356 = vpop.f32.mrb[0].mxu0
      %357 = vmatprep.mubr.bf16.mxu0 0
      %358 = vmatmul.mubr.bf16.gmra.mrb[0].mxu0 %v309
      %v359 = vpop.f32.mrb[0].mxu0
      %v360 = vadd.f32 0.0, %v359
      %v361 = vpop.f32.mrb[0].mxu0
      %v362 = vpop.f32.mrb[0].mxu0
      %v363 = vadd.f32 0.0, %v362
      %v364 = vpop.f32.mrb[0].mxu0
      %365 = vmatprep.mubr.bf16.mxu0 0
      %366 = vmatmul.mubr.bf16.gmra.mrb[0].mxu0 %v312
      %v367 = vpop.f32.mrb[0].mxu0
      %v368 = vadd.f32 0.0, %v367
      %v369 = vpop.f32.mrb[0].mxu0
      %v370 = vpop.f32.mrb[0].mxu0
      %v371 = vadd.f32 0.0, %v370
      %v372 = vpop.f32.mrb[0].mxu0
      %373 = vmatprep.mubr.bf16.mxu0 0
      %374 = vmatmul.mubr.bf16.gmra.mrb[0].mxu0 %v315
      %v375 = vpop.f32.mrb[0].mxu0
      %v376 = vadd.f32 0.0, %v375
      %v377 = vpop.f32.mrb[0].mxu0
      %v378 = vpop.f32.mrb[0].mxu0
      %v379 = vadd.f32 0.0, %v378
      %v380 = vpop.f32.mrb[0].mxu0
      %381 = vdwg.mxu0
      %382 = vst [vmem:[#allocation2] sm:$0xff] %v352
      %383 = vst [vmem:[#allocation2 + $0x8] sm:$0xff] %v355
      %384 = vst [vmem:[#allocation2 + $0x10] sm:$0xff] %v360
      %385 = vst [vmem:[#allocation2 + $0x18] sm:$0xff] %v363
      %386 = vst [vmem:[#allocation2 + $0x20] sm:$0xff] %v368
      %387 = vst [vmem:[#allocation2 + $0x28] sm:$0xff] %v371
      %388 = vst [vmem:[#allocation2 + $0x30] sm:$0xff] %v376
      %389 = vst [vmem:[#allocation2 + $0x38] sm:$0xff] %v379
      %s390 = scalar_lea.vmem %s254, 72
      %v391 = vld [vmem:[%s390] sm:$0xf]
      %v392 = vld [vmem:[%s390 + $0x8] sm:$0xf]
      %v393 = vld [vmem:[%s390 + $0x10] sm:$0xf]
      %v394 = vld [vmem:[%s390 + $0x18] sm:$0xf]
      %v395 = vld [vmem:[%s390 + $0x20] sm:$0xf]
      %v396 = vld [vmem:[%s390 + $0x28] sm:$0xf]
      %v397 = vld [vmem:[%s390 + $0x30] sm:$0xf]
      %v398 = vld [vmem:[%s390 + $0x38] sm:$0xf]
      %v399 = vld [vmem:[%s1 + $0x8] sm:$0xf]
      %v400 = vld [vmem:[%s1 + $0xc] sm:$0xf]
      %v409 = vunpack.c.l.b16 %v391
      %v410 = vunpack.c.l.b16 %v392
      %v411 = vunpack.c.l.b16 %v393
      %v412 = vunpack.c.l.b16 %v394
      %v413 = vunpack.c.l.b16 %v395
      %v414 = vunpack.c.l.b16 %v396
      %v415 = vunpack.c.l.b16 %v397
      %v416 = vunpack.c.l.b16 %v398
      %v417 = vpack.c.b16 %v410, %v409
      %v418 = vpack.c.b16 %v412, %v411
      %v419 = vpack.c.b16 %v414, %v413
      %v420 = vpack.c.b16 %v416, %v415
      %v423 = vunpack.c.l.b16 %v399
      %v424 = vunpack.c.l.b16 %v400
      %v425 = vpack.c.b16 %v424, %v423
      %v428 = vsel %vm304, %v417, 0
      %v431 = vsel %vm304, %v418, 0
      %v434 = vsel %vm304, %v419, 0
      %v437 = vsel %vm304, %v420, 0
      %439 = vmatprep.subr.bf16.mxu0 0
      %440 = vmatpush1.bf16.msra.mxu0 %v425
      %441 = vmatprep.subr.bf16.mxu0 0
      %442 = vmatpush1.bf16.msra.mxu0 0
      %443 = vmatprep.subr.bf16.mxu0 0
      %444 = vmatpush1.bf16.msra.mxu0 0
      %445 = vmatprep.subr.bf16.mxu0 0
      %446 = vmatpush1.bf16.msra.mxu0 0
      %447 = vmatprep.subr.bf16.mxu0 0
      %448 = vmatpush1.bf16.msra.mxu0 0
      %449 = vmatprep.subr.bf16.mxu0 0
      %450 = vmatpush1.bf16.msra.mxu0 0
      %451 = vmatprep.subr.bf16.mxu0 0
      %452 = vmatpush1.bf16.msra.mxu0 0
      %453 = vmatprep.subr.bf16.mxu0 0
      %454 = vmatpush1.bf16.msra.mxu0 0
      %455 = vmatprep.subr.bf16.mxu0 0
      %456 = vmatpush1.bf16.msra.mxu0 0
      %457 = vmatprep.subr.bf16.mxu0 0
      %458 = vmatpush1.bf16.msra.mxu0 0
      %459 = vmatprep.subr.bf16.mxu0 0
      %460 = vmatpush1.bf16.msra.mxu0 0
      %461 = vmatprep.subr.bf16.mxu0 0
      %462 = vmatpush1.bf16.msra.mxu0 0
      %463 = vmatprep.subr.bf16.mxu0 0
      %464 = vmatpush1.bf16.msra.mxu0 0
      %465 = vmatprep.subr.bf16.mxu0 0
      %466 = vmatpush1.bf16.msra.mxu0 0
      %467 = vmatprep.subr.bf16.mxu0 0
      %468 = vmatpush1.bf16.msra.mxu0 0
      %469 = vmatprep.subr.bf16.mxu0 0
      %470 = vmatpush1.bf16.msra.mxu0 0
      %471 = vmatprep.mubr.bf16.mxu0 0
      %472 = vmatmul.mubr.bf16.gmra.mrb[0].mxu0 %v428
      %v473 = vpop.f32.mrb[0].mxu0
      %v474 = vadd.f32 0.0, %v473
      %v475 = vpop.f32.mrb[0].mxu0
      %v476 = vpop.f32.mrb[0].mxu0
      %v477 = vadd.f32 0.0, %v476
      %v478 = vpop.f32.mrb[0].mxu0
      %479 = vmatprep.mubr.bf16.mxu0 0
      %480 = vmatmul.mubr.bf16.gmra.mrb[0].mxu0 %v431
      %v481 = vpop.f32.mrb[0].mxu0
      %v482 = vadd.f32 0.0, %v481
      %v483 = vpop.f32.mrb[0].mxu0
      %v484 = vpop.f32.mrb[0].mxu0
      %v485 = vadd.f32 0.0, %v484
      %v486 = vpop.f32.mrb[0].mxu0
      %487 = vmatprep.mubr.bf16.mxu0 0
      %488 = vmatmul.mubr.bf16.gmra.mrb[0].mxu0 %v434
      %v489 = vpop.f32.mrb[0].mxu0
      %v490 = vadd.f32 0.0, %v489
      %v491 = vpop.f32.mrb[0].mxu0
      %v492 = vpop.f32.mrb[0].mxu0
      %v493 = vadd.f32 0.0, %v492
      %v494 = vpop.f32.mrb[0].mxu0
      %495 = vmatprep.mubr.bf16.mxu0 0
      %496 = vmatmul.mubr.bf16.gmra.mrb[0].mxu0 %v437
      %v497 = vpop.f32.mrb[0].mxu0
      %v498 = vadd.f32 0.0, %v497
      %v499 = vpop.f32.mrb[0].mxu0
      %v500 = vpop.f32.mrb[0].mxu0
      %v501 = vadd.f32 0.0, %v500
      %v502 = vpop.f32.mrb[0].mxu0
      %503 = vdwg.mxu0
      %v504 = vld [vmem:[#allocation2] sm:$0xff]
      %v505 = vld [vmem:[#allocation2 + $0x8] sm:$0xff]
      %v506 = vld [vmem:[#allocation2 + $0x10] sm:$0xff]
      %v507 = vld [vmem:[#allocation2 + $0x18] sm:$0xff]
      %v508 = vld [vmem:[#allocation2 + $0x20] sm:$0xff]
      %v509 = vld [vmem:[#allocation2 + $0x28] sm:$0xff]
      %v510 = vld [vmem:[#allocation2 + $0x30] sm:$0xff]
      %v511 = vld [vmem:[#allocation2 + $0x38] sm:$0xff]
      %v512 = vadd.f32 %v504, %v474
      %v513 = vadd.f32 %v505, %v477
      %v514 = vadd.f32 %v506, %v482
      %v515 = vadd.f32 %v507, %v485
      %v516 = vadd.f32 %v508, %v490
      %v517 = vadd.f32 %v509, %v493
      %v518 = vadd.f32 %v510, %v498
      %v519 = vadd.f32 %v511, %v501
      %520 = vst [vmem:[#allocation2] sm:$0xff] %v512
      %521 = vst [vmem:[#allocation2 + $0x8] sm:$0xff] %v513
      %522 = vst [vmem:[#allocation2 + $0x10] sm:$0xff] %v514
      %523 = vst [vmem:[#allocation2 + $0x18] sm:$0xff] %v515
      %524 = vst [vmem:[#allocation2 + $0x20] sm:$0xff] %v516
      %525 = vst [vmem:[#allocation2 + $0x28] sm:$0xff] %v517
      %526 = vst [vmem:[#allocation2 + $0x30] sm:$0xff] %v518
      %527 = vst [vmem:[#allocation2 + $0x38] sm:$0xff] %v519
      %v528 = vld [vmem:[%s254] sm:$0xf]
      %v529 = vld [vmem:[%s254 + $0x4] sm:$0x1]
      %v530 = vld [vmem:[%s254 + $0x8] sm:$0xf]
      %v531 = vld [vmem:[%s254 + $0xc] sm:$0x1]
      %v532 = vld [vmem:[%s254 + $0x10] sm:$0xf]
      %v533 = vld [vmem:[%s254 + $0x14] sm:$0x1]
      %v534 = vld [vmem:[%s254 + $0x18] sm:$0xf]
      %v535 = vld [vmem:[%s254 + $0x1c] sm:$0x1]
      %v536 = vld [vmem:[%s254 + $0x20] sm:$0xf]
      %v537 = vld [vmem:[%s254 + $0x24] sm:$0x1]
      %v538 = vld [vmem:[%s254 + $0x28] sm:$0xf]
      %v539 = vld [vmem:[%s254 + $0x2c] sm:$0x1]
      %v540 = vld [vmem:[%s254 + $0x30] sm:$0xf]
      %v541 = vld [vmem:[%s254 + $0x34] sm:$0x1]
      %v542 = vld [vmem:[%s254 + $0x38] sm:$0xf]
      %v543 = vld [vmem:[%s254 + $0x3c] sm:$0x1]
      %vm544 = vsmask.f32 3328
      %vm545 = vsmask.f32 7440
      %vm546 = vmor %vm544, %vm545
      %v548 = vshrl.u32 %v528, 16
      %v550 = vrot.slane %v548, 4
      %v551 = vshll.u32 %v528, 16
      %v553 = vrot.slane %v551, 5
      %v554 = vor.u32 %v550, %v553
      %v555 = vrot.slane %v554, 4
      %v557 = vshll.u32 %v529, 16
      %v559 = vrot.slane %v557, 5
      %v560 = vsel %vm546, %v555, %v559
      %v562 = vshrl.u32 %v530, 16
      %v564 = vrot.slane %v562, 4
      %v565 = vshll.u32 %v530, 16
      %v567 = vrot.slane %v565, 5
      %v568 = vor.u32 %v564, %v567
      %v569 = vrot.slane %v568, 4
      %v571 = vshll.u32 %v531, 16
      %v573 = vrot.slane %v571, 5
      %v574 = vsel %vm546, %v569, %v573
      %v576 = vshrl.u32 %v532, 16
      %v578 = vrot.slane %v576, 4
      %v579 = vshll.u32 %v532, 16
      %v581 = vrot.slane %v579, 5
      %v582 = vor.u32 %v578, %v581
      %v583 = vrot.slane %v582, 4
      %v585 = vshll.u32 %v533, 16
      %v587 = vrot.slane %v585, 5
      %v588 = vsel %vm546, %v583, %v587
      %v590 = vshrl.u32 %v534, 16
      %v592 = vrot.slane %v590, 4
      %v593 = vshll.u32 %v534, 16
      %v595 = vrot.slane %v593, 5
      %v596 = vor.u32 %v592, %v595
      %v597 = vrot.slane %v596, 4
      %v599 = vshll.u32 %v535, 16
      %v601 = vrot.slane %v599, 5
      %v602 = vsel %vm546, %v597, %v601
      %v604 = vshrl.u32 %v536, 16
      %v606 = vrot.slane %v604, 4
      %v607 = vshll.u32 %v536, 16
      %v609 = vrot.slane %v607, 5
      %v610 = vor.u32 %v606, %v609
      %v611 = vrot.slane %v610, 4
      %v613 = vshll.u32 %v537, 16
      %v615 = vrot.slane %v613, 5
      %v616 = vsel %vm546, %v611, %v615
      %v618 = vshrl.u32 %v538, 16
      %v620 = vrot.slane %v618, 4
      %v621 = vshll.u32 %v538, 16
      %v623 = vrot.slane %v621, 5
      %v624 = vor.u32 %v620, %v623
      %v625 = vrot.slane %v624, 4
      %v627 = vshll.u32 %v539, 16
      %v629 = vrot.slane %v627, 5
      %v630 = vsel %vm546, %v625, %v629
      %v632 = vshrl.u32 %v540, 16
      %v634 = vrot.slane %v632, 4
      %v635 = vshll.u32 %v540, 16
      %v637 = vrot.slane %v635, 5
      %v638 = vor.u32 %v634, %v637
      %v639 = vrot.slane %v638, 4
      %v641 = vshll.u32 %v541, 16
      %v643 = vrot.slane %v641, 5
      %v644 = vsel %vm546, %v639, %v643
      %v646 = vshrl.u32 %v542, 16
      %v648 = vrot.slane %v646, 4
      %v649 = vshll.u32 %v542, 16
      %v651 = vrot.slane %v649, 5
      %v652 = vor.u32 %v648, %v651
      %v653 = vrot.slane %v652, 4
      %v655 = vshll.u32 %v543, 16
      %v657 = vrot.slane %v655, 5
      %v658 = vsel %vm546, %v653, %v657
      %v659 = vld [vmem:[%s1 + $0x10] sm:$0xf]
      %v660 = vld [vmem:[%s1 + $0x14] sm:$0xf]
      %v661 = vunpack.c.l.b16 %v560
      %v662 = vunpack.c.l.b16 %v574
      %v663 = vunpack.c.l.b16 %v588
      %v664 = vunpack.c.l.b16 %v602
      %v665 = vunpack.c.l.b16 %v616
      %v666 = vunpack.c.l.b16 %v630
      %v667 = vunpack.c.l.b16 %v644
      %v668 = vunpack.c.l.b16 %v658
      %v669 = vpack.c.b16 %v662, %v661
      %v670 = vpack.c.b16 %v664, %v663
      %v671 = vpack.c.b16 %v666, %v665
      %v672 = vpack.c.b16 %v668, %v667
      %v675 = vunpack.c.l.b16 %v659
      %v676 = vunpack.c.l.b16 %v660
      %v677 = vpack.c.b16 %v676, %v675
      %v680 = vsel %vm304, %v669, 0
      %v683 = vsel %vm304, %v670, 0
      %v686 = vsel %vm304, %v671, 0
      %v689 = vsel %vm304, %v672, 0
      %691 = vmatprep.subr.bf16.mxu0 0
      %692 = vmatpush1.bf16.msra.mxu0 %v677
      %693 = vmatprep.subr.bf16.mxu0 0
      %694 = vmatpush1.bf16.msra.mxu0 0
      %695 = vmatprep.subr.bf16.mxu0 0
      %696 = vmatpush1.bf16.msra.mxu0 0
      %697 = vmatprep.subr.bf16.mxu0 0
      %698 = vmatpush1.bf16.msra.mxu0 0
      %699 = vmatprep.subr.bf16.mxu0 0
      %700 = vmatpush1.bf16.msra.mxu0 0
      %701 = vmatprep.subr.bf16.mxu0 0
      %702 = vmatpush1.bf16.msra.mxu0 0
      %703 = vmatprep.subr.bf16.mxu0 0
      %704 = vmatpush1.bf16.msra.mxu0 0
      %705 = vmatprep.subr.bf16.mxu0 0
      %706 = vmatpush1.bf16.msra.mxu0 0
      %707 = vmatprep.subr.bf16.mxu0 0
      %708 = vmatpush1.bf16.msra.mxu0 0
      %709 = vmatprep.subr.bf16.mxu0 0
      %710 = vmatpush1.bf16.msra.mxu0 0
      %711 = vmatprep.subr.bf16.mxu0 0
      %712 = vmatpush1.bf16.msra.mxu0 0
      %713 = vmatprep.subr.bf16.mxu0 0
      %714 = vmatpush1.bf16.msra.mxu0 0
      %715 = vmatprep.subr.bf16.mxu0 0
      %716 = vmatpush1.bf16.msra.mxu0 0
      %717 = vmatprep.subr.bf16.mxu0 0
      %718 = vmatpush1.bf16.msra.mxu0 0
      %719 = vmatprep.subr.bf16.mxu0 0
      %720 = vmatpush1.bf16.msra.mxu0 0
      %721 = vmatprep.subr.bf16.mxu0 0
      %722 = vmatpush1.bf16.msra.mxu0 0
      %723 = vmatprep.mubr.bf16.mxu0 0
      %724 = vmatmul.mubr.bf16.gmra.mrb[0].mxu0 %v680
      %v725 = vpop.f32.mrb[0].mxu0
      %v726 = vadd.f32 0.0, %v725
      %v727 = vpop.f32.mrb[0].mxu0
      %v728 = vpop.f32.mrb[0].mxu0
      %v729 = vadd.f32 0.0, %v728
      %v730 = vpop.f32.mrb[0].mxu0
      %731 = vmatprep.mubr.bf16.mxu0 0
      %732 = vmatmul.mubr.bf16.gmra.mrb[0].mxu0 %v683
      %v733 = vpop.f32.mrb[0].mxu0
      %v734 = vadd.f32 0.0, %v733
      %v735 = vpop.f32.mrb[0].mxu0
      %v736 = vpop.f32.mrb[0].mxu0
      %v737 = vadd.f32 0.0, %v736
      %v738 = vpop.f32.mrb[0].mxu0
      %739 = vmatprep.mubr.bf16.mxu0 0
      %740 = vmatmul.mubr.bf16.gmra.mrb[0].mxu0 %v686
      %v741 = vpop.f32.mrb[0].mxu0
      %v742 = vadd.f32 0.0, %v741
      %v743 = vpop.f32.mrb[0].mxu0
      %v744 = vpop.f32.mrb[0].mxu0
      %v745 = vadd.f32 0.0, %v744
      %v746 = vpop.f32.mrb[0].mxu0
      %747 = vmatprep.mubr.bf16.mxu0 0
      %748 = vmatmul.mubr.bf16.gmra.mrb[0].mxu0 %v689
      %v749 = vpop.f32.mrb[0].mxu0
      %v750 = vadd.f32 0.0, %v749
      %v751 = vpop.f32.mrb[0].mxu0
      %v752 = vpop.f32.mrb[0].mxu0
      %v753 = vadd.f32 0.0, %v752
      %v754 = vpop.f32.mrb[0].mxu0
      %755 = vdwg.mxu0
      %v756 = vld [vmem:[#allocation2] sm:$0xff]
      %v757 = vld [vmem:[#allocation2 + $0x8] sm:$0xff]
      %v758 = vld [vmem:[#allocation2 + $0x10] sm:$0xff]
      %v759 = vld [vmem:[#allocation2 + $0x18] sm:$0xff]
      %v760 = vld [vmem:[#allocation2 + $0x20] sm:$0xff]
      %v761 = vld [vmem:[#allocation2 + $0x28] sm:$0xff]
      %v762 = vld [vmem:[#allocation2 + $0x30] sm:$0xff]
      %v763 = vld [vmem:[#allocation2 + $0x38] sm:$0xff]
      %v764 = vadd.f32 %v756, %v726
      %v765 = vadd.f32 %v757, %v729
      %v766 = vadd.f32 %v758, %v734
      %v767 = vadd.f32 %v759, %v737
      %v768 = vadd.f32 %v760, %v742
      %v769 = vadd.f32 %v761, %v745
      %v770 = vadd.f32 %v762, %v750
      %v771 = vadd.f32 %v763, %v753
      %772 = vst [vmem:[#allocation2] sm:$0xff] %v764
      %773 = vst [vmem:[#allocation2 + $0x8] sm:$0xff] %v765
      %774 = vst [vmem:[#allocation2 + $0x10] sm:$0xff] %v766
      %775 = vst [vmem:[#allocation2 + $0x18] sm:$0xff] %v767
      %776 = vst [vmem:[#allocation2 + $0x20] sm:$0xff] %v768
      %777 = vst [vmem:[#allocation2 + $0x28] sm:$0xff] %v769
      %778 = vst [vmem:[#allocation2 + $0x30] sm:$0xff] %v770
      %779 = vst [vmem:[#allocation2 + $0x38] sm:$0xff] %v771
      %s780 = scalar_lea.vmem %s254, 144
      %v781 = vld [vmem:[%s780] sm:$0xf]
      %v782 = vld [vmem:[%s780 + $0x8] sm:$0xf]
      %v783 = vld [vmem:[%s780 + $0x10] sm:$0xf]
      %v784 = vld [vmem:[%s780 + $0x18] sm:$0xf]
      %v785 = vld [vmem:[%s780 + $0x20] sm:$0xf]
      %v786 = vld [vmem:[%s780 + $0x28] sm:$0xf]
      %v787 = vld [vmem:[%s780 + $0x30] sm:$0xf]
      %v788 = vld [vmem:[%s780 + $0x38] sm:$0xf]
      %v789 = vld [vmem:[%s1 + $0x18] sm:$0xf]
      %v790 = vld [vmem:[%s1 + $0x1c] sm:$0xf]
      %v799 = vunpack.c.l.b16 %v781
      %v800 = vunpack.c.l.b16 %v782
      %v801 = vunpack.c.l.b16 %v783
      %v802 = vunpack.c.l.b16 %v784
      %v803 = vunpack.c.l.b16 %v785
      %v804 = vunpack.c.l.b16 %v786
      %v805 = vunpack.c.l.b16 %v787
      %v806 = vunpack.c.l.b16 %v788
      %v807 = vpack.c.b16 %v800, %v799
      %v808 = vpack.c.b16 %v802, %v801
      %v809 = vpack.c.b16 %v804, %v803
      %v810 = vpack.c.b16 %v806, %v805
      %v813 = vunpack.c.l.b16 %v789
      %v814 = vunpack.c.l.b16 %v790
      %v815 = vpack.c.b16 %v814, %v813
      %v818 = vsel %vm304, %v807, 0
      %v821 = vsel %vm304, %v808, 0
      %v824 = vsel %vm304, %v809, 0
      %v827 = vsel %vm304, %v810, 0
      %829 = vmatprep.subr.bf16.mxu0 0
      %830 = vmatpush1.bf16.msra.mxu0 %v815
      %831 = vmatprep.subr.bf16.mxu0 0
      %832 = vmatpush1.bf16.msra.mxu0 0
      %833 = vmatprep.subr.bf16.mxu0 0
      %834 = vmatpush1.bf16.msra.mxu0 0
      %835 = vmatprep.subr.bf16.mxu0 0
      %836 = vmatpush1.bf16.msra.mxu0 0
      %837 = vmatprep.subr.bf16.mxu0 0
      %838 = vmatpush1.bf16.msra.mxu0 0
      %839 = vmatprep.subr.bf16.mxu0 0
      %840 = vmatpush1.bf16.msra.mxu0 0
      %841 = vmatprep.subr.bf16.mxu0 0
      %842 = vmatpush1.bf16.msra.mxu0 0
      %843 = vmatprep.subr.bf16.mxu0 0
      %844 = vmatpush1.bf16.msra.mxu0 0
      %845 = vmatprep.subr.bf16.mxu0 0
      %846 = vmatpush1.bf16.msra.mxu0 0
      %847 = vmatprep.subr.bf16.mxu0 0
      %848 = vmatpush1.bf16.msra.mxu0 0
      %849 = vmatprep.subr.bf16.mxu0 0
      %850 = vmatpush1.bf16.msra.mxu0 0
      %851 = vmatprep.subr.bf16.mxu0 0
      %852 = vmatpush1.bf16.msra.mxu0 0
      %853 = vmatprep.subr.bf16.mxu0 0
      %854 = vmatpush1.bf16.msra.mxu0 0
      %855 = vmatprep.subr.bf16.mxu0 0
      %856 = vmatpush1.bf16.msra.mxu0 0
      %857 = vmatprep.subr.bf16.mxu0 0
      %858 = vmatpush1.bf16.msra.mxu0 0
      %859 = vmatprep.subr.bf16.mxu0 0
      %860 = vmatpush1.bf16.msra.mxu0 0
      %861 = vmatprep.mubr.bf16.mxu0 0
      %862 = vmatmul.mubr.bf16.gmra.mrb[0].mxu0 %v818
      %v863 = vpop.f32.mrb[0].mxu0
      %v864 = vadd.f32 0.0, %v863
      %v865 = vpop.f32.mrb[0].mxu0
      %v866 = vpop.f32.mrb[0].mxu0
      %v867 = vadd.f32 0.0, %v866
      %v868 = vpop.f32.mrb[0].mxu0
      %869 = vmatprep.mubr.bf16.mxu0 0
      %870 = vmatmul.mubr.bf16.gmra.mrb[0].mxu0 %v821
      %v871 = vpop.f32.mrb[0].mxu0
      %v872 = vadd.f32 0.0, %v871
      %v873 = vpop.f32.mrb[0].mxu0
      %v874 = vpop.f32.mrb[0].mxu0
      %v875 = vadd.f32 0.0, %v874
      %v876 = vpop.f32.mrb[0].mxu0
      %877 = vmatprep.mubr.bf16.mxu0 0
      %878 = vmatmul.mubr.bf16.gmra.mrb[0].mxu0 %v824
      %v879 = vpop.f32.mrb[0].mxu0
      %v880 = vadd.f32 0.0, %v879
      %v881 = vpop.f32.mrb[0].mxu0
      %v882 = vpop.f32.mrb[0].mxu0
      %v883 = vadd.f32 0.0, %v882
      %v884 = vpop.f32.mrb[0].mxu0
      %885 = vmatprep.mubr.bf16.mxu0 0
      %886 = vmatmul.mubr.bf16.gmra.mrb[0].mxu0 %v827
      %v887 = vpop.f32.mrb[0].mxu0
      %v888 = vadd.f32 0.0, %v887
      %v889 = vpop.f32.mrb[0].mxu0
      %v890 = vpop.f32.mrb[0].mxu0
      %v891 = vadd.f32 0.0, %v890
      %v892 = vpop.f32.mrb[0].mxu0
      %893 = vdwg.mxu0
      %v894 = vld [vmem:[#allocation2] sm:$0xff]
      %v895 = vld [vmem:[#allocation2 + $0x8] sm:$0xff]
      %v896 = vld [vmem:[#allocation2 + $0x10] sm:$0xff]
      %v897 = vld [vmem:[#allocation2 + $0x18] sm:$0xff]
      %v898 = vld [vmem:[#allocation2 + $0x20] sm:$0xff]
      %v899 = vld [vmem:[#allocation2 + $0x28] sm:$0xff]
      %v900 = vld [vmem:[#allocation2 + $0x30] sm:$0xff]
      %v901 = vld [vmem:[#allocation2 + $0x38] sm:$0xff]
      %v902 = vadd.f32 %v894, %v864
      %v903 = vadd.f32 %v895, %v867
      %v904 = vadd.f32 %v896, %v872
      %v905 = vadd.f32 %v897, %v875
      %v906 = vadd.f32 %v898, %v880
      %v907 = vadd.f32 %v899, %v883
      %v908 = vadd.f32 %v900, %v888
      %v909 = vadd.f32 %v901, %v891
      %910 = vst [vmem:[#allocation2] sm:$0xff] %v902
      %911 = vst [vmem:[#allocation2 + $0x8] sm:$0xff] %v903
      %912 = vst [vmem:[#allocation2 + $0x10] sm:$0xff] %v904
      %913 = vst [vmem:[#allocation2 + $0x18] sm:$0xff] %v905
      %914 = vst [vmem:[#allocation2 + $0x20] sm:$0xff] %v906
      %915 = vst [vmem:[#allocation2 + $0x28] sm:$0xff] %v907
      %916 = vst [vmem:[#allocation2 + $0x30] sm:$0xff] %v908
      %917 = vst [vmem:[#allocation2 + $0x38] sm:$0xff] %v909
      %s918 = scalar_lea.vmem %s254, 216
      %v919 = vld [vmem:[%s918] sm:$0xf]
      %v920 = vld [vmem:[%s918 + $0x8] sm:$0xf]
      %v921 = vld [vmem:[%s918 + $0x10] sm:$0xf]
      %v922 = vld [vmem:[%s918 + $0x18] sm:$0xf]
      %v923 = vld [vmem:[%s918 + $0x20] sm:$0xf]
      %v924 = vld [vmem:[%s918 + $0x28] sm:$0xf]
      %v925 = vld [vmem:[%s918 + $0x30] sm:$0xf]
      %v926 = vld [vmem:[%s918 + $0x38] sm:$0xf]
      %v927 = vld [vmem:[%s1 + $0x20] sm:$0xf]
      %v928 = vld [vmem:[%s1 + $0x24] sm:$0xf]
      %v937 = vunpack.c.l.b16 %v919
      %v938 = vunpack.c.l.b16 %v920
      %v939 = vunpack.c.l.b16 %v921
      %v940 = vunpack.c.l.b16 %v922
      %v941 = vunpack.c.l.b16 %v923
      %v942 = vunpack.c.l.b16 %v924
      %v943 = vunpack.c.l.b16 %v925
      %v944 = vunpack.c.l.b16 %v926
      %v945 = vpack.c.b16 %v938, %v937
      %v946 = vpack.c.b16 %v940, %v939
      %v947 = vpack.c.b16 %v942, %v941
      %v948 = vpack.c.b16 %v944, %v943
      %v951 = vunpack.c.l.b16 %v927
      %v952 = vunpack.c.l.b16 %v928
      %v953 = vpack.c.b16 %v952, %v951
      %v956 = vsel %vm304, %v945, 0
      %v959 = vsel %vm304, %v946, 0
      %v962 = vsel %vm304, %v947, 0
      %v965 = vsel %vm304, %v948, 0
      %967 = vmatprep.subr.bf16.mxu0 0
      %968 = vmatpush1.bf16.msra.mxu0 %v953
      %969 = vmatprep.subr.bf16.mxu0 0
      %970 = vmatpush1.bf16.msra.mxu0 0
      %971 = vmatprep.subr.bf16.mxu0 0
      %972 = vmatpush1.bf16.msra.mxu0 0
      %973 = vmatprep.subr.bf16.mxu0 0
      %974 = vmatpush1.bf16.msra.mxu0 0
      %975 = vmatprep.subr.bf16.mxu0 0
      %976 = vmatpush1.bf16.msra.mxu0 0
      %977 = vmatprep.subr.bf16.mxu0 0
      %978 = vmatpush1.bf16.msra.mxu0 0
      %979 = vmatprep.subr.bf16.mxu0 0
      %980 = vmatpush1.bf16.msra.mxu0 0
      %981 = vmatprep.subr.bf16.mxu0 0
      %982 = vmatpush1.bf16.msra.mxu0 0
      %983 = vmatprep.subr.bf16.mxu0 0
      %984 = vmatpush1.bf16.msra.mxu0 0
      %985 = vmatprep.subr.bf16.mxu0 0
      %986 = vmatpush1.bf16.msra.mxu0 0
      %987 = vmatprep.subr.bf16.mxu0 0
      %988 = vmatpush1.bf16.msra.mxu0 0
      %989 = vmatprep.subr.bf16.mxu0 0
      %990 = vmatpush1.bf16.msra.mxu0 0
      %991 = vmatprep.subr.bf16.mxu0 0
      %992 = vmatpush1.bf16.msra.mxu0 0
      %993 = vmatprep.subr.bf16.mxu0 0
      %994 = vmatpush1.bf16.msra.mxu0 0
      %995 = vmatprep.subr.bf16.mxu0 0
      %996 = vmatpush1.bf16.msra.mxu0 0
      %997 = vmatprep.subr.bf16.mxu0 0
      %998 = vmatpush1.bf16.msra.mxu0 0
      %999 = vmatprep.mubr.bf16.mxu0 0
      %1000 = vmatmul.mubr.bf16.gmra.mrb[0].mxu0 %v956
      %v1001 = vpop.f32.mrb[0].mxu0
      %v1002 = vadd.f32 0.0, %v1001
      %v1003 = vpop.f32.mrb[0].mxu0
      %v1004 = vpop.f32.mrb[0].mxu0
      %v1005 = vadd.f32 0.0, %v1004
      %v1006 = vpop.f32.mrb[0].mxu0
      %1007 = vmatprep.mubr.bf16.mxu0 0
      %1008 = vmatmul.mubr.bf16.gmra.mrb[0].mxu0 %v959
      %v1009 = vpop.f32.mrb[0].mxu0
      %v1010 = vadd.f32 0.0, %v1009
      %v1011 = vpop.f32.mrb[0].mxu0
      %v1012 = vpop.f32.mrb[0].mxu0
      %v1013 = vadd.f32 0.0, %v1012
      %v1014 = vpop.f32.mrb[0].mxu0
      %1015 = vmatprep.mubr.bf16.mxu0 0
      %1016 = vmatmul.mubr.bf16.gmra.mrb[0].mxu0 %v962
      %v1017 = vpop.f32.mrb[0].mxu0
      %v1018 = vadd.f32 0.0, %v1017
      %v1019 = vpop.f32.mrb[0].mxu0
      %v1020 = vpop.f32.mrb[0].mxu0
      %v1021 = vadd.f32 0.0, %v1020
      %v1022 = vpop.f32.mrb[0].mxu0
      %1023 = vmatprep.mubr.bf16.mxu0 0
      %1024 = vmatmul.mubr.bf16.gmra.mrb[0].mxu0 %v965
      %v1025 = vpop.f32.mrb[0].mxu0
      %v1026 = vadd.f32 0.0, %v1025
      %v1027 = vpop.f32.mrb[0].mxu0
      %v1028 = vpop.f32.mrb[0].mxu0
      %v1029 = vadd.f32 0.0, %v1028
      %v1030 = vpop.f32.mrb[0].mxu0
      %1031 = vdwg.mxu0
      %v1032 = vld [vmem:[#allocation2] sm:$0xff]
      %v1033 = vld [vmem:[#allocation2 + $0x8] sm:$0xff]
      %v1034 = vld [vmem:[#allocation2 + $0x10] sm:$0xff]
      %v1035 = vld [vmem:[#allocation2 + $0x18] sm:$0xff]
      %v1036 = vld [vmem:[#allocation2 + $0x20] sm:$0xff]
      %v1037 = vld [vmem:[#allocation2 + $0x28] sm:$0xff]
      %v1038 = vld [vmem:[#allocation2 + $0x30] sm:$0xff]
      %v1039 = vld [vmem:[#allocation2 + $0x38] sm:$0xff]
      %v1040 = vadd.f32 %v1032, %v1002
      %v1041 = vadd.f32 %v1033, %v1005
      %v1042 = vadd.f32 %v1034, %v1010
      %v1043 = vadd.f32 %v1035, %v1013
      %v1044 = vadd.f32 %v1036, %v1018
      %v1045 = vadd.f32 %v1037, %v1021
      %v1046 = vadd.f32 %v1038, %v1026
      %v1047 = vadd.f32 %v1039, %v1029
      %1048 = vst [vmem:[#allocation2] sm:$0xff] %v1040
      %1049 = vst [vmem:[#allocation2 + $0x8] sm:$0xff] %v1041
      %1050 = vst [vmem:[#allocation2 + $0x10] sm:$0xff] %v1042
      %1051 = vst [vmem:[#allocation2 + $0x18] sm:$0xff] %v1043
      %1052 = vst [vmem:[#allocation2 + $0x20] sm:$0xff] %v1044
      %1053 = vst [vmem:[#allocation2 + $0x28] sm:$0xff] %v1045
      %1054 = vst [vmem:[#allocation2 + $0x30] sm:$0xff] %v1046
      %1055 = vst [vmem:[#allocation2 + $0x38] sm:$0xff] %v1047
      %v1056 = vld [vmem:[%s780] sm:$0xf]
      %v1057 = vld [vmem:[%s780 + $0x4] sm:$0x1]
      %v1058 = vld [vmem:[%s780 + $0x8] sm:$0xf]
      %v1059 = vld [vmem:[%s780 + $0xc] sm:$0x1]
      %v1060 = vld [vmem:[%s780 + $0x10] sm:$0xf]
      %v1061 = vld [vmem:[%s780 + $0x14] sm:$0x1]
      %v1062 = vld [vmem:[%s780 + $0x18] sm:$0xf]
      %v1063 = vld [vmem:[%s780 + $0x1c] sm:$0x1]
      %v1064 = vld [vmem:[%s780 + $0x20] sm:$0xf]
      %v1065 = vld [vmem:[%s780 + $0x24] sm:$0x1]
      %v1066 = vld [vmem:[%s780 + $0x28] sm:$0xf]
      %v1067 = vld [vmem:[%s780 + $0x2c] sm:$0x1]
      %v1068 = vld [vmem:[%s780 + $0x30] sm:$0xf]
      %v1069 = vld [vmem:[%s780 + $0x34] sm:$0x1]
      %v1070 = vld [vmem:[%s780 + $0x38] sm:$0xf]
      %v1071 = vld [vmem:[%s780 + $0x3c] sm:$0x1]
      %v1073 = vshrl.u32 %v1056, 16
      %v1075 = vrot.slane %v1073, 4
      %v1076 = vshll.u32 %v1056, 16
      %v1078 = vrot.slane %v1076, 5
      %v1079 = vor.u32 %v1075, %v1078
      %v1080 = vrot.slane %v1079, 4
      %v1082 = vshll.u32 %v1057, 16
      %v1084 = vrot.slane %v1082, 5
      %v1085 = vsel %vm546, %v1080, %v1084
      %v1087 = vshrl.u32 %v1058, 16
      %v1089 = vrot.slane %v1087, 4
      %v1090 = vshll.u32 %v1058, 16
      %v1092 = vrot.slane %v1090, 5
      %v1093 = vor.u32 %v1089, %v1092
      %v1094 = vrot.slane %v1093, 4
      %v1096 = vshll.u32 %v1059, 16
      %v1098 = vrot.slane %v1096, 5
      %v1099 = vsel %vm546, %v1094, %v1098
      %v1101 = vshrl.u32 %v1060, 16
      %v1103 = vrot.slane %v1101, 4
      %v1104 = vshll.u32 %v1060, 16
      %v1106 = vrot.slane %v1104, 5
      %v1107 = vor.u32 %v1103, %v1106
      %v1108 = vrot.slane %v1107, 4
      %v1110 = vshll.u32 %v1061, 16
      %v1112 = vrot.slane %v1110, 5
      %v1113 = vsel %vm546, %v1108, %v1112
      %v1115 = vshrl.u32 %v1062, 16
      %v1117 = vrot.slane %v1115, 4
      %v1118 = vshll.u32 %v1062, 16
      %v1120 = vrot.slane %v1118, 5
      %v1121 = vor.u32 %v1117, %v1120
      %v1122 = vrot.slane %v1121, 4
      %v1124 = vshll.u32 %v1063, 16
      %v1126 = vrot.slane %v1124, 5
      %v1127 = vsel %vm546, %v1122, %v1126
      %v1129 = vshrl.u32 %v1064, 16
      %v1131 = vrot.slane %v1129, 4
      %v1132 = vshll.u32 %v1064, 16
      %v1134 = vrot.slane %v1132, 5
      %v1135 = vor.u32 %v1131, %v1134
      %v1136 = vrot.slane %v1135, 4
      %v1138 = vshll.u32 %v1065, 16
      %v1140 = vrot.slane %v1138, 5
      %v1141 = vsel %vm546, %v1136, %v1140
      %v1143 = vshrl.u32 %v1066, 16
      %v1145 = vrot.slane %v1143, 4
      %v1146 = vshll.u32 %v1066, 16
      %v1148 = vrot.slane %v1146, 5
      %v1149 = vor.u32 %v1145, %v1148
      %v1150 = vrot.slane %v1149, 4
      %v1152 = vshll.u32 %v1067, 16
      %v1154 = vrot.slane %v1152, 5
      %v1155 = vsel %vm546, %v1150, %v1154
      %v1157 = vshrl.u32 %v1068, 16
      %v1159 = vrot.slane %v1157, 4
      %v1160 = vshll.u32 %v1068, 16
      %v1162 = vrot.slane %v1160, 5
      %v1163 = vor.u32 %v1159, %v1162
      %v1164 = vrot.slane %v1163, 4
      %v1166 = vshll.u32 %v1069, 16
      %v1168 = vrot.slane %v1166, 5
      %v1169 = vsel %vm546, %v1164, %v1168
      %v1171 = vshrl.u32 %v1070, 16
      %v1173 = vrot.slane %v1171, 4
      %v1174 = vshll.u32 %v1070, 16
      %v1176 = vrot.slane %v1174, 5
      %v1177 = vor.u32 %v1173, %v1176
      %v1178 = vrot.slane %v1177, 4
      %v1180 = vshll.u32 %v1071, 16
      %v1182 = vrot.slane %v1180, 5
      %v1183 = vsel %vm546, %v1178, %v1182
      %v1184 = vld [vmem:[%s1 + $0x28] sm:$0xf]
      %v1185 = vld [vmem:[%s1 + $0x2c] sm:$0xf]
      %v1186 = vunpack.c.l.b16 %v1085
      %v1187 = vunpack.c.l.b16 %v1099
      %v1188 = vunpack.c.l.b16 %v1113
      %v1189 = vunpack.c.l.b16 %v1127
      %v1190 = vunpack.c.l.b16 %v1141
      %v1191 = vunpack.c.l.b16 %v1155
      %v1192 = vunpack.c.l.b16 %v1169
      %v1193 = vunpack.c.l.b16 %v1183
      %v1194 = vpack.c.b16 %v1187, %v1186
      %v1195 = vpack.c.b16 %v1189, %v1188
      %v1196 = vpack.c.b16 %v1191, %v1190
      %v1197 = vpack.c.b16 %v1193, %v1192
      %v1200 = vunpack.c.l.b16 %v1184
      %v1201 = vunpack.c.l.b16 %v1185
      %v1202 = vpack.c.b16 %v1201, %v1200
      %v1205 = vsel %vm304, %v1194, 0
      %v1208 = vsel %vm304, %v1195, 0
      %v1211 = vsel %vm304, %v1196, 0
      %v1214 = vsel %vm304, %v1197, 0
      %1216 = vmatprep.subr.bf16.mxu0 0
      %1217 = vmatpush1.bf16.msra.mxu0 %v1202
      %1218 = vmatprep.subr.bf16.mxu0 0
      %1219 = vmatpush1.bf16.msra.mxu0 0
      %1220 = vmatprep.subr.bf16.mxu0 0
      %1221 = vmatpush1.bf16.msra.mxu0 0
      %1222 = vmatprep.subr.bf16.mxu0 0
      %1223 = vmatpush1.bf16.msra.mxu0 0
      %1224 = vmatprep.subr.bf16.mxu0 0
      %1225 = vmatpush1.bf16.msra.mxu0 0
      %1226 = vmatprep.subr.bf16.mxu0 0
      %1227 = vmatpush1.bf16.msra.mxu0 0
      %1228 = vmatprep.subr.bf16.mxu0 0
      %1229 = vmatpush1.bf16.msra.mxu0 0
      %1230 = vmatprep.subr.bf16.mxu0 0
      %1231 = vmatpush1.bf16.msra.mxu0 0
      %1232 = vmatprep.subr.bf16.mxu0 0
      %1233 = vmatpush1.bf16.msra.mxu0 0
      %1234 = vmatprep.subr.bf16.mxu0 0
      %1235 = vmatpush1.bf16.msra.mxu0 0
      %1236 = vmatprep.subr.bf16.mxu0 0
      %1237 = vmatpush1.bf16.msra.mxu0 0
      %1238 = vmatprep.subr.bf16.mxu0 0
      %1239 = vmatpush1.bf16.msra.mxu0 0
      %1240 = vmatprep.subr.bf16.mxu0 0
      %1241 = vmatpush1.bf16.msra.mxu0 0
      %1242 = vmatprep.subr.bf16.mxu0 0
      %1243 = vmatpush1.bf16.msra.mxu0 0
      %1244 = vmatprep.subr.bf16.mxu0 0
      %1245 = vmatpush1.bf16.msra.mxu0 0
      %1246 = vmatprep.subr.bf16.mxu0 0
      %1247 = vmatpush1.bf16.msra.mxu0 0
      %1248 = vmatprep.mubr.bf16.mxu0 0
      %1249 = vmatmul.mubr.bf16.gmra.mrb[0].mxu0 %v1205
      %v1250 = vpop.f32.mrb[0].mxu0
      %v1251 = vadd.f32 0.0, %v1250
      %v1252 = vpop.f32.mrb[0].mxu0
      %v1253 = vpop.f32.mrb[0].mxu0
      %v1254 = vadd.f32 0.0, %v1253
      %v1255 = vpop.f32.mrb[0].mxu0
      %1256 = vmatprep.mubr.bf16.mxu0 0
      %1257 = vmatmul.mubr.bf16.gmra.mrb[0].mxu0 %v1208
      %v1258 = vpop.f32.mrb[0].mxu0
      %v1259 = vadd.f32 0.0, %v1258
      %v1260 = vpop.f32.mrb[0].mxu0
      %v1261 = vpop.f32.mrb[0].mxu0
      %v1262 = vadd.f32 0.0, %v1261
      %v1263 = vpop.f32.mrb[0].mxu0
      %1264 = vmatprep.mubr.bf16.mxu0 0
      %1265 = vmatmul.mubr.bf16.gmra.mrb[0].mxu0 %v1211
      %v1266 = vpop.f32.mrb[0].mxu0
      %v1267 = vadd.f32 0.0, %v1266
      %v1268 = vpop.f32.mrb[0].mxu0
      %v1269 = vpop.f32.mrb[0].mxu0
      %v1270 = vadd.f32 0.0, %v1269
      %v1271 = vpop.f32.mrb[0].mxu0
      %1272 = vmatprep.mubr.bf16.mxu0 0
      %1273 = vmatmul.mubr.bf16.gmra.mrb[0].mxu0 %v1214
      %v1274 = vpop.f32.mrb[0].mxu0
      %v1275 = vadd.f32 0.0, %v1274
      %v1276 = vpop.f32.mrb[0].mxu0
      %v1277 = vpop.f32.mrb[0].mxu0
      %v1278 = vadd.f32 0.0, %v1277
      %v1279 = vpop.f32.mrb[0].mxu0
      %1280 = vdwg.mxu0
      %v1281 = vld [vmem:[#allocation2] sm:$0xff]
      %v1282 = vld [vmem:[#allocation2 + $0x8] sm:$0xff]
      %v1283 = vld [vmem:[#allocation2 + $0x10] sm:$0xff]
      %v1284 = vld [vmem:[#allocation2 + $0x18] sm:$0xff]
      %v1285 = vld [vmem:[#allocation2 + $0x20] sm:$0xff]
      %v1286 = vld [vmem:[#allocation2 + $0x28] sm:$0xff]
      %v1287 = vld [vmem:[#allocation2 + $0x30] sm:$0xff]
      %v1288 = vld [vmem:[#allocation2 + $0x38] sm:$0xff]
      %v1289 = vadd.f32 %v1281, %v1251
      %v1290 = vadd.f32 %v1282, %v1254
      %v1291 = vadd.f32 %v1283, %v1259
      %v1292 = vadd.f32 %v1284, %v1262
      %v1293 = vadd.f32 %v1285, %v1267
      %v1294 = vadd.f32 %v1286, %v1270
      %v1295 = vadd.f32 %v1287, %v1275
      %v1296 = vadd.f32 %v1288, %v1278
      %1297 = vst [vmem:[#allocation2] sm:$0xff] %v1289
      %1298 = vst [vmem:[#allocation2 + $0x8] sm:$0xff] %v1290
      %1299 = vst [vmem:[#allocation2 + $0x10] sm:$0xff] %v1291
      %1300 = vst [vmem:[#allocation2 + $0x18] sm:$0xff] %v1292
      %1301 = vst [vmem:[#allocation2 + $0x20] sm:$0xff] %v1293
      %1302 = vst [vmem:[#allocation2 + $0x28] sm:$0xff] %v1294
      %1303 = vst [vmem:[#allocation2 + $0x30] sm:$0xff] %v1295
      %1304 = vst [vmem:[#allocation2 + $0x38] sm:$0xff] %v1296
      %s1305 = scalar_lea.vmem %s254, 8
      %v1306 = vld [vmem:[%s1305] sm:$0xf]
      %v1307 = vld [vmem:[%s1305 + $0x8] sm:$0xf]
      %v1308 = vld [vmem:[%s1305 + $0x10] sm:$0xf]
      %v1309 = vld [vmem:[%s1305 + $0x18] sm:$0xf]
      %v1310 = vld [vmem:[%s1305 + $0x20] sm:$0xf]
      %v1311 = vld [vmem:[%s1305 + $0x28] sm:$0xf]
      %v1312 = vld [vmem:[%s1305 + $0x30] sm:$0xf]
      %v1313 = vld [vmem:[%s1305 + $0x38] sm:$0xf]
      %v1314 = vld [vmem:[%s1 + $0x30] sm:$0xf]
      %v1315 = vld [vmem:[%s1 + $0x34] sm:$0xf]
      %v1324 = vunpack.c.l.b16 %v1306
      %v1325 = vunpack.c.l.b16 %v1307
      %v1326 = vunpack.c.l.b16 %v1308
      %v1327 = vunpack.c.l.b16 %v1309
      %v1328 = vunpack.c.l.b16 %v1310
      %v1329 = vunpack.c.l.b16 %v1311
      %v1330 = vunpack.c.l.b16 %v1312
      %v1331 = vunpack.c.l.b16 %v1313
      %v1332 = vpack.c.b16 %v1325, %v1324
      %v1333 = vpack.c.b16 %v1327, %v1326
      %v1334 = vpack.c.b16 %v1329, %v1328
      %v1335 = vpack.c.b16 %v1331, %v1330
      %v1338 = vunpack.c.l.b16 %v1314
      %v1339 = vunpack.c.l.b16 %v1315
      %v1340 = vpack.c.b16 %v1339, %v1338
      %v1343 = vsel %vm304, %v1332, 0
      %v1346 = vsel %vm304, %v1333, 0
      %v1349 = vsel %vm304, %v1334, 0
      %v1352 = vsel %vm304, %v1335, 0
      %1354 = vmatprep.subr.bf16.mxu0 0
      %1355 = vmatpush1.bf16.msra.mxu0 %v1340
      %1356 = vmatprep.subr.bf16.mxu0 0
      %1357 = vmatpush1.bf16.msra.mxu0 0
      %1358 = vmatprep.subr.bf16.mxu0 0
      %1359 = vmatpush1.bf16.msra.mxu0 0
      %1360 = vmatprep.subr.bf16.mxu0 0
      %1361 = vmatpush1.bf16.msra.mxu0 0
      %1362 = vmatprep.subr.bf16.mxu0 0
      %1363 = vmatpush1.bf16.msra.mxu0 0
      %1364 = vmatprep.subr.bf16.mxu0 0
      %1365 = vmatpush1.bf16.msra.mxu0 0
      %1366 = vmatprep.subr.bf16.mxu0 0
      %1367 = vmatpush1.bf16.msra.mxu0 0
      %1368 = vmatprep.subr.bf16.mxu0 0
      %1369 = vmatpush1.bf16.msra.mxu0 0
      %1370 = vmatprep.subr.bf16.mxu0 0
      %1371 = vmatpush1.bf16.msra.mxu0 0
      %1372 = vmatprep.subr.bf16.mxu0 0
      %1373 = vmatpush1.bf16.msra.mxu0 0
      %1374 = vmatprep.subr.bf16.mxu0 0
      %1375 = vmatpush1.bf16.msra.mxu0 0
      %1376 = vmatprep.subr.bf16.mxu0 0
      %1377 = vmatpush1.bf16.msra.mxu0 0
      %1378 = vmatprep.subr.bf16.mxu0 0
      %1379 = vmatpush1.bf16.msra.mxu0 0
      %1380 = vmatprep.subr.bf16.mxu0 0
      %1381 = vmatpush1.bf16.msra.mxu0 0
      %1382 = vmatprep.subr.bf16.mxu0 0
      %1383 = vmatpush1.bf16.msra.mxu0 0
      %1384 = vmatprep.subr.bf16.mxu0 0
      %1385 = vmatpush1.bf16.msra.mxu0 0
      %1386 = vmatprep.mubr.bf16.mxu0 0
      %1387 = vmatmul.mubr.bf16.gmra.mrb[0].mxu0 %v1343
      %v1388 = vpop.f32.mrb[0].mxu0
      %v1389 = vadd.f32 0.0, %v1388
      %v1390 = vpop.f32.mrb[0].mxu0
      %v1391 = vpop.f32.mrb[0].mxu0
      %v1392 = vadd.f32 0.0, %v1391
      %v1393 = vpop.f32.mrb[0].mxu0
      %1394 = vmatprep.mubr.bf16.mxu0 0
      %1395 = vmatmul.mubr.bf16.gmra.mrb[0].mxu0 %v1346
      %v1396 = vpop.f32.mrb[0].mxu0
      %v1397 = vadd.f32 0.0, %v1396
      %v1398 = vpop.f32.mrb[0].mxu0
      %v1399 = vpop.f32.mrb[0].mxu0
      %v1400 = vadd.f32 0.0, %v1399
      %v1401 = vpop.f32.mrb[0].mxu0
      %1402 = vmatprep.mubr.bf16.mxu0 0
      %1403 = vmatmul.mubr.bf16.gmra.mrb[0].mxu0 %v1349
      %v1404 = vpop.f32.mrb[0].mxu0
      %v1405 = vadd.f32 0.0, %v1404
      %v1406 = vpop.f32.mrb[0].mxu0
      %v1407 = vpop.f32.mrb[0].mxu0
      %v1408 = vadd.f32 0.0, %v1407
      %v1409 = vpop.f32.mrb[0].mxu0
      %1410 = vmatprep.mubr.bf16.mxu0 0
      %1411 = vmatmul.mubr.bf16.gmra.mrb[0].mxu0 %v1352
      %v1412 = vpop.f32.mrb[0].mxu0
      %v1413 = vadd.f32 0.0, %v1412
      %v1414 = vpop.f32.mrb[0].mxu0
      %v1415 = vpop.f32.mrb[0].mxu0
      %v1416 = vadd.f32 0.0, %v1415
      %v1417 = vpop.f32.mrb[0].mxu0
      %1418 = vdwg.mxu0
      %v1419 = vld [vmem:[#allocation2] sm:$0xff]
      %v1420 = vld [vmem:[#allocation2 + $0x8] sm:$0xff]
      %v1421 = vld [vmem:[#allocation2 + $0x10] sm:$0xff]
      %v1422 = vld [vmem:[#allocation2 + $0x18] sm:$0xff]
      %v1423 = vld [vmem:[#allocation2 + $0x20] sm:$0xff]
      %v1424 = vld [vmem:[#allocation2 + $0x28] sm:$0xff]
      %v1425 = vld [vmem:[#allocation2 + $0x30] sm:$0xff]
      %v1426 = vld [vmem:[#allocation2 + $0x38] sm:$0xff]
      %v1427 = vadd.f32 %v1419, %v1389
      %v1428 = vadd.f32 %v1420, %v1392
      %v1429 = vadd.f32 %v1421, %v1397
      %v1430 = vadd.f32 %v1422, %v1400
      %v1431 = vadd.f32 %v1423, %v1405
      %v1432 = vadd.f32 %v1424, %v1408
      %v1433 = vadd.f32 %v1425, %v1413
      %v1434 = vadd.f32 %v1426, %v1416
      %1435 = vst [vmem:[#allocation2] sm:$0xff] %v1427
      %1436 = vst [vmem:[#allocation2 + $0x8] sm:$0xff] %v1428
      %1437 = vst [vmem:[#allocation2 + $0x10] sm:$0xff] %v1429
      %1438 = vst [vmem:[#allocation2 + $0x18] sm:$0xff] %v1430
      %1439 = vst [vmem:[#allocation2 + $0x20] sm:$0xff] %v1431
      %1440 = vst [vmem:[#allocation2 + $0x28] sm:$0xff] %v1432
      %1441 = vst [vmem:[#allocation2 + $0x30] sm:$0xff] %v1433
      %1442 = vst [vmem:[#allocation2 + $0x38] sm:$0xff] %v1434
      %s1443 = scalar_lea.vmem %s254, 80
      %v1444 = vld [vmem:[%s1443] sm:$0xf]
      %v1445 = vld [vmem:[%s1443 + $0x8] sm:$0xf]
      %v1446 = vld [vmem:[%s1443 + $0x10] sm:$0xf]
      %v1447 = vld [vmem:[%s1443 + $0x18] sm:$0xf]
      %v1448 = vld [vmem:[%s1443 + $0x20] sm:$0xf]
      %v1449 = vld [vmem:[%s1443 + $0x28] sm:$0xf]
      %v1450 = vld [vmem:[%s1443 + $0x30] sm:$0xf]
      %v1451 = vld [vmem:[%s1443 + $0x38] sm:$0xf]
      %v1452 = vld [vmem:[%s1 + $0x38] sm:$0xf]
      %v1453 = vld [vmem:[%s1 + $0x3c] sm:$0xf]
      %v1462 = vunpack.c.l.b16 %v1444
      %v1463 = vunpack.c.l.b16 %v1445
      %v1464 = vunpack.c.l.b16 %v1446
      %v1465 = vunpack.c.l.b16 %v1447
      %v1466 = vunpack.c.l.b16 %v1448
      %v1467 = vunpack.c.l.b16 %v1449
      %v1468 = vunpack.c.l.b16 %v1450
      %v1469 = vunpack.c.l.b16 %v1451
      %v1470 = vpack.c.b16 %v1463, %v1462
      %v1471 = vpack.c.b16 %v1465, %v1464
      %v1472 = vpack.c.b16 %v1467, %v1466
      %v1473 = vpack.c.b16 %v1469, %v1468
      %v1476 = vunpack.c.l.b16 %v1452
      %v1477 = vunpack.c.l.b16 %v1453
      %v1478 = vpack.c.b16 %v1477, %v1476
      %v1481 = vsel %vm304, %v1470, 0
      %v1484 = vsel %vm304, %v1471, 0
      %v1487 = vsel %vm304, %v1472, 0
      %v1490 = vsel %vm304, %v1473, 0
      %1492 = vmatprep.subr.bf16.mxu0 0
      %1493 = vmatpush1.bf16.msra.mxu0 %v1478
      %1494 = vmatprep.subr.bf16.mxu0 0
      %1495 = vmatpush1.bf16.msra.mxu0 0
      %1496 = vmatprep.subr.bf16.mxu0 0
      %1497 = vmatpush1.bf16.msra.mxu0 0
      %1498 = vmatprep.subr.bf16.mxu0 0
      %1499 = vmatpush1.bf16.msra.mxu0 0
      %1500 = vmatprep.subr.bf16.mxu0 0
      %1501 = vmatpush1.bf16.msra.mxu0 0
      %1502 = vmatprep.subr.bf16.mxu0 0
      %1503 = vmatpush1.bf16.msra.mxu0 0
      %1504 = vmatprep.subr.bf16.mxu0 0
      %1505 = vmatpush1.bf16.msra.mxu0 0
      %1506 = vmatprep.subr.bf16.mxu0 0
      %1507 = vmatpush1.bf16.msra.mxu0 0
      %1508 = vmatprep.subr.bf16.mxu0 0
      %1509 = vmatpush1.bf16.msra.mxu0 0
      %1510 = vmatprep.subr.bf16.mxu0 0
      %1511 = vmatpush1.bf16.msra.mxu0 0
      %1512 = vmatprep.subr.bf16.mxu0 0
      %1513 = vmatpush1.bf16.msra.mxu0 0
      %1514 = vmatprep.subr.bf16.mxu0 0
      %1515 = vmatpush1.bf16.msra.mxu0 0
      %1516 = vmatprep.subr.bf16.mxu0 0
      %1517 = vmatpush1.bf16.msra.mxu0 0
      %1518 = vmatprep.subr.bf16.mxu0 0
      %1519 = vmatpush1.bf16.msra.mxu0 0
      %1520 = vmatprep.subr.bf16.mxu0 0
      %1521 = vmatpush1.bf16.msra.mxu0 0
      %1522 = vmatprep.subr.bf16.mxu0 0
      %1523 = vmatpush1.bf16.msra.mxu0 0
      %1524 = vmatprep.mubr.bf16.mxu0 0
      %1525 = vmatmul.mubr.bf16.gmra.mrb[0].mxu0 %v1481
      %v1526 = vpop.f32.mrb[0].mxu0
      %v1527 = vadd.f32 0.0, %v1526
      %v1528 = vpop.f32.mrb[0].mxu0
      %v1529 = vpop.f32.mrb[0].mxu0
      %v1530 = vadd.f32 0.0, %v1529
      %v1531 = vpop.f32.mrb[0].mxu0
      %1532 = vmatprep.mubr.bf16.mxu0 0
      %1533 = vmatmul.mubr.bf16.gmra.mrb[0].mxu0 %v1484
      %v1534 = vpop.f32.mrb[0].mxu0
      %v1535 = vadd.f32 0.0, %v1534
      %v1536 = vpop.f32.mrb[0].mxu0
      %v1537 = vpop.f32.mrb[0].mxu0
      %v1538 = vadd.f32 0.0, %v1537
      %v1539 = vpop.f32.mrb[0].mxu0
      %1540 = vmatprep.mubr.bf16.mxu0 0
      %1541 = vmatmul.mubr.bf16.gmra.mrb[0].mxu0 %v1487
      %v1542 = vpop.f32.mrb[0].mxu0
      %v1543 = vadd.f32 0.0, %v1542
      %v1544 = vpop.f32.mrb[0].mxu0
      %v1545 = vpop.f32.mrb[0].mxu0
      %v1546 = vadd.f32 0.0, %v1545
      %v1547 = vpop.f32.mrb[0].mxu0
      %1548 = vmatprep.mubr.bf16.mxu0 0
      %1549 = vmatmul.mubr.bf16.gmra.mrb[0].mxu0 %v1490
      %v1550 = vpop.f32.mrb[0].mxu0
      %v1551 = vadd.f32 0.0, %v1550
      %v1552 = vpop.f32.mrb[0].mxu0
      %v1553 = vpop.f32.mrb[0].mxu0
      %v1554 = vadd.f32 0.0, %v1553
      %v1555 = vpop.f32.mrb[0].mxu0
      %1556 = vdwg.mxu0
      %v1557 = vld [vmem:[#allocation2] sm:$0xff]
      %v1558 = vld [vmem:[#allocation2 + $0x8] sm:$0xff]
      %v1559 = vld [vmem:[#allocation2 + $0x10] sm:$0xff]
      %v1560 = vld [vmem:[#allocation2 + $0x18] sm:$0xff]
      %v1561 = vld [vmem:[#allocation2 + $0x20] sm:$0xff]
      %v1562 = vld [vmem:[#allocation2 + $0x28] sm:$0xff]
      %v1563 = vld [vmem:[#allocation2 + $0x30] sm:$0xff]
      %v1564 = vld [vmem:[#allocation2 + $0x38] sm:$0xff]
      %v1565 = vadd.f32 %v1557, %v1527
      %v1566 = vadd.f32 %v1558, %v1530
      %v1567 = vadd.f32 %v1559, %v1535
      %v1568 = vadd.f32 %v1560, %v1538
      %v1569 = vadd.f32 %v1561, %v1543
      %v1570 = vadd.f32 %v1562, %v1546
      %v1571 = vadd.f32 %v1563, %v1551
      %v1572 = vadd.f32 %v1564, %v1554
      %1573 = vst [vmem:[#allocation2] sm:$0xff] %v1565
      %1574 = vst [vmem:[#allocation2 + $0x8] sm:$0xff] %v1566
      %1575 = vst [vmem:[#allocation2 + $0x10] sm:$0xff] %v1567
      %1576 = vst [vmem:[#allocation2 + $0x18] sm:$0xff] %v1568
      %1577 = vst [vmem:[#allocation2 + $0x20] sm:$0xff] %v1569
      %1578 = vst [vmem:[#allocation2 + $0x28] sm:$0xff] %v1570
      %1579 = vst [vmem:[#allocation2 + $0x30] sm:$0xff] %v1571
      %1580 = vst [vmem:[#allocation2 + $0x38] sm:$0xff] %v1572
      %v1581 = vld [vmem:[%s1305] sm:$0xf]
      %v1582 = vld [vmem:[%s1305 + $0x4] sm:$0x1]
      %v1583 = vld [vmem:[%s1305 + $0x8] sm:$0xf]
      %v1584 = vld [vmem:[%s1305 + $0xc] sm:$0x1]
      %v1585 = vld [vmem:[%s1305 + $0x10] sm:$0xf]
      %v1586 = vld [vmem:[%s1305 + $0x14] sm:$0x1]
      %v1587 = vld [vmem:[%s1305 + $0x18] sm:$0xf]
      %v1588 = vld [vmem:[%s1305 + $0x1c] sm:$0x1]
      %v1589 = vld [vmem:[%s1305 + $0x20] sm:$0xf]
      %v1590 = vld [vmem:[%s1305 + $0x24] sm:$0x1]
      %v1591 = vld [vmem:[%s1305 + $0x28] sm:$0xf]
      %v1592 = vld [vmem:[%s1305 + $0x2c] sm:$0x1]
      %v1593 = vld [vmem:[%s1305 + $0x30] sm:$0xf]
      %v1594 = vld [vmem:[%s1305 + $0x34] sm:$0x1]
      %v1595 = vld [vmem:[%s1305 + $0x38] sm:$0xf]
      %v1596 = vld [vmem:[%s1305 + $0x3c] sm:$0x1]
      %v1598 = vshrl.u32 %v1581, 16
      %v1600 = vrot.slane %v1598, 4
      %v1601 = vshll.u32 %v1581, 16
      %v1603 = vrot.slane %v1601, 5
      %v1604 = vor.u32 %v1600, %v1603
      %v1605 = vrot.slane %v1604, 4
      %v1607 = vshll.u32 %v1582, 16
      %v1609 = vrot.slane %v1607, 5
      %v1610 = vsel %vm546, %v1605, %v1609
      %v1612 = vshrl.u32 %v1583, 16
      %v1614 = vrot.slane %v1612, 4
      %v1615 = vshll.u32 %v1583, 16
      %v1617 = vrot.slane %v1615, 5
      %v1618 = vor.u32 %v1614, %v1617
      %v1619 = vrot.slane %v1618, 4
      %v1621 = vshll.u32 %v1584, 16
      %v1623 = vrot.slane %v1621, 5
      %v1624 = vsel %vm546, %v1619, %v1623
      %v1626 = vshrl.u32 %v1585, 16
      %v1628 = vrot.slane %v1626, 4
      %v1629 = vshll.u32 %v1585, 16
      %v1631 = vrot.slane %v1629, 5
      %v1632 = vor.u32 %v1628, %v1631
      %v1633 = vrot.slane %v1632, 4
      %v1635 = vshll.u32 %v1586, 16
      %v1637 = vrot.slane %v1635, 5
      %v1638 = vsel %vm546, %v1633, %v1637
      %v1640 = vshrl.u32 %v1587, 16
      %v1642 = vrot.slane %v1640, 4
      %v1643 = vshll.u32 %v1587, 16
      %v1645 = vrot.slane %v1643, 5
      %v1646 = vor.u32 %v1642, %v1645
      %v1647 = vrot.slane %v1646, 4
      %v1649 = vshll.u32 %v1588, 16
      %v1651 = vrot.slane %v1649, 5
      %v1652 = vsel %vm546, %v1647, %v1651
      %v1654 = vshrl.u32 %v1589, 16
      %v1656 = vrot.slane %v1654, 4
      %v1657 = vshll.u32 %v1589, 16
      %v1659 = vrot.slane %v1657, 5
      %v1660 = vor.u32 %v1656, %v1659
      %v1661 = vrot.slane %v1660, 4
      %v1663 = vshll.u32 %v1590, 16
      %v1665 = vrot.slane %v1663, 5
      %v1666 = vsel %vm546, %v1661, %v1665
      %v1668 = vshrl.u32 %v1591, 16
      %v1670 = vrot.slane %v1668, 4
      %v1671 = vshll.u32 %v1591, 16
      %v1673 = vrot.slane %v1671, 5
      %v1674 = vor.u32 %v1670, %v1673
      %v1675 = vrot.slane %v1674, 4
      %v1677 = vshll.u32 %v1592, 16
      %v1679 = vrot.slane %v1677, 5
      %v1680 = vsel %vm546, %v1675, %v1679
      %v1682 = vshrl.u32 %v1593, 16
      %v1684 = vrot.slane %v1682, 4
      %v1685 = vshll.u32 %v1593, 16
      %v1687 = vrot.slane %v1685, 5
      %v1688 = vor.u32 %v1684, %v1687
      %v1689 = vrot.slane %v1688, 4
      %v1691 = vshll.u32 %v1594, 16
      %v1693 = vrot.slane %v1691, 5
      %v1694 = vsel %vm546, %v1689, %v1693
      %v1696 = vshrl.u32 %v1595, 16
      %v1698 = vrot.slane %v1696, 4
      %v1699 = vshll.u32 %v1595, 16
      %v1701 = vrot.slane %v1699, 5
      %v1702 = vor.u32 %v1698, %v1701
      %v1703 = vrot.slane %v1702, 4
      %v1705 = vshll.u32 %v1596, 16
      %v1707 = vrot.slane %v1705, 5
      %v1708 = vsel %vm546, %v1703, %v1707
      %v1709 = vld [vmem:[%s1 + $0x40] sm:$0xf]
      %v1710 = vld [vmem:[%s1 + $0x44] sm:$0xf]
      %v1711 = vunpack.c.l.b16 %v1610
      %v1712 = vunpack.c.l.b16 %v1624
      %v1713 = vunpack.c.l.b16 %v1638
      %v1714 = vunpack.c.l.b16 %v1652
      %v1715 = vunpack.c.l.b16 %v1666
      %v1716 = vunpack.c.l.b16 %v1680
      %v1717 = vunpack.c.l.b16 %v1694
      %v1718 = vunpack.c.l.b16 %v1708
      %v1719 = vpack.c.b16 %v1712, %v1711
      %v1720 = vpack.c.b16 %v1714, %v1713
      %v1721 = vpack.c.b16 %v1716, %v1715
      %v1722 = vpack.c.b16 %v1718, %v1717
      %v1725 = vunpack.c.l.b16 %v1709
      %v1726 = vunpack.c.l.b16 %v1710
      %v1727 = vpack.c.b16 %v1726, %v1725
      %v1730 = vsel %vm304, %v1719, 0
      %v1733 = vsel %vm304, %v1720, 0
      %v1736 = vsel %vm304, %v1721, 0
      %v1739 = vsel %vm304, %v1722, 0
      %1741 = vmatprep.subr.bf16.mxu0 0
      %1742 = vmatpush1.bf16.msra.mxu0 %v1727
      %1743 = vmatprep.subr.bf16.mxu0 0
      %1744 = vmatpush1.bf16.msra.mxu0 0
      %1745 = vmatprep.subr.bf16.mxu0 0
      %1746 = vmatpush1.bf16.msra.mxu0 0
      %1747 = vmatprep.subr.bf16.mxu0 0
      %1748 = vmatpush1.bf16.msra.mxu0 0
      %1749 = vmatprep.subr.bf16.mxu0 0
      %1750 = vmatpush1.bf16.msra.mxu0 0
      %1751 = vmatprep.subr.bf16.mxu0 0
      %1752 = vmatpush1.bf16.msra.mxu0 0
      %1753 = vmatprep.subr.bf16.mxu0 0
      %1754 = vmatpush1.bf16.msra.mxu0 0
      %1755 = vmatprep.subr.bf16.mxu0 0
      %1756 = vmatpush1.bf16.msra.mxu0 0
      %1757 = vmatprep.subr.bf16.mxu0 0
      %1758 = vmatpush1.bf16.msra.mxu0 0
      %1759 = vmatprep.subr.bf16.mxu0 0
      %1760 = vmatpush1.bf16.msra.mxu0 0
      %1761 = vmatprep.subr.bf16.mxu0 0
      %1762 = vmatpush1.bf16.msra.mxu0 0
      %1763 = vmatprep.subr.bf16.mxu0 0
      %1764 = vmatpush1.bf16.msra.mxu0 0
      %1765 = vmatprep.subr.bf16.mxu0 0
      %1766 = vmatpush1.bf16.msra.mxu0 0
      %1767 = vmatprep.subr.bf16.mxu0 0
      %1768 = vmatpush1.bf16.msra.mxu0 0
      %1769 = vmatprep.subr.bf16.mxu0 0
      %1770 = vmatpush1.bf16.msra.mxu0 0
      %1771 = vmatprep.subr.bf16.mxu0 0
      %1772 = vmatpush1.bf16.msra.mxu0 0
      %1773 = vmatprep.mubr.bf16.mxu0 0
      %1774 = vmatmul.mubr.bf16.gmra.mrb[0].mxu0 %v1730
      %v1775 = vpop.f32.mrb[0].mxu0
      %v1776 = vadd.f32 0.0, %v1775
      %v1777 = vpop.f32.mrb[0].mxu0
      %v1778 = vpop.f32.mrb[0].mxu0
      %v1779 = vadd.f32 0.0, %v1778
      %v1780 = vpop.f32.mrb[0].mxu0
      %1781 = vmatprep.mubr.bf16.mxu0 0
      %1782 = vmatmul.mubr.bf16.gmra.mrb[0].mxu0 %v1733
      %v1783 = vpop.f32.mrb[0].mxu0
      %v1784 = vadd.f32 0.0, %v1783
      %v1785 = vpop.f32.mrb[0].mxu0
      %v1786 = vpop.f32.mrb[0].mxu0
      %v1787 = vadd.f32 0.0, %v1786
      %v1788 = vpop.f32.mrb[0].mxu0
      %1789 = vmatprep.mubr.bf16.mxu0 0
      %1790 = vmatmul.mubr.bf16.gmra.mrb[0].mxu0 %v1736
      %v1791 = vpop.f32.mrb[0].mxu0
      %v1792 = vadd.f32 0.0, %v1791
      %v1793 = vpop.f32.mrb[0].mxu0
      %v1794 = vpop.f32.mrb[0].mxu0
      %v1795 = vadd.f32 0.0, %v1794
      %v1796 = vpop.f32.mrb[0].mxu0
      %1797 = vmatprep.mubr.bf16.mxu0 0
      %1798 = vmatmul.mubr.bf16.gmra.mrb[0].mxu0 %v1739
      %v1799 = vpop.f32.mrb[0].mxu0
      %v1800 = vadd.f32 0.0, %v1799
      %v1801 = vpop.f32.mrb[0].mxu0
      %v1802 = vpop.f32.mrb[0].mxu0
      %v1803 = vadd.f32 0.0, %v1802
      %v1804 = vpop.f32.mrb[0].mxu0
      %1805 = vdwg.mxu0
      %v1806 = vld [vmem:[#allocation2] sm:$0xff]
      %v1807 = vld [vmem:[#allocation2 + $0x8] sm:$0xff]
      %v1808 = vld [vmem:[#allocation2 + $0x10] sm:$0xff]
      %v1809 = vld [vmem:[#allocation2 + $0x18] sm:$0xff]
      %v1810 = vld [vmem:[#allocation2 + $0x20] sm:$0xff]
      %v1811 = vld [vmem:[#allocation2 + $0x28] sm:$0xff]
      %v1812 = vld [vmem:[#allocation2 + $0x30] sm:$0xff]
      %v1813 = vld [vmem:[#allocation2 + $0x38] sm:$0xff]
      %v1814 = vadd.f32 %v1806, %v1776
      %v1815 = vadd.f32 %v1807, %v1779
      %v1816 = vadd.f32 %v1808, %v1784
      %v1817 = vadd.f32 %v1809, %v1787
      %v1818 = vadd.f32 %v1810, %v1792
      %v1819 = vadd.f32 %v1811, %v1795
      %v1820 = vadd.f32 %v1812, %v1800
      %v1821 = vadd.f32 %v1813, %v1803
      %1822 = vst [vmem:[#allocation2] sm:$0xff] %v1814
      %1823 = vst [vmem:[#allocation2 + $0x8] sm:$0xff] %v1815
      %1824 = vst [vmem:[#allocation2 + $0x10] sm:$0xff] %v1816
      %1825 = vst [vmem:[#allocation2 + $0x18] sm:$0xff] %v1817
      %1826 = vst [vmem:[#allocation2 + $0x20] sm:$0xff] %v1818
      %1827 = vst [vmem:[#allocation2 + $0x28] sm:$0xff] %v1819
      %1828 = vst [vmem:[#allocation2 + $0x30] sm:$0xff] %v1820
      %1829 = vst [vmem:[#allocation2 + $0x38] sm:$0xff] %v1821
      %v1830 = vld [vmem:[#allocation2] sm:$0xff]
      %v1831 = vld [vmem:[#allocation2 + $0x8] sm:$0xff]
      %v1832 = vld [vmem:[#allocation2 + $0x10] sm:$0xff]
      %v1833 = vld [vmem:[#allocation2 + $0x18] sm:$0xff]
      %v1834 = vld [vmem:[#allocation2 + $0x20] sm:$0xff]
      %v1835 = vld [vmem:[#allocation2 + $0x28] sm:$0xff]
      %v1836 = vld [vmem:[#allocation2 + $0x30] sm:$0xff]
      %v1837 = vld [vmem:[#allocation2 + $0x38] sm:$0xff]
      %v1838 = vld [vmem:[%s2] sm:$0x1]
      %v1840 = vlaneseq
      %v1841 = vshrl.u32 %v1840, 7
      %v1842 = vsub.s32 0, %v1841
      %v1843 = vrot.slane %v1838, %v1842
      %v1845 = vadd.f32 %v1830, %v1843
      %v1846 = vadd.f32 %v1831, %v1843
      %v1847 = vadd.f32 %v1832, %v1843
      %v1848 = vadd.f32 %v1833, %v1843
      %v1849 = vadd.f32 %v1834, %v1843
      %v1850 = vadd.f32 %v1835, %v1843
      %v1851 = vadd.f32 %v1836, %v1843
      %v1852 = vadd.f32 %v1837, %v1843
      %v1853 = vmax.f32 %v1845, 0.0
      %v1854 = vmax.f32 %v1846, 0.0
      %v1855 = vmax.f32 %v1847, 0.0
      %v1856 = vmax.f32 %v1848, 0.0
      %v1857 = vmax.f32 %v1849, 0.0
      %v1858 = vmax.f32 %v1850, 0.0
      %v1859 = vmax.f32 %v1851, 0.0
      %v1860 = vmax.f32 %v1852, 0.0
      %v1861 = vpack.c.bf16 %v1854, %v1853
      %v1862 = vpack.c.bf16 %v1856, %v1855
      %v1863 = vpack.c.bf16 %v1858, %v1857
      %v1864 = vpack.c.bf16 %v1860, %v1859
      %v1869 = vunpack.c.l.b16 %v1861
      %v1870 = vunpack.c.h.b16 %v1861
      %v1871 = vunpack.c.l.b16 %v1862
      %v1872 = vunpack.c.h.b16 %v1862
      %v1873 = vunpack.c.l.b16 %v1863
      %v1874 = vunpack.c.h.b16 %v1863
      %v1875 = vunpack.c.l.b16 %v1864
      %v1876 = vunpack.c.h.b16 %v1864
      %v1877 = vpack.c.b16 %v1869, %v1869
      %v1878 = vpack.c.b16 %v1870, %v1870
      %v1879 = vpack.c.b16 %v1871, %v1871
      %v1880 = vpack.c.b16 %v1872, %v1872
      %v1881 = vpack.c.b16 %v1873, %v1873
      %v1882 = vpack.c.b16 %v1874, %v1874
      %v1883 = vpack.c.b16 %v1875, %v1875
      %v1884 = vpack.c.b16 %v1876, %v1876
      %1893 = vst [vmem:[%s259] sm:$0xf] %v1877
      %1894 = vst [vmem:[%s259 + $0x4] sm:$0xf] %v1878
      %1895 = vst [vmem:[%s259 + $0x8] sm:$0xf] %v1879
      %1896 = vst [vmem:[%s259 + $0xc] sm:$0xf] %v1880
      %1897 = vst [vmem:[%s259 + $0x10] sm:$0xf] %v1881
      %1898 = vst [vmem:[%s259 + $0x14] sm:$0xf] %v1882
      %1899 = vst [vmem:[%s259 + $0x18] sm:$0xf] %v1883
      %1900 = vst [vmem:[%s259 + $0x1c] sm:$0xf] %v1884
      %v1901 = vld [vmem:[%s918] sm:$0xf]
      %v1902 = vld [vmem:[%s918 + $0x8] sm:$0xf]
      %v1903 = vld [vmem:[%s918 + $0x10] sm:$0xf]
      %v1904 = vld [vmem:[%s918 + $0x18] sm:$0xf]
      %v1905 = vld [vmem:[%s918 + $0x20] sm:$0xf]
      %v1906 = vld [vmem:[%s918 + $0x28] sm:$0xf]
      %v1907 = vld [vmem:[%s918 + $0x30] sm:$0xf]
      %v1908 = vld [vmem:[%s918 + $0x38] sm:$0xf]
      %v1909 = vld [vmem:[%s3] sm:$0xf]
      %v1910 = vld [vmem:[%s3 + $0x4] sm:$0xf]
      %v1911 = vld [vmem:[%s4] sm:$0x1]
      %v1913 = vlaneseq
      %v1914 = vshrl.u32 %v1913, 7
      %v1915 = vsub.s32 0, %v1914
      %v1916 = vrot.slane %v1911, %v1915
      %v1926 = vunpack.c.l.b16 %v1901
      %v1927 = vunpack.c.l.b16 %v1902
      %v1928 = vunpack.c.l.b16 %v1903
      %v1929 = vunpack.c.l.b16 %v1904
      %v1930 = vunpack.c.l.b16 %v1905
      %v1931 = vunpack.c.l.b16 %v1906
      %v1932 = vunpack.c.l.b16 %v1907
      %v1933 = vunpack.c.l.b16 %v1908
      %v1934 = vpack.c.b16 %v1927, %v1926
      %v1935 = vpack.c.b16 %v1929, %v1928
      %v1936 = vpack.c.b16 %v1931, %v1930
      %v1937 = vpack.c.b16 %v1933, %v1932
      %v1940 = vunpack.c.l.b16 %v1909
      %v1941 = vunpack.c.l.b16 %v1910
      %v1942 = vpack.c.b16 %v1941, %v1940
      %v1945 = vsel %vm304, %v1934, 0
      %v1948 = vsel %vm304, %v1935, 0
      %v1951 = vsel %vm304, %v1936, 0
      %v1954 = vsel %vm304, %v1937, 0
      %1956 = vmatprep.subr.bf16.mxu0 0
      %1957 = vmatpush1.bf16.msra.mxu0 %v1942
      %1958 = vmatprep.subr.bf16.mxu0 0
      %1959 = vmatpush1.bf16.msra.mxu0 0
      %1960 = vmatprep.subr.bf16.mxu0 0
      %1961 = vmatpush1.bf16.msra.mxu0 0
      %1962 = vmatprep.subr.bf16.mxu0 0
      %1963 = vmatpush1.bf16.msra.mxu0 0
      %1964 = vmatprep.subr.bf16.mxu0 0
      %1965 = vmatpush1.bf16.msra.mxu0 0
      %1966 = vmatprep.subr.bf16.mxu0 0
      %1967 = vmatpush1.bf16.msra.mxu0 0
      %1968 = vmatprep.subr.bf16.mxu0 0
      %1969 = vmatpush1.bf16.msra.mxu0 0
      %1970 = vmatprep.subr.bf16.mxu0 0
      %1971 = vmatpush1.bf16.msra.mxu0 0
      %1972 = vmatprep.subr.bf16.mxu0 0
      %1973 = vmatpush1.bf16.msra.mxu0 0
      %1974 = vmatprep.subr.bf16.mxu0 0
      %1975 = vmatpush1.bf16.msra.mxu0 0
      %1976 = vmatprep.subr.bf16.mxu0 0
      %1977 = vmatpush1.bf16.msra.mxu0 0
      %1978 = vmatprep.subr.bf16.mxu0 0
      %1979 = vmatpush1.bf16.msra.mxu0 0
      %1980 = vmatprep.subr.bf16.mxu0 0
      %1981 = vmatpush1.bf16.msra.mxu0 0
      %1982 = vmatprep.subr.bf16.mxu0 0
      %1983 = vmatpush1.bf16.msra.mxu0 0
      %1984 = vmatprep.subr.bf16.mxu0 0
      %1985 = vmatpush1.bf16.msra.mxu0 0
      %1986 = vmatprep.subr.bf16.mxu0 0
      %1987 = vmatpush1.bf16.msra.mxu0 0
      %1988 = vmatprep.mubr.bf16.mxu0 0
      %1989 = vmatmul.mubr.bf16.gmra.mrb[0].mxu0 %v1945
      %v1990 = vpop.f32.mrb[0].mxu0
      %v1991 = vadd.f32 %v1916, %v1990
      %v1992 = vpop.f32.mrb[0].mxu0
      %v1993 = vpop.f32.mrb[0].mxu0
      %v1994 = vadd.f32 %v1916, %v1993
      %v1995 = vpop.f32.mrb[0].mxu0
      %1996 = vmatprep.mubr.bf16.mxu0 0
      %1997 = vmatmul.mubr.bf16.gmra.mrb[0].mxu0 %v1948
      %v1998 = vpop.f32.mrb[0].mxu0
      %v1999 = vadd.f32 %v1916, %v1998
      %v2000 = vpop.f32.mrb[0].mxu0
      %v2001 = vpop.f32.mrb[0].mxu0
      %v2002 = vadd.f32 %v1916, %v2001
      %v2003 = vpop.f32.mrb[0].mxu0
      %2004 = vmatprep.mubr.bf16.mxu0 0
      %2005 = vmatmul.mubr.bf16.gmra.mrb[0].mxu0 %v1951
      %v2006 = vpop.f32.mrb[0].mxu0
      %v2007 = vadd.f32 %v1916, %v2006
      %v2008 = vpop.f32.mrb[0].mxu0
      %v2009 = vpop.f32.mrb[0].mxu0
      %v2010 = vadd.f32 %v1916, %v2009
      %v2011 = vpop.f32.mrb[0].mxu0
      %2012 = vmatprep.mubr.bf16.mxu0 0
      %2013 = vmatmul.mubr.bf16.gmra.mrb[0].mxu0 %v1954
      %v2014 = vpop.f32.mrb[0].mxu0
      %v2015 = vadd.f32 %v1916, %v2014
      %v2016 = vpop.f32.mrb[0].mxu0
      %v2017 = vpop.f32.mrb[0].mxu0
      %v2018 = vadd.f32 %v1916, %v2017
      %v2019 = vpop.f32.mrb[0].mxu0
      %2020 = vdwg.mxu0
      %v2021 = vpack.c.bf16 %v1994, %v1991
      %v2022 = vpack.c.bf16 %v2002, %v1999
      %v2023 = vpack.c.bf16 %v2010, %v2007
      %v2024 = vpack.c.bf16 %v2018, %v2015
      %v2029 = vunpack.c.l.b16 %v2021
      %v2030 = vunpack.c.h.b16 %v2021
      %v2031 = vunpack.c.l.b16 %v2022
      %v2032 = vunpack.c.h.b16 %v2022
      %v2033 = vunpack.c.l.b16 %v2023
      %v2034 = vunpack.c.h.b16 %v2023
      %v2035 = vunpack.c.l.b16 %v2024
      %v2036 = vunpack.c.h.b16 %v2024
      %v2037 = vpack.c.b16 %v2029, %v2029
      %v2038 = vpack.c.b16 %v2030, %v2030
      %v2039 = vpack.c.b16 %v2031, %v2031
      %v2040 = vpack.c.b16 %v2032, %v2032
      %v2041 = vpack.c.b16 %v2033, %v2033
      %v2042 = vpack.c.b16 %v2034, %v2034
      %v2043 = vpack.c.b16 %v2035, %v2035
      %v2044 = vpack.c.b16 %v2036, %v2036
      %2053 = vst [vmem:[%s265] sm:$0xf] %v2037
      %2054 = vst [vmem:[%s265 + $0x4] sm:$0xf] %v2038
      %2055 = vst [vmem:[%s265 + $0x8] sm:$0xf] %v2039
      %2056 = vst [vmem:[%s265 + $0xc] sm:$0xf] %v2040
      %2057 = vst [vmem:[%s265 + $0x10] sm:$0xf] %v2041
      %2058 = vst [vmem:[%s265 + $0x14] sm:$0xf] %v2042
      %2059 = vst [vmem:[%s265 + $0x18] sm:$0xf] %v2043
      %2060 = vst [vmem:[%s265 + $0x1c] sm:$0xf] %v2044
      %s2061 = smul.u32 8, %s18
      %p2062 = scmp.lt.s32.totalorder %s2061, 15
      %s2063 = scalar_select %p2062, %s2061, 15
      %s2064 = smul.addr %s2063, 4
      %s2065 = scalar_lea.vmem %s5, %s2064
      %s2066 = smul.u32 8, %s18
      %p2067 = scmp.lt.s32.totalorder %s2066, 15
      %s2068 = scalar_select %p2067, %s2066, 15
      %s2069 = smul.addr %s2068, 4
      %s2070 = scalar_lea.vmem %s6, %s2069
      // Predicated region
      $region41: #{_forward_impl.2} parent=39 // pred_check
        %p2071 = pneg %p146
      $region42: #{_forward_impl.2} parent=39 // pred_check_branch
        %2073 = sbr.rel (%p2071) target = $region44
      $region43: #{_forward_impl.2} parent=39 // pred_region
        %s2074 = smul.u32 8, %s18
      $region44: #{_forward_impl.2} parent=39 // pred_fallthru
        _
      // Predicated region
      $region45: #{_forward_impl.2} parent=39 // pred_check
        %p2075 = pneg %p172
      $region46: #{_forward_impl.2} parent=39 // pred_check_branch
        %2077 = sbr.rel (%p2075) target = $region48
      $region47: #{_forward_impl.2} parent=39 // pred_region
        %s2078 = smul.u32 8, %s18
      $region48: #{_forward_impl.2} parent=39 // pred_fallthru
        _
    $region40: #{_forward_impl.2} parent=5 // pred_fallthru
      _
    %p2079 = scmp.le.s32.totalorder 2, %s13
    // Predicated region
    $region49: #{_forward_impl.2} parent=5 // pred_check
      %p2080 = pneg %p2079
    $region50: #{_forward_impl.2} parent=5 // pred_check_branch
      %2082 = sbr.rel (%p2080) target = $region52
    $region51: #{_forward_impl.2} parent=5 // pred_region
      %s2083 = ssub.s32 %s13, 2
      // Predicated region
      $region53: #{_forward_impl.2} parent=51 // pred_check
        %p2084 = pneg %p152
      $region54: #{_forward_impl.2} parent=51 // pred_check_branch
        %2086 = sbr.rel (%p2084) target = $region56
      $region55: #{_forward_impl.2} parent=51 // pred_region
        %s2087 = smul.u32 8, %s19
        %p2088 = scmp.lt.s32.totalorder %s2087, 15
        %s2089 = scalar_select %p2088, %s2087, 15
        %s2090 = smul.addr %s2089, 4
        %s2091 = scalar_lea.vmem %s5, %s2090
      $region56: #{_forward_impl.2} parent=51 // pred_fallthru
        _
      // Predicated region
      $region57: #{_forward_impl.2} parent=51 // pred_check
        %p2092 = pneg %p178
      $region58: #{_forward_impl.2} parent=51 // pred_check_branch
        %2094 = sbr.rel (%p2092) target = $region60
      $region59: #{_forward_impl.2} parent=51 // pred_region
        %s2095 = smul.u32 8, %s19
        %p2096 = scmp.lt.s32.totalorder %s2095, 15
        %s2097 = scalar_select %p2096, %s2095, 15
        %s2098 = smul.addr %s2097, 4
        %s2099 = scalar_lea.vmem %s6, %s2098
      $region60: #{_forward_impl.2} parent=51 // pred_fallthru
        _
    $region52: #{_forward_impl.2} parent=5 // pred_fallthru
      _
  $region6: #{_forward_impl.2} parent=0 // loop_footer
    %s17 = sadd.s32 1, %s13
  $region7: #{_forward_impl.2} parent=0 // loop_footer_branch
    %12 = sbr.rel target = $region3
  $region8: #{_forward_impl.2} parent=0 // loop_exit
    _

// kernel: _forward_impl.3
$region0: #{_forward_impl.3}
  #allocation0 [shape = 'u32[]', space=smem, size = 0x4, offset = 0x4, fixed_abs, tag = 'smem constant byte address 0x4 - core index']
  #allocation1 [shape = 'u32[144,128]{1,0:T(1,128)}', space=vmem, size = 0x12000, scoped, tag = 'internal scratch']
  #allocation2 [shape = 'bf16[64,1152]{1,0:T(16,128)(2,1)}', space=vmem, size = 0x24000, scoped, tag = 'scratch operand']
  %s0 = inlined_call_operand.vmem [shape: bf16[2,10,10,128], index: 0, kind: input, shape index: {}]
  %s1 = inlined_call_operand.vmem [shape: bf16[1152,128], index: 1, kind: input, shape index: {}]
  %s2 = inlined_call_operand.vmem [shape: f32[1,128], index: 2, kind: input, shape index: {}]
  %s3 = inlined_call_operand.vmem [shape: bf16[128,128], index: 3, kind: input, shape index: {}]
  %s4 = inlined_call_operand.hbm [shape: f32[128,128], index: 4, kind: output, shape index: {}]
  %s5 = sld [smem:[#allocation0]]
  $region49: #{_forward_impl.3} parent=0
    _
  %s7 = ssub.s32 1, %s5
  %s8 = scalar_select 0, %s7, %s5
  $region1: #{_forward_impl.3} parent=0
    #allocation3 [shape = 'u8[65536]{0}', space=vmem, size = 0x10000, scoped, tag = 'output window, operand 0']
    #allocation4 [shape = 's32[2]{0}', space=sflag, size = 0x8, scoped, tag = 'scoped memory for _forward_impl.3']
    %9 = vsyncpa [#allocation4], 0
    %s10 = scalar_lea.sflag [#allocation4], 1
    %11 = vsyncpa %s10, 0
    loop: start=0, step=1, limit=4
    $region2: #{_forward_impl.3} parent=1 // loop_pre_header
      _
    $region3: #{_forward_impl.3} parent=1 // loop_header
      %s13 = sphi 0, %s17
      %p14 = scmp.ge.s32.totalorder %s13, 4
      %s23 = sphi 0, %s25
      %s26 = sphi 0, %s23
      %s27 = sphi 0, %s26
      %s43 = sphi 0, %s27
      %s47 = sphi 0, %s47
      %s49 = sphi 0, %s47
      %s50 = sphi 0, %s49
      %s64 = sphi 0, %s50
      %s68 = sphi 0, %s68
      %s70 = sphi 0, %s68
      %s71 = sphi 0, %s70
      %s85 = sphi 0, %s71
      %s91 = sphi 0, %s93
      %s94 = sphi 0, %s91
      %s95 = sphi 0, %s94
      %s111 = sphi 0, %s95
      %s117 = sphi 0, %s119
      %s120 = sphi 0, %s117
      %s121 = sphi 0, %s120
      %s137 = sphi 0, %s121
    $region4: #{_forward_impl.3} parent=1 // loop_header_branch
      %16 = sbr.rel (%p14) target = $region8
    $region5: #{_forward_impl.3} parent=1 // loop_body
      %s18 = ssub.s32 %s13, 1
      %s19 = ssub.s32 %s13, 2
      %s20 = sadd.s32 %s13, 1
      %s21 = ssub.s32 %s13, %s20
      %p22 = scmp.eq.s32.totalorder %s21, 0
      %s24 = sadd.s32 %s23, 1
      %s25 = scalar_select %p22, %s23, %s24
      %p28 = pneg %p22
      %p29 = scmp.eq.s32.totalorder %s13, 1
      %p30 = por %p28, %p29
      %p31 = scmp.ne.s32.totalorder %s23, %s26
      %p32 = scmp.eq.s32.totalorder %s13, 0
      %p33 = por %p31, %p32
      %p34 = scmp.ne.s32.totalorder %s23, %s26
      %p35 = scmp.eq.s32.totalorder %s18, 1
      %p36 = por %p34, %p35
      %p37 = scmp.ne.s32.totalorder %s26, %s27
      %p38 = scmp.eq.s32.totalorder %s18, 0
      %p39 = por %p37, %p38
      %p40 = scmp.ne.s32.totalorder %s26, %s27
      %p41 = scmp.eq.s32.totalorder %s19, 1
      %p42 = por %p40, %p41
      %p44 = scmp.ne.s32.totalorder %s27, %s43
      %p45 = scmp.eq.s32.totalorder %s19, 0
      %p46 = por %p44, %p45
      %s48 = sadd.s32 %s47, 1
      %p51 = scmp.eq.s32.totalorder %s13, 1
      %p52 = scmp.ne.s32.totalorder %s47, %s49
      %p53 = scmp.eq.s32.totalorder %s13, 0
      %p54 = por %p52, %p53
      %p55 = scmp.ne.s32.totalorder %s47, %s49
      %p56 = scmp.eq.s32.totalorder %s18, 1
      %p57 = por %p55, %p56
      %p58 = scmp.ne.s32.totalorder %s49, %s50
      %p59 = scmp.eq.s32.totalorder %s18, 0
      %p60 = por %p58, %p59
      %p61 = scmp.ne.s32.totalorder %s49, %s50
      %p62 = scmp.eq.s32.totalorder %s19, 1
      %p63 = por %p61, %p62
      %p65 = scmp.ne.s32.totalorder %s50, %s64
      %p66 = scmp.eq.s32.totalorder %s19, 0
      %p67 = por %p65, %p66
      %s69 = sadd.s32 %s68, 1
      %p72 = scmp.eq.s32.totalorder %s13, 1
      %p73 = scmp.ne.s32.totalorder %s68, %s70
      %p74 = scmp.eq.s32.totalorder %s13, 0
      %p75 = por %p73, %p74
      %p76 = scmp.ne.s32.totalorder %s68, %s70
      %p77 = scmp.eq.s32.totalorder %s18, 1
      %p78 = por %p76, %p77
      %p79 = scmp.ne.s32.totalorder %s70, %s71
      %p80 = scmp.eq.s32.totalorder %s18, 0
      %p81 = por %p79, %p80
      %p82 = scmp.ne.s32.totalorder %s70, %s71
      %p83 = scmp.eq.s32.totalorder %s19, 1
      %p84 = por %p82, %p83
      %p86 = scmp.ne.s32.totalorder %s71, %s85
      %p87 = scmp.eq.s32.totalorder %s19, 0
      %p88 = por %p86, %p87
      %s89 = ssub.s32 %s13, %s20
      %p90 = scmp.eq.s32.totalorder %s89, 0
      %s92 = sadd.s32 %s91, 1
      %s93 = scalar_select %p90, %s91, %s92
      %p96 = pneg %p90
      %p97 = scmp.eq.s32.totalorder %s13, 1
      %p98 = por %p96, %p97
      %p99 = scmp.ne.s32.totalorder %s91, %s94
      %p100 = scmp.eq.s32.totalorder %s13, 0
      %p101 = por %p99, %p100
      %p102 = scmp.ne.s32.totalorder %s91, %s94
      %p103 = scmp.eq.s32.totalorder %s18, 1
      %p104 = por %p102, %p103
      %p105 = scmp.ne.s32.totalorder %s94, %s95
      %p106 = scmp.eq.s32.totalorder %s18, 0
      %p107 = por %p105, %p106
      %p108 = scmp.ne.s32.totalorder %s94, %s95
      %p109 = scmp.eq.s32.totalorder %s19, 1
      %p110 = por %p108, %p109
      %p112 = scmp.ne.s32.totalorder %s95, %s111
      %p113 = scmp.eq.s32.totalorder %s19, 0
      %p114 = por %p112, %p113
      %s115 = ssub.s32 %s13, %s20
      %p116 = scmp.eq.s32.totalorder %s115, 0
      %s118 = sadd.s32 %s117, 1
      %s119 = scalar_select %p116, %s117, %s118
      %p122 = pneg %p116
      %p123 = scmp.eq.s32.totalorder %s13, 1
      %p124 = por %p122, %p123
      %p125 = scmp.ne.s32.totalorder %s117, %s120
      %p126 = scmp.eq.s32.totalorder %s13, 0
      %p127 = por %p125, %p126
      %p128 = scmp.ne.s32.totalorder %s117, %s120
      %p129 = scmp.eq.s32.totalorder %s18, 1
      %p130 = por %p128, %p129
      %p131 = scmp.ne.s32.totalorder %s120, %s121
      %p132 = scmp.eq.s32.totalorder %s18, 0
      %p133 = por %p131, %p132
      %p134 = scmp.ne.s32.totalorder %s120, %s121
      %p135 = scmp.eq.s32.totalorder %s19, 1
      %p136 = por %p134, %p135
      %p138 = scmp.ne.s32.totalorder %s121, %s137
      %p139 = scmp.eq.s32.totalorder %s19, 0
      %p140 = por %p138, %p139
      %p141 = scmp.le.s32.totalorder 1, %s13
      %p142 = scmp.lt.s32.totalorder %s13, 3
      %p143 = pnand %p141, %p142
      %p144 = pneg %p143
      // Predicated region
      $region9: #{_forward_impl.3} parent=5 // pred_check
        _
      $region10: #{_forward_impl.3} parent=5 // pred_check_branch
        %146 = sbr.rel (%p143) target = $region12
      $region11: #{_forward_impl.3} parent=5 // pred_region
        %s147 = ssub.s32 %s13, 1
        // Predicated region
        $region13: #{_forward_impl.3} parent=11 // pred_check
          %p148 = pneg %p60
        $region14: #{_forward_impl.3} parent=11 // pred_check_branch
          %150 = sbr.rel (%p148) target = $region16
        $region15: #{_forward_impl.3} parent=11 // pred_region
          _
        $region16: #{_forward_impl.3} parent=11 // pred_fallthru
          _
        // Predicated region
        $region17: #{_forward_impl.3} parent=11 // pred_check
          %p151 = pneg %p81
        $region18: #{_forward_impl.3} parent=11 // pred_check_branch
          %153 = sbr.rel (%p151) target = $region20
        $region19: #{_forward_impl.3} parent=11 // pred_region
          _
        $region20: #{_forward_impl.3} parent=11 // pred_fallthru
          _
      $region12: #{_forward_impl.3} parent=5 // pred_fallthru
        _
      %p154 = scmp.lt.s32.totalorder %s13, 2
      // Predicated region
      $region21: #{_forward_impl.3} parent=5 // pred_check
        %p155 = pneg %p154
      $region22: #{_forward_impl.3} parent=5 // pred_check_branch
        %157 = sbr.rel (%p155) target = $region24
      $region23: #{_forward_impl.3} parent=5 // pred_region
        // Predicated region
        $region25: #{_forward_impl.3} parent=23 // pred_check
          %p158 = pneg %p33
        $region26: #{_forward_impl.3} parent=23 // pred_check_branch
          %160 = sbr.rel (%p158) target = $region28
        $region27: #{_forward_impl.3} parent=23 // pred_region
          %p161 = scmp.lt.s32.totalorder %s13, 1
          %s162 = scalar_select %p161, %s13, 1
          %s163 = smul.addr %s162, 20
          %s164 = smul.addr %s163, 4
          %s165 = scalar_lea.vmem %s0, %s164
        $region28: #{_forward_impl.3} parent=23 // pred_fallthru
          _
        // Predicated region
        $region29: #{_forward_impl.3} parent=23 // pred_check
          %p166 = pneg %p101
        $region30: #{_forward_impl.3} parent=23 // pred_check_branch
          %168 = sbr.rel (%p166) target = $region32
        $region31: #{_forward_impl.3} parent=23 // pred_region
          %s169 = smul.u32 8, %s13
          %p170 = scmp.lt.s32.totalorder %s169, 15
          %s171 = scalar_select %p170, %s169, 15
          %s172 = smul.addr %s171, 4
          %s173 = scalar_lea.vmem %s3, %s172
          %s174 = smul.u32 8, %s13
        $region32: #{_forward_impl.3} parent=23 // pred_fallthru
          _
      $region24: #{_forward_impl.3} parent=5 // pred_fallthru
        _
      %p175 = scmp.le.s32.totalorder 1, %s13
      %p176 = scmp.lt.s32.totalorder %s13, 3
      %p177 = pnand %p175, %p176
      %p178 = pneg %p177
      // Predicated region
      $region33: #{_forward_impl.3} parent=5 // pred_check
        _
      $region34: #{_forward_impl.3} parent=5 // pred_check_branch
        %180 = sbr.rel (%p177) target = $region36
      $region35: #{_forward_impl.3} parent=5 // pred_region
        %s181 = ssub.s32 %s13, 1
        %p182 = scmp.lt.s32.totalorder %s18, 1
        %s183 = scalar_select %p182, %s18, 1
        %s184 = smul.addr %s183, 20
        %s185 = smul.addr %s184, 4
        %s186 = scalar_lea.vmem %s0, %s185
        %p187 = pneg %p39
        %p188 = pneg %p36
        %p189 = pneg %p60
        %p190 = pneg %p57
        %p191 = pneg %p81
        %p192 = pneg %p78
        %s193 = smul.u32 8, %s18
        %p194 = scmp.lt.s32.totalorder %s193, 15
        %s195 = scalar_select %p194, %s193, 15
        %s196 = smul.addr %s195, 4
        %s197 = scalar_lea.vmem %s3, %s196
        %p198 = pneg %p107
        %p199 = pneg %p104
        %p200 = pneg %p133
        %p201 = pneg %p130
        %s202 = sand.u32 %s120, 1
        %s203 = scalar_lea.sflag [#allocation4], %s202
        %s204 = sand.u32 %s120, 1
        %s205 = smul.addr %s204, 64
        %s206 = scalar_lea.vmem [#allocation3], %s205
        %p207 = scmp.lt.s32.totalorder %s18, 1
        %s208 = scalar_select %p207, %s18, 1
        %s209 = smul.addr %s208, 20
        %s210 = smul.addr %s209, 4
        %s211 = scalar_lea.vmem %s0, %s210
        %s212 = smul.u32 8, %s18
        %p213 = scmp.lt.s32.totalorder %s212, 15
        %s214 = scalar_select %p213, %s212, 15
        %s215 = smul.addr %s214, 4
        %s216 = scalar_lea.vmem %s3, %s215
        %s217 = smul.u32 8, %s18
        %s218 = smul.u32 8, %s18
        %v220 = vld [vmem:[%s211] sm:$0xf]
        %v221 = vld [vmem:[%s211 + $0x8] sm:$0xf]
        %v222 = vld [vmem:[%s211 + $0x10] sm:$0xf]
        %v223 = vld [vmem:[%s211 + $0x18] sm:$0xf]
        %v224 = vld [vmem:[%s211 + $0x20] sm:$0xf]
        %v225 = vld [vmem:[%s211 + $0x28] sm:$0xf]
        %v226 = vld [vmem:[%s211 + $0x30] sm:$0xf]
        %v227 = vld [vmem:[%s211 + $0x38] sm:$0xf]
        %v236 = vunpack.c.l.b16 %v220
        %v237 = vunpack.c.l.b16 %v221
        %v238 = vunpack.c.l.b16 %v222
        %v239 = vunpack.c.l.b16 %v223
        %v240 = vunpack.c.l.b16 %v224
        %v241 = vunpack.c.l.b16 %v225
        %v242 = vunpack.c.l.b16 %v226
        %v243 = vunpack.c.l.b16 %v227
        %v244 = vpack.c.b16 %v237, %v236
        %v245 = vpack.c.b16 %v239, %v238
        %v246 = vpack.c.b16 %v241, %v240
        %v247 = vpack.c.b16 %v243, %v242
        %252 = vst [vmem:[#allocation2] sm:$0xff] %v244
        %253 = vst [vmem:[#allocation2 + $0x48] sm:$0xff] %v245
        %254 = vst [vmem:[#allocation2 + $0x90] sm:$0xff] %v246
        %255 = vst [vmem:[#allocation2 + $0xd8] sm:$0xff] %v247
        %v256 = vld [vmem:[%s211] sm:$0xf]
        %v257 = vld [vmem:[%s211 + $0x4] sm:$0x1]
        %v258 = vld [vmem:[%s211 + $0x8] sm:$0xf]
        %v259 = vld [vmem:[%s211 + $0xc] sm:$0x1]
        %v260 = vld [vmem:[%s211 + $0x10] sm:$0xf]
        %v261 = vld [vmem:[%s211 + $0x14] sm:$0x1]
        %v262 = vld [vmem:[%s211 + $0x18] sm:$0xf]
        %v263 = vld [vmem:[%s211 + $0x1c] sm:$0x1]
        %v264 = vld [vmem:[%s211 + $0x20] sm:$0xf]
        %v265 = vld [vmem:[%s211 + $0x24] sm:$0x1]
        %v266 = vld [vmem:[%s211 + $0x28] sm:$0xf]
        %v267 = vld [vmem:[%s211 + $0x2c] sm:$0x1]
        %v268 = vld [vmem:[%s211 + $0x30] sm:$0xf]
        %v269 = vld [vmem:[%s211 + $0x34] sm:$0x1]
        %v270 = vld [vmem:[%s211 + $0x38] sm:$0xf]
        %v271 = vld [vmem:[%s211 + $0x3c] sm:$0x1]
        %vm272 = vsmask.f32 3328
        %vm273 = vsmask.f32 7440
        %vm274 = vmor %vm272, %vm273
        %v276 = vshrl.u32 %v256, 16
        %v278 = vrot.slane %v276, 4
        %v279 = vshll.u32 %v256, 16
        %v281 = vrot.slane %v279, 5
        %v282 = vor.u32 %v278, %v281
        %v283 = vrot.slane %v282, 4
        %v285 = vshll.u32 %v257, 16
        %v287 = vrot.slane %v285, 5
        %v288 = vsel %vm274, %v283, %v287
        %v290 = vshrl.u32 %v258, 16
        %v292 = vrot.slane %v290, 4
        %v293 = vshll.u32 %v258, 16
        %v295 = vrot.slane %v293, 5
        %v296 = vor.u32 %v292, %v295
        %v297 = vrot.slane %v296, 4
        %v299 = vshll.u32 %v259, 16
        %v301 = vrot.slane %v299, 5
        %v302 = vsel %vm274, %v297, %v301
        %v304 = vshrl.u32 %v260, 16
        %v306 = vrot.slane %v304, 4
        %v307 = vshll.u32 %v260, 16
        %v309 = vrot.slane %v307, 5
        %v310 = vor.u32 %v306, %v309
        %v311 = vrot.slane %v310, 4
        %v313 = vshll.u32 %v261, 16
        %v315 = vrot.slane %v313, 5
        %v316 = vsel %vm274, %v311, %v315
        %v318 = vshrl.u32 %v262, 16
        %v320 = vrot.slane %v318, 4
        %v321 = vshll.u32 %v262, 16
        %v323 = vrot.slane %v321, 5
        %v324 = vor.u32 %v320, %v323
        %v325 = vrot.slane %v324, 4
        %v327 = vshll.u32 %v263, 16
        %v329 = vrot.slane %v327, 5
        %v330 = vsel %vm274, %v325, %v329
        %v332 = vshrl.u32 %v264, 16
        %v334 = vrot.slane %v332, 4
        %v335 = vshll.u32 %v264, 16
        %v337 = vrot.slane %v335, 5
        %v338 = vor.u32 %v334, %v337
        %v339 = vrot.slane %v338, 4
        %v341 = vshll.u32 %v265, 16
        %v343 = vrot.slane %v341, 5
        %v344 = vsel %vm274, %v339, %v343
        %v346 = vshrl.u32 %v266, 16
        %v348 = vrot.slane %v346, 4
        %v349 = vshll.u32 %v266, 16
        %v351 = vrot.slane %v349, 5
        %v352 = vor.u32 %v348, %v351
        %v353 = vrot.slane %v352, 4
        %v355 = vshll.u32 %v267, 16
        %v357 = vrot.slane %v355, 5
        %v358 = vsel %vm274, %v353, %v357
        %v360 = vshrl.u32 %v268, 16
        %v362 = vrot.slane %v360, 4
        %v363 = vshll.u32 %v268, 16
        %v365 = vrot.slane %v363, 5
        %v366 = vor.u32 %v362, %v365
        %v367 = vrot.slane %v366, 4
        %v369 = vshll.u32 %v269, 16
        %v371 = vrot.slane %v369, 5
        %v372 = vsel %vm274, %v367, %v371
        %v374 = vshrl.u32 %v270, 16
        %v376 = vrot.slane %v374, 4
        %v377 = vshll.u32 %v270, 16
        %v379 = vrot.slane %v377, 5
        %v380 = vor.u32 %v376, %v379
        %v381 = vrot.slane %v380, 4
        %v383 = vshll.u32 %v271, 16
        %v385 = vrot.slane %v383, 5
        %v386 = vsel %vm274, %v381, %v385
        %v387 = vunpack.c.l.b16 %v288
        %v388 = vunpack.c.l.b16 %v302
        %v389 = vunpack.c.l.b16 %v316
        %v390 = vunpack.c.l.b16 %v330
        %v391 = vunpack.c.l.b16 %v344
        %v392 = vunpack.c.l.b16 %v358
        %v393 = vunpack.c.l.b16 %v372
        %v394 = vunpack.c.l.b16 %v386
        %v395 = vpack.c.b16 %v388, %v387
        %v396 = vpack.c.b16 %v390, %v389
        %v397 = vpack.c.b16 %v392, %v391
        %v398 = vpack.c.b16 %v394, %v393
        %403 = vst [vmem:[#allocation2 + $0x8] sm:$0xff] %v395
        %404 = vst [vmem:[#allocation2 + $0x50] sm:$0xff] %v396
        %405 = vst [vmem:[#allocation2 + $0x98] sm:$0xff] %v397
        %406 = vst [vmem:[#allocation2 + $0xe0] sm:$0xff] %v398
        %v407 = vld [vmem:[%s211] sm:$0xe]
        %v408 = vld [vmem:[%s211 + $0x4] sm:$0x1]
        %v409 = vld [vmem:[%s211 + $0x8] sm:$0xe]
        %v410 = vld [vmem:[%s211 + $0xc] sm:$0x1]
        %v411 = vld [vmem:[%s211 + $0x10] sm:$0xe]
        %v412 = vld [vmem:[%s211 + $0x14] sm:$0x1]
        %v413 = vld [vmem:[%s211 + $0x18] sm:$0xe]
        %v414 = vld [vmem:[%s211 + $0x1c] sm:$0x1]
        %v415 = vld [vmem:[%s211 + $0x20] sm:$0xe]
        %v416 = vld [vmem:[%s211 + $0x24] sm:$0x1]
        %v417 = vld [vmem:[%s211 + $0x28] sm:$0xe]
        %v418 = vld [vmem:[%s211 + $0x2c] sm:$0x1]
        %v419 = vld [vmem:[%s211 + $0x30] sm:$0xe]
        %v420 = vld [vmem:[%s211 + $0x34] sm:$0x1]
        %v421 = vld [vmem:[%s211 + $0x38] sm:$0xe]
        %v422 = vld [vmem:[%s211 + $0x3c] sm:$0x1]
        %vm439 = vcmask 1042432
        %vm440 = vcmask 1046532
        %vm441 = vmor %vm439, %vm440
        %v442 = vrot.slane %v407, 5
        %v443 = vrot.slane %v442, 4
        %v444 = vrot.slane %v408, 5
        %v445 = vsel %vm441, %v443, %v444
        %v446 = vrot.slane %v409, 5
        %v447 = vrot.slane %v446, 4
        %v448 = vrot.slane %v410, 5
        %v449 = vsel %vm441, %v447, %v448
        %v450 = vrot.slane %v411, 5
        %v451 = vrot.slane %v450, 4
        %v452 = vrot.slane %v412, 5
        %v453 = vsel %vm441, %v451, %v452
        %v454 = vrot.slane %v413, 5
        %v455 = vrot.slane %v454, 4
        %v456 = vrot.slane %v414, 5
        %v457 = vsel %vm441, %v455, %v456
        %v458 = vrot.slane %v415, 5
        %v459 = vrot.slane %v458, 4
        %v460 = vrot.slane %v416, 5
        %v461 = vsel %vm441, %v459, %v460
        %v462 = vrot.slane %v417, 5
        %v463 = vrot.slane %v462, 4
        %v464 = vrot.slane %v418, 5
        %v465 = vsel %vm441, %v463, %v464
        %v466 = vrot.slane %v419, 5
        %v467 = vrot.slane %v466, 4
        %v468 = vrot.slane %v420, 5
        %v469 = vsel %vm441, %v467, %v468
        %v470 = vrot.slane %v421, 5
        %v471 = vrot.slane %v470, 4
        %v472 = vrot.slane %v422, 5
        %v473 = vsel %vm441, %v471, %v472
        %v474 = vunpack.c.l.b16 %v445
        %v475 = vunpack.c.l.b16 %v449
        %v476 = vunpack.c.l.b16 %v453
        %v477 = vunpack.c.l.b16 %v457
        %v478 = vunpack.c.l.b16 %v461
        %v479 = vunpack.c.l.b16 %v465
        %v480 = vunpack.c.l.b16 %v469
        %v481 = vunpack.c.l.b16 %v473
        %v482 = vpack.c.b16 %v475, %v474
        %v483 = vpack.c.b16 %v477, %v476
        %v484 = vpack.c.b16 %v479, %v478
        %v485 = vpack.c.b16 %v481, %v480
        %490 = vst [vmem:[#allocation2 + $0x10] sm:$0xff] %v482
        %491 = vst [vmem:[#allocation2 + $0x58] sm:$0xff] %v483
        %492 = vst [vmem:[#allocation2 + $0xa0] sm:$0xff] %v484
        %493 = vst [vmem:[#allocation2 + $0xe8] sm:$0xff] %v485
        %s494 = scalar_lea.vmem %s211, 8
        %v495 = vld [vmem:[%s494] sm:$0xf]
        %v496 = vld [vmem:[%s494 + $0x8] sm:$0xf]
        %v497 = vld [vmem:[%s494 + $0x10] sm:$0xf]
        %v498 = vld [vmem:[%s494 + $0x18] sm:$0xf]
        %v499 = vld [vmem:[%s494 + $0x20] sm:$0xf]
        %v500 = vld [vmem:[%s494 + $0x28] sm:$0xf]
        %v501 = vld [vmem:[%s494 + $0x30] sm:$0xf]
        %v502 = vld [vmem:[%s494 + $0x38] sm:$0xf]
        %v511 = vunpack.c.l.b16 %v495
        %v512 = vunpack.c.l.b16 %v496
        %v513 = vunpack.c.l.b16 %v497
        %v514 = vunpack.c.l.b16 %v498
        %v515 = vunpack.c.l.b16 %v499
        %v516 = vunpack.c.l.b16 %v500
        %v517 = vunpack.c.l.b16 %v501
        %v518 = vunpack.c.l.b16 %v502
        %v519 = vpack.c.b16 %v512, %v511
        %v520 = vpack.c.b16 %v514, %v513
        %v521 = vpack.c.b16 %v516, %v515
        %v522 = vpack.c.b16 %v518, %v517
        %527 = vst [vmem:[#allocation2 + $0x18] sm:$0xff] %v519
        %528 = vst [vmem:[#allocation2 + $0x60] sm:$0xff] %v520
        %529 = vst [vmem:[#allocation2 + $0xa8] sm:$0xff] %v521
        %530 = vst [vmem:[#allocation2 + $0xf0] sm:$0xff] %v522
        %v531 = vld [vmem:[%s494] sm:$0xf]
        %v532 = vld [vmem:[%s494 + $0x4] sm:$0x1]
        %v533 = vld [vmem:[%s494 + $0x8] sm:$0xf]
        %v534 = vld [vmem:[%s494 + $0xc] sm:$0x1]
        %v535 = vld [vmem:[%s494 + $0x10] sm:$0xf]
        %v536 = vld [vmem:[%s494 + $0x14] sm:$0x1]
        %v537 = vld [vmem:[%s494 + $0x18] sm:$0xf]
        %v538 = vld [vmem:[%s494 + $0x1c] sm:$0x1]
        %v539 = vld [vmem:[%s494 + $0x20] sm:$0xf]
        %v540 = vld [vmem:[%s494 + $0x24] sm:$0x1]
        %v541 = vld [vmem:[%s494 + $0x28] sm:$0xf]
        %v542 = vld [vmem:[%s494 + $0x2c] sm:$0x1]
        %v543 = vld [vmem:[%s494 + $0x30] sm:$0xf]
        %v544 = vld [vmem:[%s494 + $0x34] sm:$0x1]
        %v545 = vld [vmem:[%s494 + $0x38] sm:$0xf]
        %v546 = vld [vmem:[%s494 + $0x3c] sm:$0x1]
        %v548 = vshrl.u32 %v531, 16
        %v550 = vrot.slane %v548, 4
        %v551 = vshll.u32 %v531, 16
        %v553 = vrot.slane %v551, 5
        %v554 = vor.u32 %v550, %v553
        %v555 = vrot.slane %v554, 4
        %v557 = vshll.u32 %v532, 16
        %v559 = vrot.slane %v557, 5
        %v560 = vsel %vm274, %v555, %v559
        %v562 = vshrl.u32 %v533, 16
        %v564 = vrot.slane %v562, 4
        %v565 = vshll.u32 %v533, 16
        %v567 = vrot.slane %v565, 5
        %v568 = vor.u32 %v564, %v567
        %v569 = vrot.slane %v568, 4
        %v571 = vshll.u32 %v534, 16
        %v573 = vrot.slane %v571, 5
        %v574 = vsel %vm274, %v569, %v573
        %v576 = vshrl.u32 %v535, 16
        %v578 = vrot.slane %v576, 4
        %v579 = vshll.u32 %v535, 16
        %v581 = vrot.slane %v579, 5
        %v582 = vor.u32 %v578, %v581
        %v583 = vrot.slane %v582, 4
        %v585 = vshll.u32 %v536, 16
        %v587 = vrot.slane %v585, 5
        %v588 = vsel %vm274, %v583, %v587
        %v590 = vshrl.u32 %v537, 16
        %v592 = vrot.slane %v590, 4
        %v593 = vshll.u32 %v537, 16
        %v595 = vrot.slane %v593, 5
        %v596 = vor.u32 %v592, %v595
        %v597 = vrot.slane %v596, 4
        %v599 = vshll.u32 %v538, 16
        %v601 = vrot.slane %v599, 5
        %v602 = vsel %vm274, %v597, %v601
        %v604 = vshrl.u32 %v539, 16
        %v606 = vrot.slane %v604, 4
        %v607 = vshll.u32 %v539, 16
        %v609 = vrot.slane %v607, 5
        %v610 = vor.u32 %v606, %v609
        %v611 = vrot.slane %v610, 4
        %v613 = vshll.u32 %v540, 16
        %v615 = vrot.slane %v613, 5
        %v616 = vsel %vm274, %v611, %v615
        %v618 = vshrl.u32 %v541, 16
        %v620 = vrot.slane %v618, 4
        %v621 = vshll.u32 %v541, 16
        %v623 = vrot.slane %v621, 5
        %v624 = vor.u32 %v620, %v623
        %v625 = vrot.slane %v624, 4
        %v627 = vshll.u32 %v542, 16
        %v629 = vrot.slane %v627, 5
        %v630 = vsel %vm274, %v625, %v629
        %v632 = vshrl.u32 %v543, 16
        %v634 = vrot.slane %v632, 4
        %v635 = vshll.u32 %v543, 16
        %v637 = vrot.slane %v635, 5
        %v638 = vor.u32 %v634, %v637
        %v639 = vrot.slane %v638, 4
        %v641 = vshll.u32 %v544, 16
        %v643 = vrot.slane %v641, 5
        %v644 = vsel %vm274, %v639, %v643
        %v646 = vshrl.u32 %v545, 16
        %v648 = vrot.slane %v646, 4
        %v649 = vshll.u32 %v545, 16
        %v651 = vrot.slane %v649, 5
        %v652 = vor.u32 %v648, %v651
        %v653 = vrot.slane %v652, 4
        %v655 = vshll.u32 %v546, 16
        %v657 = vrot.slane %v655, 5
        %v658 = vsel %vm274, %v653, %v657
        %v659 = vunpack.c.l.b16 %v560
        %v660 = vunpack.c.l.b16 %v574
        %v661 = vunpack.c.l.b16 %v588
        %v662 = vunpack.c.l.b16 %v602
        %v663 = vunpack.c.l.b16 %v616
        %v664 = vunpack.c.l.b16 %v630
        %v665 = vunpack.c.l.b16 %v644
        %v666 = vunpack.c.l.b16 %v658
        %v667 = vpack.c.b16 %v660, %v659
        %v668 = vpack.c.b16 %v662, %v661
        %v669 = vpack.c.b16 %v664, %v663
        %v670 = vpack.c.b16 %v666, %v665
        %675 = vst [vmem:[#allocation2 + $0x20] sm:$0xff] %v667
        %676 = vst [vmem:[#allocation2 + $0x68] sm:$0xff] %v668
        %677 = vst [vmem:[#allocation2 + $0xb0] sm:$0xff] %v669
        %678 = vst [vmem:[#allocation2 + $0xf8] sm:$0xff] %v670
        %v679 = vld [vmem:[%s494] sm:$0xe]
        %v680 = vld [vmem:[%s494 + $0x4] sm:$0x1]
        %v681 = vld [vmem:[%s494 + $0x8] sm:$0xe]
        %v682 = vld [vmem:[%s494 + $0xc] sm:$0x1]
        %v683 = vld [vmem:[%s494 + $0x10] sm:$0xe]
        %v684 = vld [vmem:[%s494 + $0x14] sm:$0x1]
        %v685 = vld [vmem:[%s494 + $0x18] sm:$0xe]
        %v686 = vld [vmem:[%s494 + $0x1c] sm:$0x1]
        %v687 = vld [vmem:[%s494 + $0x20] sm:$0xe]
        %v688 = vld [vmem:[%s494 + $0x24] sm:$0x1]
        %v689 = vld [vmem:[%s494 + $0x28] sm:$0xe]
        %v690 = vld [vmem:[%s494 + $0x2c] sm:$0x1]
        %v691 = vld [vmem:[%s494 + $0x30] sm:$0xe]
        %v692 = vld [vmem:[%s494 + $0x34] sm:$0x1]
        %v693 = vld [vmem:[%s494 + $0x38] sm:$0xe]
        %v694 = vld [vmem:[%s494 + $0x3c] sm:$0x1]
        %v711 = vrot.slane %v679, 5
        %v712 = vrot.slane %v711, 4
        %v713 = vrot.slane %v680, 5
        %v714 = vsel %vm441, %v712, %v713
        %v715 = vrot.slane %v681, 5
        %v716 = vrot.slane %v715, 4
        %v717 = vrot.slane %v682, 5
        %v718 = vsel %vm441, %v716, %v717
        %v719 = vrot.slane %v683, 5
        %v720 = vrot.slane %v719, 4
        %v721 = vrot.slane %v684, 5
        %v722 = vsel %vm441, %v720, %v721
        %v723 = vrot.slane %v685, 5
        %v724 = vrot.slane %v723, 4
        %v725 = vrot.slane %v686, 5
        %v726 = vsel %vm441, %v724, %v725
        %v727 = vrot.slane %v687, 5
        %v728 = vrot.slane %v727, 4
        %v729 = vrot.slane %v688, 5
        %v730 = vsel %vm441, %v728, %v729
        %v731 = vrot.slane %v689, 5
        %v732 = vrot.slane %v731, 4
        %v733 = vrot.slane %v690, 5
        %v734 = vsel %vm441, %v732, %v733
        %v735 = vrot.slane %v691, 5
        %v736 = vrot.slane %v735, 4
        %v737 = vrot.slane %v692, 5
        %v738 = vsel %vm441, %v736, %v737
        %v739 = vrot.slane %v693, 5
        %v740 = vrot.slane %v739, 4
        %v741 = vrot.slane %v694, 5
        %v742 = vsel %vm441, %v740, %v741
        %v743 = vunpack.c.l.b16 %v714
        %v744 = vunpack.c.l.b16 %v718
        %v745 = vunpack.c.l.b16 %v722
        %v746 = vunpack.c.l.b16 %v726
        %v747 = vunpack.c.l.b16 %v730
        %v748 = vunpack.c.l.b16 %v734
        %v749 = vunpack.c.l.b16 %v738
        %v750 = vunpack.c.l.b16 %v742
        %v751 = vpack.c.b16 %v744, %v743
        %v752 = vpack.c.b16 %v746, %v745
        %v753 = vpack.c.b16 %v748, %v747
        %v754 = vpack.c.b16 %v750, %v749
        %759 = vst [vmem:[#allocation2 + $0x28] sm:$0xff] %v751
        %760 = vst [vmem:[#allocation2 + $0x70] sm:$0xff] %v752
        %761 = vst [vmem:[#allocation2 + $0xb8] sm:$0xff] %v753
        %762 = vst [vmem:[#allocation2 + $0x100] sm:$0xff] %v754
        %s763 = scalar_lea.vmem %s211, 16
        %v764 = vld [vmem:[%s763] sm:$0xf]
        %v765 = vld [vmem:[%s763 + $0x8] sm:$0xf]
        %v766 = vld [vmem:[%s763 + $0x10] sm:$0xf]
        %v767 = vld [vmem:[%s763 + $0x18] sm:$0xf]
        %v768 = vld [vmem:[%s763 + $0x20] sm:$0xf]
        %v769 = vld [vmem:[%s763 + $0x28] sm:$0xf]
        %v770 = vld [vmem:[%s763 + $0x30] sm:$0xf]
        %v771 = vld [vmem:[%s763 + $0x38] sm:$0xf]
        %v780 = vunpack.c.l.b16 %v764
        %v781 = vunpack.c.l.b16 %v765
        %v782 = vunpack.c.l.b16 %v766
        %v783 = vunpack.c.l.b16 %v767
        %v784 = vunpack.c.l.b16 %v768
        %v785 = vunpack.c.l.b16 %v769
        %v786 = vunpack.c.l.b16 %v770
        %v787 = vunpack.c.l.b16 %v771
        %v788 = vpack.c.b16 %v781, %v780
        %v789 = vpack.c.b16 %v783, %v782
        %v790 = vpack.c.b16 %v785, %v784
        %v791 = vpack.c.b16 %v787, %v786
        %796 = vst [vmem:[#allocation2 + $0x30] sm:$0xff] %v788
        %797 = vst [vmem:[#allocation2 + $0x78] sm:$0xff] %v789
        %798 = vst [vmem:[#allocation2 + $0xc0] sm:$0xff] %v790
        %799 = vst [vmem:[#allocation2 + $0x108] sm:$0xff] %v791
        %v800 = vld [vmem:[%s763] sm:$0xf]
        %v801 = vld [vmem:[%s763 + $0x4] sm:$0x1]
        %v802 = vld [vmem:[%s763 + $0x8] sm:$0xf]
        %v803 = vld [vmem:[%s763 + $0xc] sm:$0x1]
        %v804 = vld [vmem:[%s763 + $0x10] sm:$0xf]
        %v805 = vld [vmem:[%s763 + $0x14] sm:$0x1]
        %v806 = vld [vmem:[%s763 + $0x18] sm:$0xf]
        %v807 = vld [vmem:[%s763 + $0x1c] sm:$0x1]
        %v808 = vld [vmem:[%s763 + $0x20] sm:$0xf]
        %v809 = vld [vmem:[%s763 + $0x24] sm:$0x1]
        %v810 = vld [vmem:[%s763 + $0x28] sm:$0xf]
        %v811 = vld [vmem:[%s763 + $0x2c] sm:$0x1]
        %v812 = vld [vmem:[%s763 + $0x30] sm:$0xf]
        %v813 = vld [vmem:[%s763 + $0x34] sm:$0x1]
        %v814 = vld [vmem:[%s763 + $0x38] sm:$0xf]
        %v815 = vld [vmem:[%s763 + $0x3c] sm:$0x1]
        %v817 = vshrl.u32 %v800, 16
        %v819 = vrot.slane %v817, 4
        %v820 = vshll.u32 %v800, 16
        %v822 = vrot.slane %v820, 5
        %v823 = vor.u32 %v819, %v822
        %v824 = vrot.slane %v823, 4
        %v826 = vshll.u32 %v801, 16
        %v828 = vrot.slane %v826, 5
        %v829 = vsel %vm274, %v824, %v828
        %v831 = vshrl.u32 %v802, 16
        %v833 = vrot.slane %v831, 4
        %v834 = vshll.u32 %v802, 16
        %v836 = vrot.slane %v834, 5
        %v837 = vor.u32 %v833, %v836
        %v838 = vrot.slane %v837, 4
        %v840 = vshll.u32 %v803, 16
        %v842 = vrot.slane %v840, 5
        %v843 = vsel %vm274, %v838, %v842
        %v845 = vshrl.u32 %v804, 16
        %v847 = vrot.slane %v845, 4
        %v848 = vshll.u32 %v804, 16
        %v850 = vrot.slane %v848, 5
        %v851 = vor.u32 %v847, %v850
        %v852 = vrot.slane %v851, 4
        %v854 = vshll.u32 %v805, 16
        %v856 = vrot.slane %v854, 5
        %v857 = vsel %vm274, %v852, %v856
        %v859 = vshrl.u32 %v806, 16
        %v861 = vrot.slane %v859, 4
        %v862 = vshll.u32 %v806, 16
        %v864 = vrot.slane %v862, 5
        %v865 = vor.u32 %v861, %v864
        %v866 = vrot.slane %v865, 4
        %v868 = vshll.u32 %v807, 16
        %v870 = vrot.slane %v868, 5
        %v871 = vsel %vm274, %v866, %v870
        %v873 = vshrl.u32 %v808, 16
        %v875 = vrot.slane %v873, 4
        %v876 = vshll.u32 %v808, 16
        %v878 = vrot.slane %v876, 5
        %v879 = vor.u32 %v875, %v878
        %v880 = vrot.slane %v879, 4
        %v882 = vshll.u32 %v809, 16
        %v884 = vrot.slane %v882, 5
        %v885 = vsel %vm274, %v880, %v884
        %v887 = vshrl.u32 %v810, 16
        %v889 = vrot.slane %v887, 4
        %v890 = vshll.u32 %v810, 16
        %v892 = vrot.slane %v890, 5
        %v893 = vor.u32 %v889, %v892
        %v894 = vrot.slane %v893, 4
        %v896 = vshll.u32 %v811, 16
        %v898 = vrot.slane %v896, 5
        %v899 = vsel %vm274, %v894, %v898
        %v901 = vshrl.u32 %v812, 16
        %v903 = vrot.slane %v901, 4
        %v904 = vshll.u32 %v812, 16
        %v906 = vrot.slane %v904, 5
        %v907 = vor.u32 %v903, %v906
        %v908 = vrot.slane %v907, 4
        %v910 = vshll.u32 %v813, 16
        %v912 = vrot.slane %v910, 5
        %v913 = vsel %vm274, %v908, %v912
        %v915 = vshrl.u32 %v814, 16
        %v917 = vrot.slane %v915, 4
        %v918 = vshll.u32 %v814, 16
        %v920 = vrot.slane %v918, 5
        %v921 = vor.u32 %v917, %v920
        %v922 = vrot.slane %v921, 4
        %v924 = vshll.u32 %v815, 16
        %v926 = vrot.slane %v924, 5
        %v927 = vsel %vm274, %v922, %v926
        %v928 = vunpack.c.l.b16 %v829
        %v929 = vunpack.c.l.b16 %v843
        %v930 = vunpack.c.l.b16 %v857
        %v931 = vunpack.c.l.b16 %v871
        %v932 = vunpack.c.l.b16 %v885
        %v933 = vunpack.c.l.b16 %v899
        %v934 = vunpack.c.l.b16 %v913
        %v935 = vunpack.c.l.b16 %v927
        %v936 = vpack.c.b16 %v929, %v928
        %v937 = vpack.c.b16 %v931, %v930
        %v938 = vpack.c.b16 %v933, %v932
        %v939 = vpack.c.b16 %v935, %v934
        %944 = vst [vmem:[#allocation2 + $0x38] sm:$0xff] %v936
        %945 = vst [vmem:[#allocation2 + $0x80] sm:$0xff] %v937
        %946 = vst [vmem:[#allocation2 + $0xc8] sm:$0xff] %v938
        %947 = vst [vmem:[#allocation2 + $0x110] sm:$0xff] %v939
        %v948 = vld [vmem:[%s763] sm:$0xe]
        %v949 = vld [vmem:[%s763 + $0x4] sm:$0x1]
        %v950 = vld [vmem:[%s763 + $0x8] sm:$0xe]
        %v951 = vld [vmem:[%s763 + $0xc] sm:$0x1]
        %v952 = vld [vmem:[%s763 + $0x10] sm:$0xe]
        %v953 = vld [vmem:[%s763 + $0x14] sm:$0x1]
        %v954 = vld [vmem:[%s763 + $0x18] sm:$0xe]
        %v955 = vld [vmem:[%s763 + $0x1c] sm:$0x1]
        %v956 = vld [vmem:[%s763 + $0x20] sm:$0xe]
        %v957 = vld [vmem:[%s763 + $0x24] sm:$0x1]
        %v958 = vld [vmem:[%s763 + $0x28] sm:$0xe]
        %v959 = vld [vmem:[%s763 + $0x2c] sm:$0x1]
        %v960 = vld [vmem:[%s763 + $0x30] sm:$0xe]
        %v961 = vld [vmem:[%s763 + $0x34] sm:$0x1]
        %v962 = vld [vmem:[%s763 + $0x38] sm:$0xe]
        %v963 = vld [vmem:[%s763 + $0x3c] sm:$0x1]
        %v980 = vrot.slane %v948, 5
        %v981 = vrot.slane %v980, 4
        %v982 = vrot.slane %v949, 5
        %v983 = vsel %vm441, %v981, %v982
        %v984 = vrot.slane %v950, 5
        %v985 = vrot.slane %v984, 4
        %v986 = vrot.slane %v951, 5
        %v987 = vsel %vm441, %v985, %v986
        %v988 = vrot.slane %v952, 5
        %v989 = vrot.slane %v988, 4
        %v990 = vrot.slane %v953, 5
        %v991 = vsel %vm441, %v989, %v990
        %v992 = vrot.slane %v954, 5
        %v993 = vrot.slane %v992, 4
        %v994 = vrot.slane %v955, 5
        %v995 = vsel %vm441, %v993, %v994
        %v996 = vrot.slane %v956, 5
        %v997 = vrot.slane %v996, 4
        %v998 = vrot.slane %v957, 5
        %v999 = vsel %vm441, %v997, %v998
        %v1000 = vrot.slane %v958, 5
        %v1001 = vrot.slane %v1000, 4
        %v1002 = vrot.slane %v959, 5
        %v1003 = vsel %vm441, %v1001, %v1002
        %v1004 = vrot.slane %v960, 5
        %v1005 = vrot.slane %v1004, 4
        %v1006 = vrot.slane %v961, 5
        %v1007 = vsel %vm441, %v1005, %v1006
        %v1008 = vrot.slane %v962, 5
        %v1009 = vrot.slane %v1008, 4
        %v1010 = vrot.slane %v963, 5
        %v1011 = vsel %vm441, %v1009, %v1010
        %v1012 = vunpack.c.l.b16 %v983
        %v1013 = vunpack.c.l.b16 %v987
        %v1014 = vunpack.c.l.b16 %v991
        %v1015 = vunpack.c.l.b16 %v995
        %v1016 = vunpack.c.l.b16 %v999
        %v1017 = vunpack.c.l.b16 %v1003
        %v1018 = vunpack.c.l.b16 %v1007
        %v1019 = vunpack.c.l.b16 %v1011
        %v1020 = vpack.c.b16 %v1013, %v1012
        %v1021 = vpack.c.b16 %v1015, %v1014
        %v1022 = vpack.c.b16 %v1017, %v1016
        %v1023 = vpack.c.b16 %v1019, %v1018
        %1028 = vst [vmem:[#allocation2 + $0x40] sm:$0xff] %v1020
        %1029 = vst [vmem:[#allocation2 + $0x88] sm:$0xff] %v1021
        %1030 = vst [vmem:[#allocation2 + $0xd0] sm:$0xff] %v1022
        %1031 = vst [vmem:[#allocation2 + $0x118] sm:$0xff] %v1023
        %v1032 = vld [vmem:[#allocation2] sm:$0xff]
        %v1033 = vld [vmem:[#allocation2 + $0x8] sm:$0xff]
        %v1034 = vld [vmem:[#allocation2 + $0x10] sm:$0xff]
        %v1035 = vld [vmem:[#allocation2 + $0x18] sm:$0xff]
        %v1036 = vld [vmem:[#allocation2 + $0x20] sm:$0xff]
        %v1037 = vld [vmem:[#allocation2 + $0x28] sm:$0xff]
        %v1038 = vld [vmem:[#allocation2 + $0x30] sm:$0xff]
        %v1039 = vld [vmem:[#allocation2 + $0x38] sm:$0xff]
        %v1040 = vld [vmem:[#allocation2 + $0x40] sm:$0xff]
        %v1041 = vld [vmem:[#allocation2 + $0x48] sm:$0xff]
        %v1042 = vld [vmem:[#allocation2 + $0x50] sm:$0xff]
        %v1043 = vld [vmem:[#allocation2 + $0x58] sm:$0xff]
        %v1044 = vld [vmem:[#allocation2 + $0x60] sm:$0xff]
        %v1045 = vld [vmem:[#allocation2 + $0x68] sm:$0xff]
        %v1046 = vld [vmem:[#allocation2 + $0x70] sm:$0xff]
        %v1047 = vld [vmem:[#allocation2 + $0x78] sm:$0xff]
        %v1048 = vld [vmem:[#allocation2 + $0x80] sm:$0xff]
        %v1049 = vld [vmem:[#allocation2 + $0x88] sm:$0xff]
        %v1050 = vld [vmem:[#allocation2 + $0x90] sm:$0xff]
        %v1051 = vld [vmem:[#allocation2 + $0x98] sm:$0xff]
        %v1052 = vld [vmem:[#allocation2 + $0xa0] sm:$0xff]
        %v1053 = vld [vmem:[#allocation2 + $0xa8] sm:$0xff]
        %v1054 = vld [vmem:[#allocation2 + $0xb0] sm:$0xff]
        %v1055 = vld [vmem:[#allocation2 + $0xb8] sm:$0xff]
        %v1056 = vld [vmem:[#allocation2 + $0xc0] sm:$0xff]
        %v1057 = vld [vmem:[#allocation2 + $0xc8] sm:$0xff]
        %v1058 = vld [vmem:[#allocation2 + $0xd0] sm:$0xff]
        %v1059 = vld [vmem:[#allocation2 + $0xd8] sm:$0xff]
        %v1060 = vld [vmem:[#allocation2 + $0xe0] sm:$0xff]
        %v1061 = vld [vmem:[#allocation2 + $0xe8] sm:$0xff]
        %v1062 = vld [vmem:[#allocation2 + $0xf0] sm:$0xff]
        %v1063 = vld [vmem:[#allocation2 + $0xf8] sm:$0xff]
        %v1064 = vld [vmem:[#allocation2 + $0x100] sm:$0xff]
        %v1065 = vld [vmem:[#allocation2 + $0x108] sm:$0xff]
        %v1066 = vld [vmem:[#allocation2 + $0x110] sm:$0xff]
        %v1067 = vld [vmem:[#allocation2 + $0x118] sm:$0xff]
        %v1068 = vld [vmem:[%s1] sm:$0xf]
        %v1069 = vld [vmem:[%s1 + $0x4] sm:$0xf]
        %v1070 = vld [vmem:[%s1 + $0x8] sm:$0xf]
        %v1071 = vld [vmem:[%s1 + $0xc] sm:$0xf]
        %v1072 = vld [vmem:[%s1 + $0x10] sm:$0xf]
        %v1073 = vld [vmem:[%s1 + $0x14] sm:$0xf]
        %v1074 = vld [vmem:[%s1 + $0x18] sm:$0xf]
        %v1075 = vld [vmem:[%s1 + $0x1c] sm:$0xf]
        %v1076 = vld [vmem:[%s1 + $0x20] sm:$0xf]
        %v1077 = vld [vmem:[%s1 + $0x24] sm:$0xf]
        %v1078 = vld [vmem:[%s1 + $0x28] sm:$0xf]
        %v1079 = vld [vmem:[%s1 + $0x2c] sm:$0xf]
        %v1080 = vld [vmem:[%s1 + $0x30] sm:$0xf]
        %v1081 = vld [vmem:[%s1 + $0x34] sm:$0xf]
        %v1082 = vld [vmem:[%s1 + $0x38] sm:$0xf]
        %v1083 = vld [vmem:[%s1 + $0x3c] sm:$0xf]
        %v1084 = vld [vmem:[%s1 + $0x40] sm:$0xf]
        %v1085 = vld [vmem:[%s1 + $0x44] sm:$0xf]
        %v1086 = vld [vmem:[%s1 + $0x48] sm:$0xf]
        %v1087 = vld [vmem:[%s1 + $0x4c] sm:$0xf]
        %v1088 = vld [vmem:[%s1 + $0x50] sm:$0xf]
        %v1089 = vld [vmem:[%s1 + $0x54] sm:$0xf]
        %v1090 = vld [vmem:[%s1 + $0x58] sm:$0xf]
        %v1091 = vld [vmem:[%s1 + $0x5c] sm:$0xf]
        %v1092 = vld [vmem:[%s1 + $0x60] sm:$0xf]
        %v1093 = vld [vmem:[%s1 + $0x64] sm:$0xf]
        %v1094 = vld [vmem:[%s1 + $0x68] sm:$0xf]
        %v1095 = vld [vmem:[%s1 + $0x6c] sm:$0xf]
        %v1096 = vld [vmem:[%s1 + $0x70] sm:$0xf]
        %v1097 = vld [vmem:[%s1 + $0x74] sm:$0xf]
        %v1098 = vld [vmem:[%s1 + $0x78] sm:$0xf]
        %v1099 = vld [vmem:[%s1 + $0x7c] sm:$0xf]
        %v1100 = vld [vmem:[%s1 + $0x80] sm:$0xf]
        %v1101 = vld [vmem:[%s1 + $0x84] sm:$0xf]
        %v1102 = vld [vmem:[%s1 + $0x88] sm:$0xf]
        %v1103 = vld [vmem:[%s1 + $0x8c] sm:$0xf]
        %v1104 = vld [vmem:[%s1 + $0x90] sm:$0xf]
        %v1105 = vld [vmem:[%s1 + $0x94] sm:$0xf]
        %v1106 = vld [vmem:[%s1 + $0x98] sm:$0xf]
        %v1107 = vld [vmem:[%s1 + $0x9c] sm:$0xf]
        %v1108 = vld [vmem:[%s1 + $0xa0] sm:$0xf]
        %v1109 = vld [vmem:[%s1 + $0xa4] sm:$0xf]
        %v1110 = vld [vmem:[%s1 + $0xa8] sm:$0xf]
        %v1111 = vld [vmem:[%s1 + $0xac] sm:$0xf]
        %v1112 = vld [vmem:[%s1 + $0xb0] sm:$0xf]
        %v1113 = vld [vmem:[%s1 + $0xb4] sm:$0xf]
        %v1114 = vld [vmem:[%s1 + $0xb8] sm:$0xf]
        %v1115 = vld [vmem:[%s1 + $0xbc] sm:$0xf]
        %v1116 = vld [vmem:[%s1 + $0xc0] sm:$0xf]
        %v1117 = vld [vmem:[%s1 + $0xc4] sm:$0xf]
        %v1118 = vld [vmem:[%s1 + $0xc8] sm:$0xf]
        %v1119 = vld [vmem:[%s1 + $0xcc] sm:$0xf]
        %v1120 = vld [vmem:[%s1 + $0xd0] sm:$0xf]
        %v1121 = vld [vmem:[%s1 + $0xd4] sm:$0xf]
        %v1122 = vld [vmem:[%s1 + $0xd8] sm:$0xf]
        %v1123 = vld [vmem:[%s1 + $0xdc] sm:$0xf]
        %v1124 = vld [vmem:[%s1 + $0xe0] sm:$0xf]
        %v1125 = vld [vmem:[%s1 + $0xe4] sm:$0xf]
        %v1126 = vld [vmem:[%s1 + $0xe8] sm:$0xf]
        %v1127 = vld [vmem:[%s1 + $0xec] sm:$0xf]
        %v1128 = vld [vmem:[%s1 + $0xf0] sm:$0xf]
        %v1129 = vld [vmem:[%s1 + $0xf4] sm:$0xf]
        %v1130 = vld [vmem:[%s1 + $0xf8] sm:$0xf]
        %v1131 = vld [vmem:[%s1 + $0xfc] sm:$0xf]
        %v1132 = vld [vmem:[%s1 + $0x100] sm:$0xf]
        %v1133 = vld [vmem:[%s1 + $0x104] sm:$0xf]
        %v1134 = vld [vmem:[%s1 + $0x108] sm:$0xf]
        %v1135 = vld [vmem:[%s1 + $0x10c] sm:$0xf]
        %v1136 = vld [vmem:[%s1 + $0x110] sm:$0xf]
        %v1137 = vld [vmem:[%s1 + $0x114] sm:$0xf]
        %v1138 = vld [vmem:[%s1 + $0x118] sm:$0xf]
        %v1139 = vld [vmem:[%s1 + $0x11c] sm:$0xf]
        %v1140 = vld [vmem:[%s1 + $0x120] sm:$0xf]
        %v1141 = vld [vmem:[%s1 + $0x124] sm:$0xf]
        %v1142 = vld [vmem:[%s1 + $0x128] sm:$0xf]
        %v1143 = vld [vmem:[%s1 + $0x12c] sm:$0xf]
        %v1144 = vld [vmem:[%s1 + $0x130] sm:$0xf]
        %v1145 = vld [vmem:[%s1 + $0x134] sm:$0xf]
        %v1146 = vld [vmem:[%s1 + $0x138] sm:$0xf]
        %v1147 = vld [vmem:[%s1 + $0x13c] sm:$0xf]
        %v1148 = vld [vmem:[%s1 + $0x140] sm:$0xf]
        %v1149 = vld [vmem:[%s1 + $0x144] sm:$0xf]
        %v1150 = vld [vmem:[%s1 + $0x148] sm:$0xf]
        %v1151 = vld [vmem:[%s1 + $0x14c] sm:$0xf]
        %v1152 = vld [vmem:[%s1 + $0x150] sm:$0xf]
        %v1153 = vld [vmem:[%s1 + $0x154] sm:$0xf]
        %v1154 = vld [vmem:[%s1 + $0x158] sm:$0xf]
        %v1155 = vld [vmem:[%s1 + $0x15c] sm:$0xf]
        %v1156 = vld [vmem:[%s1 + $0x160] sm:$0xf]
        %v1157 = vld [vmem:[%s1 + $0x164] sm:$0xf]
        %v1158 = vld [vmem:[%s1 + $0x168] sm:$0xf]
        %v1159 = vld [vmem:[%s1 + $0x16c] sm:$0xf]
        %v1160 = vld [vmem:[%s1 + $0x170] sm:$0xf]
        %v1161 = vld [vmem:[%s1 + $0x174] sm:$0xf]
        %v1162 = vld [vmem:[%s1 + $0x178] sm:$0xf]
        %v1163 = vld [vmem:[%s1 + $0x17c] sm:$0xf]
        %v1164 = vld [vmem:[%s1 + $0x180] sm:$0xf]
        %v1165 = vld [vmem:[%s1 + $0x184] sm:$0xf]
        %v1166 = vld [vmem:[%s1 + $0x188] sm:$0xf]
        %v1167 = vld [vmem:[%s1 + $0x18c] sm:$0xf]
        %v1168 = vld [vmem:[%s1 + $0x190] sm:$0xf]
        %v1169 = vld [vmem:[%s1 + $0x194] sm:$0xf]
        %v1170 = vld [vmem:[%s1 + $0x198] sm:$0xf]
        %v1171 = vld [vmem:[%s1 + $0x19c] sm:$0xf]
        %v1172 = vld [vmem:[%s1 + $0x1a0] sm:$0xf]
        %v1173 = vld [vmem:[%s1 + $0x1a4] sm:$0xf]
        %v1174 = vld [vmem:[%s1 + $0x1a8] sm:$0xf]
        %v1175 = vld [vmem:[%s1 + $0x1ac] sm:$0xf]
        %v1176 = vld [vmem:[%s1 + $0x1b0] sm:$0xf]
        %v1177 = vld [vmem:[%s1 + $0x1b4] sm:$0xf]
        %v1178 = vld [vmem:[%s1 + $0x1b8] sm:$0xf]
        %v1179 = vld [vmem:[%s1 + $0x1bc] sm:$0xf]
        %v1180 = vld [vmem:[%s1 + $0x1c0] sm:$0xf]
        %v1181 = vld [vmem:[%s1 + $0x1c4] sm:$0xf]
        %v1182 = vld [vmem:[%s1 + $0x1c8] sm:$0xf]
        %v1183 = vld [vmem:[%s1 + $0x1cc] sm:$0xf]
        %v1184 = vld [vmem:[%s1 + $0x1d0] sm:$0xf]
        %v1185 = vld [vmem:[%s1 + $0x1d4] sm:$0xf]
        %v1186 = vld [vmem:[%s1 + $0x1d8] sm:$0xf]
        %v1187 = vld [vmem:[%s1 + $0x1dc] sm:$0xf]
        %v1188 = vld [vmem:[%s1 + $0x1e0] sm:$0xf]
        %v1189 = vld [vmem:[%s1 + $0x1e4] sm:$0xf]
        %v1190 = vld [vmem:[%s1 + $0x1e8] sm:$0xf]
        %v1191 = vld [vmem:[%s1 + $0x1ec] sm:$0xf]
        %v1192 = vld [vmem:[%s1 + $0x1f0] sm:$0xf]
        %v1193 = vld [vmem:[%s1 + $0x1f4] sm:$0xf]
        %v1194 = vld [vmem:[%s1 + $0x1f8] sm:$0xf]
        %v1195 = vld [vmem:[%s1 + $0x1fc] sm:$0xf]
        %v1196 = vld [vmem:[%s1 + $0x200] sm:$0xf]
        %v1197 = vld [vmem:[%s1 + $0x204] sm:$0xf]
        %v1198 = vld [vmem:[%s1 + $0x208] sm:$0xf]
        %v1199 = vld [vmem:[%s1 + $0x20c] sm:$0xf]
        %v1200 = vld [vmem:[%s1 + $0x210] sm:$0xf]
        %v1201 = vld [vmem:[%s1 + $0x214] sm:$0xf]
        %v1202 = vld [vmem:[%s1 + $0x218] sm:$0xf]
        %v1203 = vld [vmem:[%s1 + $0x21c] sm:$0xf]
        %v1204 = vld [vmem:[%s1 + $0x220] sm:$0xf]
        %v1205 = vld [vmem:[%s1 + $0x224] sm:$0xf]
        %v1206 = vld [vmem:[%s1 + $0x228] sm:$0xf]
        %v1207 = vld [vmem:[%s1 + $0x22c] sm:$0xf]
        %v1208 = vld [vmem:[%s1 + $0x230] sm:$0xf]
        %v1209 = vld [vmem:[%s1 + $0x234] sm:$0xf]
        %v1210 = vld [vmem:[%s1 + $0x238] sm:$0xf]
        %v1211 = vld [vmem:[%s1 + $0x23c] sm:$0xf]
        %v1212 = vld [vmem:[%s2] sm:$0x1]
        %v1214 = vlaneseq
        %v1215 = vshrl.u32 %v1214, 7
        %v1216 = vsub.s32 0, %v1215
        %v1217 = vrot.slane %v1212, %v1216
        %v1363 = vunpack.c.l.b16 %v1068
        %v1364 = vunpack.c.l.b16 %v1069
        %v1365 = vunpack.c.l.b16 %v1070
        %v1366 = vunpack.c.l.b16 %v1071
        %v1367 = vunpack.c.l.b16 %v1072
        %v1368 = vunpack.c.l.b16 %v1073
        %v1369 = vunpack.c.l.b16 %v1074
        %v1370 = vunpack.c.l.b16 %v1075
        %v1371 = vunpack.c.l.b16 %v1076
        %v1372 = vunpack.c.l.b16 %v1077
        %v1373 = vunpack.c.l.b16 %v1078
        %v1374 = vunpack.c.l.b16 %v1079
        %v1375 = vunpack.c.l.b16 %v1080
        %v1376 = vunpack.c.l.b16 %v1081
        %v1377 = vunpack.c.l.b16 %v1082
        %v1378 = vunpack.c.l.b16 %v1083
        %v1379 = vunpack.c.l.b16 %v1084
        %v1380 = vunpack.c.l.b16 %v1085
        %v1381 = vunpack.c.l.b16 %v1086
        %v1382 = vunpack.c.l.b16 %v1087
        %v1383 = vunpack.c.l.b16 %v1088
        %v1384 = vunpack.c.l.b16 %v1089
        %v1385 = vunpack.c.l.b16 %v1090
        %v1386 = vunpack.c.l.b16 %v1091
        %v1387 = vunpack.c.l.b16 %v1092
        %v1388 = vunpack.c.l.b16 %v1093
        %v1389 = vunpack.c.l.b16 %v1094
        %v1390 = vunpack.c.l.b16 %v1095
        %v1391 = vunpack.c.l.b16 %v1096
        %v1392 = vunpack.c.l.b16 %v1097
        %v1393 = vunpack.c.l.b16 %v1098
        %v1394 = vunpack.c.l.b16 %v1099
        %v1395 = vunpack.c.l.b16 %v1100
        %v1396 = vunpack.c.l.b16 %v1101
        %v1397 = vunpack.c.l.b16 %v1102
        %v1398 = vunpack.c.l.b16 %v1103
        %v1399 = vunpack.c.l.b16 %v1104
        %v1400 = vunpack.c.l.b16 %v1105
        %v1401 = vunpack.c.l.b16 %v1106
        %v1402 = vunpack.c.l.b16 %v1107
        %v1403 = vunpack.c.l.b16 %v1108
        %v1404 = vunpack.c.l.b16 %v1109
        %v1405 = vunpack.c.l.b16 %v1110
        %v1406 = vunpack.c.l.b16 %v1111
        %v1407 = vunpack.c.l.b16 %v1112
        %v1408 = vunpack.c.l.b16 %v1113
        %v1409 = vunpack.c.l.b16 %v1114
        %v1410 = vunpack.c.l.b16 %v1115
        %v1411 = vunpack.c.l.b16 %v1116
        %v1412 = vunpack.c.l.b16 %v1117
        %v1413 = vunpack.c.l.b16 %v1118
        %v1414 = vunpack.c.l.b16 %v1119
        %v1415 = vunpack.c.l.b16 %v1120
        %v1416 = vunpack.c.l.b16 %v1121
        %v1417 = vunpack.c.l.b16 %v1122
        %v1418 = vunpack.c.l.b16 %v1123
        %v1419 = vunpack.c.l.b16 %v1124
        %v1420 = vunpack.c.l.b16 %v1125
        %v1421 = vunpack.c.l.b16 %v1126
        %v1422 = vunpack.c.l.b16 %v1127
        %v1423 = vunpack.c.l.b16 %v1128
        %v1424 = vunpack.c.l.b16 %v1129
        %v1425 = vunpack.c.l.b16 %v1130
        %v1426 = vunpack.c.l.b16 %v1131
        %v1427 = vunpack.c.l.b16 %v1132
        %v1428 = vunpack.c.l.b16 %v1133
        %v1429 = vunpack.c.l.b16 %v1134
        %v1430 = vunpack.c.l.b16 %v1135
        %v1431 = vunpack.c.l.b16 %v1136
        %v1432 = vunpack.c.l.b16 %v1137
        %v1433 = vunpack.c.l.b16 %v1138
        %v1434 = vunpack.c.l.b16 %v1139
        %v1435 = vunpack.c.l.b16 %v1140
        %v1436 = vunpack.c.l.b16 %v1141
        %v1437 = vunpack.c.l.b16 %v1142
        %v1438 = vunpack.c.l.b16 %v1143
        %v1439 = vunpack.c.l.b16 %v1144
        %v1440 = vunpack.c.l.b16 %v1145
        %v1441 = vunpack.c.l.b16 %v1146
        %v1442 = vunpack.c.l.b16 %v1147
        %v1443 = vunpack.c.l.b16 %v1148
        %v1444 = vunpack.c.l.b16 %v1149
        %v1445 = vunpack.c.l.b16 %v1150
        %v1446 = vunpack.c.l.b16 %v1151
        %v1447 = vunpack.c.l.b16 %v1152
        %v1448 = vunpack.c.l.b16 %v1153
        %v1449 = vunpack.c.l.b16 %v1154
        %v1450 = vunpack.c.l.b16 %v1155
        %v1451 = vunpack.c.l.b16 %v1156
        %v1452 = vunpack.c.l.b16 %v1157
        %v1453 = vunpack.c.l.b16 %v1158
        %v1454 = vunpack.c.l.b16 %v1159
        %v1455 = vunpack.c.l.b16 %v1160
        %v1456 = vunpack.c.l.b16 %v1161
        %v1457 = vunpack.c.l.b16 %v1162
        %v1458 = vunpack.c.l.b16 %v1163
        %v1459 = vunpack.c.l.b16 %v1164
        %v1460 = vunpack.c.l.b16 %v1165
        %v1461 = vunpack.c.l.b16 %v1166
        %v1462 = vunpack.c.l.b16 %v1167
        %v1463 = vunpack.c.l.b16 %v1168
        %v1464 = vunpack.c.l.b16 %v1169
        %v1465 = vunpack.c.l.b16 %v1170
        %v1466 = vunpack.c.l.b16 %v1171
        %v1467 = vunpack.c.l.b16 %v1172
        %v1468 = vunpack.c.l.b16 %v1173
        %v1469 = vunpack.c.l.b16 %v1174
        %v1470 = vunpack.c.l.b16 %v1175
        %v1471 = vunpack.c.l.b16 %v1176
        %v1472 = vunpack.c.l.b16 %v1177
        %v1473 = vunpack.c.l.b16 %v1178
        %v1474 = vunpack.c.l.b16 %v1179
        %v1475 = vunpack.c.l.b16 %v1180
        %v1476 = vunpack.c.l.b16 %v1181
        %v1477 = vunpack.c.l.b16 %v1182
        %v1478 = vunpack.c.l.b16 %v1183
        %v1479 = vunpack.c.l.b16 %v1184
        %v1480 = vunpack.c.l.b16 %v1185
        %v1481 = vunpack.c.l.b16 %v1186
        %v1482 = vunpack.c.l.b16 %v1187
        %v1483 = vunpack.c.l.b16 %v1188
        %v1484 = vunpack.c.l.b16 %v1189
        %v1485 = vunpack.c.l.b16 %v1190
        %v1486 = vunpack.c.l.b16 %v1191
        %v1487 = vunpack.c.l.b16 %v1192
        %v1488 = vunpack.c.l.b16 %v1193
        %v1489 = vunpack.c.l.b16 %v1194
        %v1490 = vunpack.c.l.b16 %v1195
        %v1491 = vunpack.c.l.b16 %v1196
        %v1492 = vunpack.c.l.b16 %v1197
        %v1493 = vunpack.c.l.b16 %v1198
        %v1494 = vunpack.c.l.b16 %v1199
        %v1495 = vunpack.c.l.b16 %v1200
        %v1496 = vunpack.c.l.b16 %v1201
        %v1497 = vunpack.c.l.b16 %v1202
        %v1498 = vunpack.c.l.b16 %v1203
        %v1499 = vunpack.c.l.b16 %v1204
        %v1500 = vunpack.c.l.b16 %v1205
        %v1501 = vunpack.c.l.b16 %v1206
        %v1502 = vunpack.c.l.b16 %v1207
        %v1503 = vunpack.c.l.b16 %v1208
        %v1504 = vunpack.c.l.b16 %v1209
        %v1505 = vunpack.c.l.b16 %v1210
        %v1506 = vunpack.c.l.b16 %v1211
        %v1507 = vpack.c.b16 %v1364, %v1363
        %v1508 = vpack.c.b16 %v1366, %v1365
        %v1509 = vpack.c.b16 %v1368, %v1367
        %v1510 = vpack.c.b16 %v1370, %v1369
        %v1511 = vpack.c.b16 %v1372, %v1371
        %v1512 = vpack.c.b16 %v1374, %v1373
        %v1513 = vpack.c.b16 %v1376, %v1375
        %v1514 = vpack.c.b16 %v1378, %v1377
        %v1515 = vpack.c.b16 %v1380, %v1379
        %v1516 = vpack.c.b16 %v1382, %v1381
        %v1517 = vpack.c.b16 %v1384, %v1383
        %v1518 = vpack.c.b16 %v1386, %v1385
        %v1519 = vpack.c.b16 %v1388, %v1387
        %v1520 = vpack.c.b16 %v1390, %v1389
        %v1521 = vpack.c.b16 %v1392, %v1391
        %v1522 = vpack.c.b16 %v1394, %v1393
        %v1523 = vpack.c.b16 %v1396, %v1395
        %v1524 = vpack.c.b16 %v1398, %v1397
        %v1525 = vpack.c.b16 %v1400, %v1399
        %v1526 = vpack.c.b16 %v1402, %v1401
        %v1527 = vpack.c.b16 %v1404, %v1403
        %v1528 = vpack.c.b16 %v1406, %v1405
        %v1529 = vpack.c.b16 %v1408, %v1407
        %v1530 = vpack.c.b16 %v1410, %v1409
        %v1531 = vpack.c.b16 %v1412, %v1411
        %v1532 = vpack.c.b16 %v1414, %v1413
        %v1533 = vpack.c.b16 %v1416, %v1415
        %v1534 = vpack.c.b16 %v1418, %v1417
        %v1535 = vpack.c.b16 %v1420, %v1419
        %v1536 = vpack.c.b16 %v1422, %v1421
        %v1537 = vpack.c.b16 %v1424, %v1423
        %v1538 = vpack.c.b16 %v1426, %v1425
        %v1539 = vpack.c.b16 %v1428, %v1427
        %v1540 = vpack.c.b16 %v1430, %v1429
        %v1541 = vpack.c.b16 %v1432, %v1431
        %v1542 = vpack.c.b16 %v1434, %v1433
        %v1543 = vpack.c.b16 %v1436, %v1435
        %v1544 = vpack.c.b16 %v1438, %v1437
        %v1545 = vpack.c.b16 %v1440, %v1439
        %v1546 = vpack.c.b16 %v1442, %v1441
        %v1547 = vpack.c.b16 %v1444, %v1443
        %v1548 = vpack.c.b16 %v1446, %v1445
        %v1549 = vpack.c.b16 %v1448, %v1447
        %v1550 = vpack.c.b16 %v1450, %v1449
        %v1551 = vpack.c.b16 %v1452, %v1451
        %v1552 = vpack.c.b16 %v1454, %v1453
        %v1553 = vpack.c.b16 %v1456, %v1455
        %v1554 = vpack.c.b16 %v1458, %v1457
        %v1555 = vpack.c.b16 %v1460, %v1459
        %v1556 = vpack.c.b16 %v1462, %v1461
        %v1557 = vpack.c.b16 %v1464, %v1463
        %v1558 = vpack.c.b16 %v1466, %v1465
        %v1559 = vpack.c.b16 %v1468, %v1467
        %v1560 = vpack.c.b16 %v1470, %v1469
        %v1561 = vpack.c.b16 %v1472, %v1471
        %v1562 = vpack.c.b16 %v1474, %v1473
        %v1563 = vpack.c.b16 %v1476, %v1475
        %v1564 = vpack.c.b16 %v1478, %v1477
        %v1565 = vpack.c.b16 %v1480, %v1479
        %v1566 = vpack.c.b16 %v1482, %v1481
        %v1567 = vpack.c.b16 %v1484, %v1483
        %v1568 = vpack.c.b16 %v1486, %v1485
        %v1569 = vpack.c.b16 %v1488, %v1487
        %v1570 = vpack.c.b16 %v1490, %v1489
        %v1571 = vpack.c.b16 %v1492, %v1491
        %v1572 = vpack.c.b16 %v1494, %v1493
        %v1573 = vpack.c.b16 %v1496, %v1495
        %v1574 = vpack.c.b16 %v1498, %v1497
        %v1575 = vpack.c.b16 %v1500, %v1499
        %v1576 = vpack.c.b16 %v1502, %v1501
        %v1577 = vpack.c.b16 %v1504, %v1503
        %v1578 = vpack.c.b16 %v1506, %v1505
        %1651 = vmatprep.subr.bf16.mxu0 0
        %1652 = vmatpush1.bf16.msra.mxu0 %v1507
        %1653 = vmatprep.subr.bf16.mxu0 0
        %1654 = vmatpush1.bf16.msra.mxu0 %v1508
        %1655 = vmatprep.subr.bf16.mxu0 0
        %1656 = vmatpush1.bf16.msra.mxu0 %v1509
        %1657 = vmatprep.subr.bf16.mxu0 0
        %1658 = vmatpush1.bf16.msra.mxu0 %v1510
        %1659 = vmatprep.subr.bf16.mxu0 0
        %1660 = vmatpush1.bf16.msra.mxu0 %v1511
        %1661 = vmatprep.subr.bf16.mxu0 0
        %1662 = vmatpush1.bf16.msra.mxu0 %v1512
        %1663 = vmatprep.subr.bf16.mxu0 0
        %1664 = vmatpush1.bf16.msra.mxu0 %v1513
        %1665 = vmatprep.subr.bf16.mxu0 0
        %1666 = vmatpush1.bf16.msra.mxu0 %v1514
        %1667 = vmatprep.subr.bf16.mxu0 0
        %1668 = vmatpush1.bf16.msra.mxu0 %v1515
        %1669 = vmatprep.subr.bf16.mxu0 0
        %1670 = vmatpush1.bf16.msra.mxu0 %v1516
        %1671 = vmatprep.subr.bf16.mxu0 0
        %1672 = vmatpush1.bf16.msra.mxu0 %v1517
        %1673 = vmatprep.subr.bf16.mxu0 0
        %1674 = vmatpush1.bf16.msra.mxu0 %v1518
        %1675 = vmatprep.subr.bf16.mxu0 0
        %1676 = vmatpush1.bf16.msra.mxu0 %v1519
        %1677 = vmatprep.subr.bf16.mxu0 0
        %1678 = vmatpush1.bf16.msra.mxu0 %v1520
        %1679 = vmatprep.subr.bf16.mxu0 0
        %1680 = vmatpush1.bf16.msra.mxu0 %v1521
        %1681 = vmatprep.subr.bf16.mxu0 0
        %1682 = vmatpush1.bf16.msra.mxu0 %v1522
        %1683 = vmatprep.mubr.bf16.mxu0 %v1033
        %1684 = vmatmul.mubr.bf16.gmra.mrb[0].mxu0 %v1032
        %v1685 = vpop.f32.mrb[0].mxu0
        %v1686 = vadd.f32 %v1217, %v1685
        %v1687 = vpop.f32.mrb[0].mxu0
        %v1688 = vpop.f32.mrb[0].mxu0
        %v1689 = vadd.f32 %v1217, %v1688
        %v1690 = vpop.f32.mrb[0].mxu0
        %1691 = vmatprep.mubr.bf16.mxu0 %v1042
        %1692 = vmatmul.mubr.bf16.gmra.mrb[0].mxu0 %v1041
        %v1693 = vpop.f32.mrb[0].mxu0
        %v1694 = vadd.f32 %v1217, %v1693
        %v1695 = vpop.f32.mrb[0].mxu0
        %v1696 = vpop.f32.mrb[0].mxu0
        %v1697 = vadd.f32 %v1217, %v1696
        %v1698 = vpop.f32.mrb[0].mxu0
        %1699 = vmatprep.mubr.bf16.mxu0 %v1051
        %1700 = vmatmul.mubr.bf16.gmra.mrb[0].mxu0 %v1050
        %v1701 = vpop.f32.mrb[0].mxu0
        %v1702 = vadd.f32 %v1217, %v1701
        %v1703 = vpop.f32.mrb[0].mxu0
        %v1704 = vpop.f32.mrb[0].mxu0
        %v1705 = vadd.f32 %v1217, %v1704
        %v1706 = vpop.f32.mrb[0].mxu0
        %1707 = vmatprep.mubr.bf16.mxu0 %v1060
        %1708 = vmatmul.mubr.bf16.gmra.mrb[0].mxu0 %v1059
        %v1709 = vpop.f32.mrb[0].mxu0
        %v1710 = vadd.f32 %v1217, %v1709
        %v1711 = vpop.f32.mrb[0].mxu0
        %v1712 = vpop.f32.mrb[0].mxu0
        %v1713 = vadd.f32 %v1217, %v1712
        %v1714 = vpop.f32.mrb[0].mxu0
        %1715 = vdwg.mxu0
        %1716 = vmatprep.subr.bf16.mxu0 0
        %1717 = vmatpush1.bf16.msra.mxu0 %v1523
        %1718 = vmatprep.subr.bf16.mxu0 0
        %1719 = vmatpush1.bf16.msra.mxu0 %v1524
        %1720 = vmatprep.subr.bf16.mxu0 0
        %1721 = vmatpush1.bf16.msra.mxu0 %v1525
        %1722 = vmatprep.subr.bf16.mxu0 0
        %1723 = vmatpush1.bf16.msra.mxu0 %v1526
        %1724 = vmatprep.subr.bf16.mxu0 0
        %1725 = vmatpush1.bf16.msra.mxu0 %v1527
        %1726 = vmatprep.subr.bf16.mxu0 0
        %1727 = vmatpush1.bf16.msra.mxu0 %v1528
        %1728 = vmatprep.subr.bf16.mxu0 0
        %1729 = vmatpush1.bf16.msra.mxu0 %v1529
        %1730 = vmatprep.subr.bf16.mxu0 0
        %1731 = vmatpush1.bf16.msra.mxu0 %v1530
        %1732 = vmatprep.subr.bf16.mxu0 0
        %1733 = vmatpush1.bf16.msra.mxu0 %v1531
        %1734 = vmatprep.subr.bf16.mxu0 0
        %1735 = vmatpush1.bf16.msra.mxu0 %v1532
        %1736 = vmatprep.subr.bf16.mxu0 0
        %1737 = vmatpush1.bf16.msra.mxu0 %v1533
        %1738 = vmatprep.subr.bf16.mxu0 0
        %1739 = vmatpush1.bf16.msra.mxu0 %v1534
        %1740 = vmatprep.subr.bf16.mxu0 0
        %1741 = vmatpush1.bf16.msra.mxu0 %v1535
        %1742 = vmatprep.subr.bf16.mxu0 0
        %1743 = vmatpush1.bf16.msra.mxu0 %v1536
        %1744 = vmatprep.subr.bf16.mxu0 0
        %1745 = vmatpush1.bf16.msra.mxu0 %v1537
        %1746 = vmatprep.subr.bf16.mxu0 0
        %1747 = vmatpush1.bf16.msra.mxu0 %v1538
        %1748 = vmatprep.mubr.bf16.mxu0 %v1035
        %1749 = vmatmul.mubr.bf16.gmra.mrb[0].mxu0 %v1034
        %v1750 = vpop.f32.mrb[0].mxu0
        %v1751 = vadd.f32 %v1686, %v1750
        %v1752 = vpop.f32.mrb[0].mxu0
        %v1753 = vpop.f32.mrb[0].mxu0
        %v1754 = vadd.f32 %v1689, %v1753
        %v1755 = vpop.f32.mrb[0].mxu0
        %1756 = vmatprep.mubr.bf16.mxu0 %v1044
        %1757 = vmatmul.mubr.bf16.gmra.mrb[0].mxu0 %v1043
        %v1758 = vpop.f32.mrb[0].mxu0
        %v1759 = vadd.f32 %v1694, %v1758
        %v1760 = vpop.f32.mrb[0].mxu0
        %v1761 = vpop.f32.mrb[0].mxu0
        %v1762 = vadd.f32 %v1697, %v1761
        %v1763 = vpop.f32.mrb[0].mxu0
        %1764 = vmatprep.mubr.bf16.mxu0 %v1053
        %1765 = vmatmul.mubr.bf16.gmra.mrb[0].mxu0 %v1052
        %v1766 = vpop.f32.mrb[0].mxu0
        %v1767 = vadd.f32 %v1702, %v1766
        %v1768 = vpop.f32.mrb[0].mxu0
        %v1769 = vpop.f32.mrb[0].mxu0
        %v1770 = vadd.f32 %v1705, %v1769
        %v1771 = vpop.f32.mrb[0].mxu0
        %1772 = vmatprep.mubr.bf16.mxu0 %v1062
        %1773 = vmatmul.mubr.bf16.gmra.mrb[0].mxu0 %v1061
        %v1774 = vpop.f32.mrb[0].mxu0
        %v1775 = vadd.f32 %v1710, %v1774
        %v1776 = vpop.f32.mrb[0].mxu0
        %v1777 = vpop.f32.mrb[0].mxu0
        %v1778 = vadd.f32 %v1713, %v1777
        %v1779 = vpop.f32.mrb[0].mxu0
        %1780 = vdwg.mxu0
        %1781 = vmatprep.subr.bf16.mxu0 0
        %1782 = vmatpush1.bf16.msra.mxu0 %v1539
        %1783 = vmatprep.subr.bf16.mxu0 0
        %1784 = vmatpush1.bf16.msra.mxu0 %v1540
        %1785 = vmatprep.subr.bf16.mxu0 0
        %1786 = vmatpush1.bf16.msra.mxu0 %v1541
        %1787 = vmatprep.subr.bf16.mxu0 0
        %1788 = vmatpush1.bf16.msra.mxu0 %v1542
        %1789 = vmatprep.subr.bf16.mxu0 0
        %1790 = vmatpush1.bf16.msra.mxu0 %v1543
        %1791 = vmatprep.subr.bf16.mxu0 0
        %1792 = vmatpush1.bf16.msra.mxu0 %v1544
        %1793 = vmatprep.subr.bf16.mxu0 0
        %1794 = vmatpush1.bf16.msra.mxu0 %v1545
        %1795 = vmatprep.subr.bf16.mxu0 0
        %1796 = vmatpush1.bf16.msra.mxu0 %v1546
        %1797 = vmatprep.subr.bf16.mxu0 0
        %1798 = vmatpush1.bf16.msra.mxu0 %v1547
        %1799 = vmatprep.subr.bf16.mxu0 0
        %1800 = vmatpush1.bf16.msra.mxu0 %v1548
        %1801 = vmatprep.subr.bf16.mxu0 0
        %1802 = vmatpush1.bf16.msra.mxu0 %v1549
        %1803 = vmatprep.subr.bf16.mxu0 0
        %1804 = vmatpush1.bf16.msra.mxu0 %v1550
        %1805 = vmatprep.subr.bf16.mxu0 0
        %1806 = vmatpush1.bf16.msra.mxu0 %v1551
        %1807 = vmatprep.subr.bf16.mxu0 0
        %1808 = vmatpush1.bf16.msra.mxu0 %v1552
        %1809 = vmatprep.subr.bf16.mxu0 0
        %1810 = vmatpush1.bf16.msra.mxu0 %v1553
        %1811 = vmatprep.subr.bf16.mxu0 0
        %1812 = vmatpush1.bf16.msra.mxu0 %v1554
        %1813 = vmatprep.mubr.bf16.mxu0 %v1037
        %1814 = vmatmul.mubr.bf16.gmra.mrb[0].mxu0 %v1036
        %v1815 = vpop.f32.mrb[0].mxu0
        %v1816 = vadd.f32 %v1751, %v1815
        %v1817 = vpop.f32.mrb[0].mxu0
        %v1818 = vpop.f32.mrb[0].mxu0
        %v1819 = vadd.f32 %v1754, %v1818
        %v1820 = vpop.f32.mrb[0].mxu0
        %1821 = vmatprep.mubr.bf16.mxu0 %v1046
        %1822 = vmatmul.mubr.bf16.gmra.mrb[0].mxu0 %v1045
        %v1823 = vpop.f32.mrb[0].mxu0
        %v1824 = vadd.f32 %v1759, %v1823
        %v1825 = vpop.f32.mrb[0].mxu0
        %v1826 = vpop.f32.mrb[0].mxu0
        %v1827 = vadd.f32 %v1762, %v1826
        %v1828 = vpop.f32.mrb[0].mxu0
        %1829 = vmatprep.mubr.bf16.mxu0 %v1055
        %1830 = vmatmul.mubr.bf16.gmra.mrb[0].mxu0 %v1054
        %v1831 = vpop.f32.mrb[0].mxu0
        %v1832 = vadd.f32 %v1767, %v1831
        %v1833 = vpop.f32.mrb[0].mxu0
        %v1834 = vpop.f32.mrb[0].mxu0
        %v1835 = vadd.f32 %v1770, %v1834
        %v1836 = vpop.f32.mrb[0].mxu0
        %1837 = vmatprep.mubr.bf16.mxu0 %v1064
        %1838 = vmatmul.mubr.bf16.gmra.mrb[0].mxu0 %v1063
        %v1839 = vpop.f32.mrb[0].mxu0
        %v1840 = vadd.f32 %v1775, %v1839
        %v1841 = vpop.f32.mrb[0].mxu0
        %v1842 = vpop.f32.mrb[0].mxu0
        %v1843 = vadd.f32 %v1778, %v1842
        %v1844 = vpop.f32.mrb[0].mxu0
        %1845 = vdwg.mxu0
        %1846 = vmatprep.subr.bf16.mxu0 0
        %1847 = vmatpush1.bf16.msra.mxu0 %v1555
        %1848 = vmatprep.subr.bf16.mxu0 0
        %1849 = vmatpush1.bf16.msra.mxu0 %v1556
        %1850 = vmatprep.subr.bf16.mxu0 0
        %1851 = vmatpush1.bf16.msra.mxu0 %v1557
        %1852 = vmatprep.subr.bf16.mxu0 0
        %1853 = vmatpush1.bf16.msra.mxu0 %v1558
        %1854 = vmatprep.subr.bf16.mxu0 0
        %1855 = vmatpush1.bf16.msra.mxu0 %v1559
        %1856 = vmatprep.subr.bf16.mxu0 0
        %1857 = vmatpush1.bf16.msra.mxu0 %v1560
        %1858 = vmatprep.subr.bf16.mxu0 0
        %1859 = vmatpush1.bf16.msra.mxu0 %v1561
        %1860 = vmatprep.subr.bf16.mxu0 0
        %1861 = vmatpush1.bf16.msra.mxu0 %v1562
        %1862 = vmatprep.subr.bf16.mxu0 0
        %1863 = vmatpush1.bf16.msra.mxu0 %v1563
        %1864 = vmatprep.subr.bf16.mxu0 0
        %1865 = vmatpush1.bf16.msra.mxu0 %v1564
        %1866 = vmatprep.subr.bf16.mxu0 0
        %1867 = vmatpush1.bf16.msra.mxu0 %v1565
        %1868 = vmatprep.subr.bf16.mxu0 0
        %1869 = vmatpush1.bf16.msra.mxu0 %v1566
        %1870 = vmatprep.subr.bf16.mxu0 0
        %1871 = vmatpush1.bf16.msra.mxu0 %v1567
        %1872 = vmatprep.subr.bf16.mxu0 0
        %1873 = vmatpush1.bf16.msra.mxu0 %v1568
        %1874 = vmatprep.subr.bf16.mxu0 0
        %1875 = vmatpush1.bf16.msra.mxu0 %v1569
        %1876 = vmatprep.subr.bf16.mxu0 0
        %1877 = vmatpush1.bf16.msra.mxu0 %v1570
        %1878 = vmatprep.mubr.bf16.mxu0 %v1039
        %1879 = vmatmul.mubr.bf16.gmra.mrb[0].mxu0 %v1038
        %v1880 = vpop.f32.mrb[0].mxu0
        %v1881 = vadd.f32 %v1816, %v1880
        %v1882 = vpop.f32.mrb[0].mxu0
        %v1883 = vpop.f32.mrb[0].mxu0
        %v1884 = vadd.f32 %v1819, %v1883
        %v1885 = vpop.f32.mrb[0].mxu0
        %1886 = vmatprep.mubr.bf16.mxu0 %v1048
        %1887 = vmatmul.mubr.bf16.gmra.mrb[0].mxu0 %v1047
        %v1888 = vpop.f32.mrb[0].mxu0
        %v1889 = vadd.f32 %v1824, %v1888
        %v1890 = vpop.f32.mrb[0].mxu0
        %v1891 = vpop.f32.mrb[0].mxu0
        %v1892 = vadd.f32 %v1827, %v1891
        %v1893 = vpop.f32.mrb[0].mxu0
        %1894 = vmatprep.mubr.bf16.mxu0 %v1057
        %1895 = vmatmul.mubr.bf16.gmra.mrb[0].mxu0 %v1056
        %v1896 = vpop.f32.mrb[0].mxu0
        %v1897 = vadd.f32 %v1832, %v1896
        %v1898 = vpop.f32.mrb[0].mxu0
        %v1899 = vpop.f32.mrb[0].mxu0
        %v1900 = vadd.f32 %v1835, %v1899
        %v1901 = vpop.f32.mrb[0].mxu0
        %1902 = vmatprep.mubr.bf16.mxu0 %v1066
        %1903 = vmatmul.mubr.bf16.gmra.mrb[0].mxu0 %v1065
        %v1904 = vpop.f32.mrb[0].mxu0
        %v1905 = vadd.f32 %v1840, %v1904
        %v1906 = vpop.f32.mrb[0].mxu0
        %v1907 = vpop.f32.mrb[0].mxu0
        %v1908 = vadd.f32 %v1843, %v1907
        %v1909 = vpop.f32.mrb[0].mxu0
        %1910 = vdwg.mxu0
        %1911 = vmatprep.subr.bf16.mxu0 0
        %1912 = vmatpush1.bf16.msra.mxu0 %v1571
        %1913 = vmatprep.subr.bf16.mxu0 0
        %1914 = vmatpush1.bf16.msra.mxu0 %v1572
        %1915 = vmatprep.subr.bf16.mxu0 0
        %1916 = vmatpush1.bf16.msra.mxu0 %v1573
        %1917 = vmatprep.subr.bf16.mxu0 0
        %1918 = vmatpush1.bf16.msra.mxu0 %v1574
        %1919 = vmatprep.subr.bf16.mxu0 0
        %1920 = vmatpush1.bf16.msra.mxu0 %v1575
        %1921 = vmatprep.subr.bf16.mxu0 0
        %1922 = vmatpush1.bf16.msra.mxu0 %v1576
        %1923 = vmatprep.subr.bf16.mxu0 0
        %1924 = vmatpush1.bf16.msra.mxu0 %v1577
        %1925 = vmatprep.subr.bf16.mxu0 0
        %1926 = vmatpush1.bf16.msra.mxu0 %v1578
        %1927 = vmatprep.subr.bf16.mxu0 0
        %1928 = vmatpush1.bf16.msra.mxu0 0
        %1929 = vmatprep.subr.bf16.mxu0 0
        %1930 = vmatpush1.bf16.msra.mxu0 0
        %1931 = vmatprep.subr.bf16.mxu0 0
        %1932 = vmatpush1.bf16.msra.mxu0 0
        %1933 = vmatprep.subr.bf16.mxu0 0
        %1934 = vmatpush1.bf16.msra.mxu0 0
        %1935 = vmatprep.subr.bf16.mxu0 0
        %1936 = vmatpush1.bf16.msra.mxu0 0
        %1937 = vmatprep.subr.bf16.mxu0 0
        %1938 = vmatpush1.bf16.msra.mxu0 0
        %1939 = vmatprep.subr.bf16.mxu0 0
        %1940 = vmatpush1.bf16.msra.mxu0 0
        %1941 = vmatprep.subr.bf16.mxu0 0
        %1942 = vmatpush1.bf16.msra.mxu0 0
        %1943 = vmatprep.mubr.bf16.mxu0 0
        %1944 = vmatmul.mubr.bf16.gmra.mrb[0].mxu0 %v1040
        %v1945 = vpop.f32.mrb[0].mxu0
        %v1946 = vadd.f32 %v1881, %v1945
        %v1947 = vpop.f32.mrb[0].mxu0
        %v1948 = vpop.f32.mrb[0].mxu0
        %v1949 = vadd.f32 %v1884, %v1948
        %v1950 = vpop.f32.mrb[0].mxu0
        %1951 = vmatprep.mubr.bf16.mxu0 0
        %1952 = vmatmul.mubr.bf16.gmra.mrb[0].mxu0 %v1049
        %v1953 = vpop.f32.mrb[0].mxu0
        %v1954 = vadd.f32 %v1889, %v1953
        %v1955 = vpop.f32.mrb[0].mxu0
        %v1956 = vpop.f32.mrb[0].mxu0
        %v1957 = vadd.f32 %v1892, %v1956
        %v1958 = vpop.f32.mrb[0].mxu0
        %1959 = vmatprep.mubr.bf16.mxu0 0
        %1960 = vmatmul.mubr.bf16.gmra.mrb[0].mxu0 %v1058
        %v1961 = vpop.f32.mrb[0].mxu0
        %v1962 = vadd.f32 %v1897, %v1961
        %v1963 = vpop.f32.mrb[0].mxu0
        %v1964 = vpop.f32.mrb[0].mxu0
        %v1965 = vadd.f32 %v1900, %v1964
        %v1966 = vpop.f32.mrb[0].mxu0
        %1967 = vmatprep.mubr.bf16.mxu0 0
        %1968 = vmatmul.mubr.bf16.gmra.mrb[0].mxu0 %v1067
        %v1969 = vpop.f32.mrb[0].mxu0
        %v1970 = vadd.f32 %v1905, %v1969
        %v1971 = vpop.f32.mrb[0].mxu0
        %v1972 = vpop.f32.mrb[0].mxu0
        %v1973 = vadd.f32 %v1908, %v1972
        %v1974 = vpop.f32.mrb[0].mxu0
        %1975 = vdwg.mxu0
        %v1976 = vld [vmem:[%s216] sm:$0xf]
        %v1977 = vld [vmem:[%s216 + $0x4] sm:$0xf]
        %v1978 = vld [vmem:[%s216 + $0x8] sm:$0xf]
        %v1979 = vld [vmem:[%s216 + $0xc] sm:$0xf]
        %v1980 = vld [vmem:[%s216 + $0x10] sm:$0xf]
        %v1981 = vld [vmem:[%s216 + $0x14] sm:$0xf]
        %v1982 = vld [vmem:[%s216 + $0x18] sm:$0xf]
        %v1983 = vld [vmem:[%s216 + $0x1c] sm:$0xf]
        %v1984 = vunpack.c.l.bf16 %v1976
        %v1985 = vunpack.c.l.bf16 %v1977
        %v1986 = vunpack.c.l.bf16 %v1978
        %v1987 = vunpack.c.l.bf16 %v1979
        %v1988 = vunpack.c.l.bf16 %v1980
        %v1989 = vunpack.c.l.bf16 %v1981
        %v1990 = vunpack.c.l.bf16 %v1982
        %v1991 = vunpack.c.l.bf16 %v1983
        %v1992 = vadd.f32 %v1946, %v1984
        %v1993 = vadd.f32 %v1949, %v1985
        %v1994 = vadd.f32 %v1954, %v1986
        %v1995 = vadd.f32 %v1957, %v1987
        %v1996 = vadd.f32 %v1962, %v1988
        %v1997 = vadd.f32 %v1965, %v1989
        %v1998 = vadd.f32 %v1970, %v1990
        %v1999 = vadd.f32 %v1973, %v1991
        %v2000 = vmax.f32 %v1992, 0.0
        %v2001 = vmax.f32 %v1993, 0.0
        %v2002 = vmax.f32 %v1994, 0.0
        %v2003 = vmax.f32 %v1995, 0.0
        %v2004 = vmax.f32 %v1996, 0.0
        %v2005 = vmax.f32 %v1997, 0.0
        %v2006 = vmax.f32 %v1998, 0.0
        %v2007 = vmax.f32 %v1999, 0.0
        %2008 = vst [vmem:[%s206] sm:$0xff] %v2000
        %2009 = vst [vmem:[%s206 + $0x8] sm:$0xff] %v2001
        %2010 = vst [vmem:[%s206 + $0x10] sm:$0xff] %v2002
        %2011 = vst [vmem:[%s206 + $0x18] sm:$0xff] %v2003
        %2012 = vst [vmem:[%s206 + $0x20] sm:$0xff] %v2004
        %2013 = vst [vmem:[%s206 + $0x28] sm:$0xff] %v2005
        %2014 = vst [vmem:[%s206 + $0x30] sm:$0xff] %v2006
        %2015 = vst [vmem:[%s206 + $0x38] sm:$0xff] %v2007
        %s2016 = sand.u32 %s120, 1
        %s2017 = scalar_lea.sflag [#allocation4], %s2016
        %s2018 = sand.u32 %s120, 1
        %s2019 = smul.addr %s2018, 64
        %s2020 = scalar_lea.vmem [#allocation3], %s2019
        // Predicated region
        $region37: #{_forward_impl.3} parent=35 // pred_check
          %p2021 = pneg %p130
        $region38: #{_forward_impl.3} parent=35 // pred_check_branch
          %2023 = sbr.rel (%p2021) target = $region40
        $region39: #{_forward_impl.3} parent=35 // pred_region
          %s2024 = smul.u32 8, %s18
          %s2026 = ssub.s32 1024, 1024
          %2027 = vsyncadd %s2017, %s2026
          %s2028 = smul.addr %s2024, 128
          %s2029 = scalar_lea.hbm %s4, %s2028
          %s2030 = sshll.u32 %s2020, 4
          %s2031 = int_to_ptr.vmem [resolvable:$true] %s2030
          %2036 = dma.vmem_to_hbm [thread:$0]  %s2031, 1024, %s2029, %s2017, 128, 128, 8
        $region40: #{_forward_impl.3} parent=35 // pred_fallthru
          _
      $region36: #{_forward_impl.3} parent=5 // pred_fallthru
        _
      %p2037 = scmp.le.s32.totalorder 2, %s13
      // Predicated region
      $region41: #{_forward_impl.3} parent=5 // pred_check
        %p2038 = pneg %p2037
      $region42: #{_forward_impl.3} parent=5 // pred_check_branch
        %2040 = sbr.rel (%p2038) target = $region44
      $region43: #{_forward_impl.3} parent=5 // pred_region
        %s2041 = ssub.s32 %s13, 2
        // Predicated region
        $region45: #{_forward_impl.3} parent=43 // pred_check
          %p2042 = pneg %p136
        $region46: #{_forward_impl.3} parent=43 // pred_check_branch
          %2044 = sbr.rel (%p2042) target = $region48
        $region47: #{_forward_impl.3} parent=43 // pred_region
          %s2045 = sand.u32 %s121, 1
          %s2046 = scalar_lea.sflag [#allocation4], %s2045
          %s2047 = sand.u32 %s121, 1
          %s2048 = smul.addr %s2047, 64
          %s2049 = scalar_lea.vmem [#allocation3], %s2048
          %2050 = dma.done %s2046, 1024
        $region48: #{_forward_impl.3} parent=43 // pred_fallthru
          _
      $region44: #{_forward_impl.3} parent=5 // pred_fallthru
        _
    $region6: #{_forward_impl.3} parent=1 // loop_footer
      %s17 = sadd.s32 1, %s13
    $region7: #{_forward_impl.3} parent=1 // loop_footer_branch
      %12 = sbr.rel target = $region3
    $region8: #{_forward_impl.3} parent=1 // loop_exit
      _
    %2051 = vsyncpa [#allocation4], 1
    %s2052 = scalar_lea.sflag [#allocation4], 1
    %2053 = vsyncpa %s2052, 1

</llo_original>
